<compile_context>
chip_gen: v6e
topology: v6e:2x2x1
jax: 0.10.0
libtpu: 0.0.40
codegen_flags: <defaults>
</compile_context>

<pallas_src>
import functools
import math

import jax
import jax.numpy as jnp
import numpy as np
from jax import lax
from jax.experimental import pallas as pl
from jax.experimental.pallas import tpu as pltpu


def _round_up(n, m):
    return ((n + m - 1) // m) * m


# -----------------------------------------------------------------------------
# Fused kernel: all 4 ConvTranspose2d(k=4,s=2,p=1) layers for ONE batch element
# -----------------------------------------------------------------------------
def _fused_decoder_kernel(x_ref,
                          w1_ref, b1_ref, w2_ref, b2_ref,
                          w3_ref, b3_ref, w4_ref, b4_ref,
                          s1_ref, s2_ref, s3_ref,
                          o_ref, *, wps, lens, coutps):
    """x_ref : [1, Cin0p, Rw1]   zero-padded channel-first raster of the latent
    wK_ref : [4*Coutp, 4*Cin]    parity-stacked sub-pixel weights of layer K
    bK_ref : [4*Coutp, 1]        parity-stacked bias column
    sK_ref : [4, L_K, Rw_{K+1}]  one-hot scatter (interleave + halo) to layer K+1
    o_ref  : [1, 4*Coutp4, L4]   last layer, parity-major, raster columns
    """
    w_refs = (w1_ref, w2_ref, w3_ref, w4_ref)
    b_refs = (b1_ref, b2_ref, b3_ref, b4_ref)
    s_refs = (s1_ref, s2_ref, s3_ref)

    y = x_ref[0]                                             # [Cin0p, Rw1]
    for i in range(4):                                       # statically unrolled
        wp, L, cp = wps[i], lens[i], coutps[i]
        # Shared RHS for all 4 output parities: 4 shifted lane-slices of the
        # padded raster stacked along the contraction (sublane) dim.
        rhs = jnp.concatenate(
            [y[:, 0:L], y[:, 1:1 + L], y[:, wp:wp + L], y[:, wp + 1:wp + 1 + L]],
            axis=0)                                          # [4*Cin, L]
        # One MXU matmul per layer; bias + activation hoisted (once per layer).
        out = jnp.dot(w_refs[i][...], rhs,
                      preferred_element_type=jnp.float32) + b_refs[i][...]
        if i < 3:
            out = jnp.maximum(out, 0.0)
            s = s_refs[i]
            # Parity interleave + seam-column drop + zero-halo of the next
            # padded raster, folded into one-hot scatter matmuls (stays on the
            # MXU: no stride-2 lane stores, no in-kernel reshapes).
            y = (jnp.dot(out[0 * cp:1 * cp], s[0], preferred_element_type=jnp.float32)
                 + jnp.dot(out[1 * cp:2 * cp], s[1], preferred_element_type=jnp.float32)
                 + jnp.dot(out[2 * cp:3 * cp], s[2], preferred_element_type=jnp.float32)
                 + jnp.dot(out[3 * cp:4 * cp], s[3], preferred_element_type=jnp.float32))
        else:
            o_ref[0] = jax.nn.sigmoid(out).astype(o_ref.dtype)


# -----------------------------------------------------------------------------
# DeconvDecoder (forward only)
# -----------------------------------------------------------------------------
class DeconvDecoderPallas:
    K = 4

    def __init__(self, model_config, key):
        cfg = model_config["model"]["decovdecoder"]
        emb = cfg["embeding_dim"]
        n_init = cfg["n_init"]
        self.embeding_dim = emb
        # channels D -> n_init -> n_init/2 -> n_init/4 -> 3 ; spatial 2->4->8->16->32
        chans = [emb, n_init, max(n_init // 2, 4), max(n_init // 4, 4), 3]

        self.cin0_pad = _round_up(emb, 8)
        cin_eff = self.cin0_pad
        h = 2
        self.layers = []
        for i in range(4):
            cin, cout = chans[i], chans[i + 1]
            coutp = _round_up(cout, 8)
            wp = h + 2                                   # padded raster width (square)
            rw = _round_up((h + 2) * wp, 128)            # lane-aligned raster width
            L = rw - wp - 1                              # columns so all taps stay in-bounds

            key, kw, kb = jax.random.split(key, 3)
            scale = 1.0 / math.sqrt(cin * self.K * self.K)
            w = jax.random.uniform(kw, (cin, cout, self.K, self.K),
                                   jnp.float32, -scale, scale)
            b = jax.random.uniform(kb, (cout,), jnp.float32, -scale, scale)

            # Parity-stacked sub-pixel weights: output parity (py,px), tap (dy,dx)
            # uses kernel entry w[:, :, 3-py-2dy, 3-px-2dx].
            wn = np.asarray(w)
            w_all = np.zeros((4 * coutp, 4 * cin_eff), np.float32)
            b_all = np.zeros((4 * coutp, 1), np.float32)
            for py in (0, 1):
                for px in (0, 1):
                    p = 2 * py + px
                    for dy in (0, 1):
                        for dx in (0, 1):
                            t = 2 * dy + dx
                            w_all[p * coutp:p * coutp + cout,
                                  t * cin_eff:t * cin_eff + cin] = \
                                wn[:, :, 3 - py - 2 * dy, 3 - px - 2 * dx].T
                    b_all[p * coutp:p * coutp + cout, 0] = np.asarray(b)

            self.layers.append(dict(
                w=w, b=b, w_all=jnp.asarray(w_all), b_all=jnp.asarray(b_all),
                cin=cin, cin_eff=cin_eff, cout=cout, coutp=coutp,
                h=h, wp=wp, rw=rw, L=L))
            cin_eff = coutp
            h = 2 * h

        # One-hot scatter matrices (per inter-layer boundary, per parity):
        # OUT column j = (q+py)*wp + (r+px) holds output pixel (2q+py, 2r+px),
        # which lands at position (2q+py+1)*wp' + (2r+px+1) in the next padded
        # raster.  Garbage/seam columns have all-zero rows; unwritten positions
        # (zero halo + lane padding) stay 0.
        self.scatters = []
        for i in range(3):
            la, lb = self.layers[i], self.layers[i + 1]
            H, wp, L = la["h"], la["wp"], la["L"]
            wp2, rw2 = lb["wp"], lb["rw"]
            s = np.zeros((4, L, rw2), np.float32)
            for py in (0, 1):
                for px in (0, 1):
                    p = 2 * py + px
                    for q in range(H):
                        for r in range(H):
                            j = (q + py) * wp + (r + px)
                            t = (2 * q + py + 1) * wp2 + (2 * r + px + 1)
                            s[p, j, t] = 1.0
            self.scatters.append(jnp.asarray(s))

    def decode(self, z):
        """z: [B, D, 2, 2]  ->  [B, 3, 32, 32]."""
        batch, c, h0, w0 = z.shape
        assert c == self.embeding_dim and h0 == 2 and w0 == 2, z.shape
        l1, l4 = self.layers[0], self.layers[3]
        cp4 = l4["coutp"]

        # Input boundary (once): NCHW latent -> zero-padded channel-first raster.
        zp = jnp.pad(z, ((0, 0), (0, self.cin0_pad - c), (1, 1), (1, 1)))
        x = zp.reshape(batch, self.cin0_pad, (h0 + 2) * (w0 + 2))
        x = jnp.pad(x, ((0, 0), (0, 0), (0, l1["rw"] - x.shape[-1])))

        kernel = functools.partial(
            _fused_decoder_kernel,
            wps=tuple(l["wp"] for l in self.layers),
            lens=tuple(l["L"] for l in self.layers),
            coutps=tuple(l["coutp"] for l in self.layers))

        const2 = lambda b: (0, 0)
        const3 = lambda b: (0, 0, 0)
        in_specs = [pl.BlockSpec((1, self.cin0_pad, l1["rw"]), lambda b: (b, 0, 0))]
        for l in self.layers:
            in_specs.append(pl.BlockSpec(l["w_all"].shape, const2))
            in_specs.append(pl.BlockSpec(l["b_all"].shape, const2))
        for s in self.scatters:
            in_specs.append(pl.BlockSpec(s.shape, const3))

        out_k = pl.pallas_call(
            kernel,
            out_shape=jax.ShapeDtypeStruct((batch, 4 * cp4, l4["L"]), jnp.float32),
            grid=(batch,),
            in_specs=in_specs,
            out_specs=pl.BlockSpec((1, 4 * cp4, l4["L"]), lambda b: (b, 0, 0)),
            compiler_params=pltpu.CompilerParams(
                dimension_semantics=("parallel",),
                vmem_limit_bytes=32 * 1024 * 1024),
        )(x,
          self.layers[0]["w_all"], self.layers[0]["b_all"],
          self.layers[1]["w_all"], self.layers[1]["b_all"],
          self.layers[2]["w_all"], self.layers[2]["b_all"],
          self.layers[3]["w_all"], self.layers[3]["b_all"],
          self.scatters[0], self.scatters[1], self.scatters[2])

        # Output boundary (once): parity de-interleave of the final layer only.
        hq = l4["h"]                                     # 16
        wp4 = l4["wp"]                                   # 18
        o = out_k[:, :, :wp4 * wp4].reshape(batch, 4, cp4, wp4, wp4)
        planes = [o[:, 2 * py + px, :3, py:py + hq, px:px + hq]
                  for py in (0, 1) for px in (0, 1)]     # padded Cout rows dropped here
        quad = jnp.stack(planes, axis=0).reshape(2, 2, batch, 3, hq, hq)
        img = jnp.transpose(quad, (2, 3, 4, 0, 5, 1)).reshape(batch, 3, 2 * hq, 2 * hq)
        return img

    def __call__(self, x):
        return self.decode(x)


# -----------------------------------------------------------------------------
# Pure-JAX reference (XLA conv) for numerical sanity checking
# -----------------------------------------------------------------------------
def _ref_forward(model, x):
    h = x
    for i, lyr in enumerate(model.layers):
        w, b = lyr["w"], lyr["b"]
        q = model.K - 1 - 1
        w_conv = jnp.transpose(w[:, :, ::-1, ::-1], (1, 0, 2, 3))  # [Cout, Cin, K, K]
        h = lax.conv_general_dilated(
            h, w_conv, window_strides=(1, 1), padding=[(q, q), (q, q)],
            lhs_dilation=(2, 2),
            dimension_numbers=("NCHW", "OIHW", "NCHW"))
        h = h + b.reshape(1, -1, 1, 1)
        h = jnp.maximum(h, 0.0) if i < 3 else jax.nn.sigmoid(h)
    return h


if __name__ == "__main__":
    model_config = {"model": {"decovdecoder": {"embeding_dim": 32, "n_init": 32}}}
    key = jax.random.PRNGKey(0)
    k_params, k_x = jax.random.split(key)

    model = DeconvDecoderPallas(model_config, k_params)

    # latent z: [B x D x 2 x 2]
    x = jax.random.normal(k_x, (2, 32, 2, 2), dtype=jnp.float32)

    decode = jax.jit(model.decode)
    recon_x = jax.block_until_ready(decode(x))

    assert recon_x.shape == (2, 3, 32, 32), recon_x.shape
    assert bool(jnp.all(jnp.isfinite(recon_x)))

    ref = jax.block_until_ready(_ref_forward(model, x))
    max_err = float(jnp.max(jnp.abs(recon_x - ref)))
    assert max_err < 1e-3, max_err

    print("KERNEL_OK")
</pallas_src>

<mosaic_0001>
module attributes {stable_mosaic.version = 11 : i64} {
  func.func @_fused_decoder_kernel(%arg0: i32, %arg1: memref<1x32x128xf32, #tpu.memory_space<vmem>>, %arg2: memref<128x128xf32, #tpu.memory_space<vmem>>, %arg3: memref<128x1xf32, #tpu.memory_space<vmem>>, %arg4: memref<64x128xf32, #tpu.memory_space<vmem>>, %arg5: memref<64x1xf32, #tpu.memory_space<vmem>>, %arg6: memref<32x64xf32, #tpu.memory_space<vmem>>, %arg7: memref<32x1xf32, #tpu.memory_space<vmem>>, %arg8: memref<32x32xf32, #tpu.memory_space<vmem>>, %arg9: memref<32x1xf32, #tpu.memory_space<vmem>>, %arg10: memref<4x123x128xf32, #tpu.memory_space<vmem>>, %arg11: memref<4x121x128xf32, #tpu.memory_space<vmem>>, %arg12: memref<4x117x384xf32, #tpu.memory_space<vmem>>, %arg13: memref<1x32x365xf32, #tpu.memory_space<vmem>>) attributes {dimension_semantics = [#tpu.dimension_semantics<parallel>], iteration_bounds = array<i64: 2>, scalar_prefetch = 0 : i64, scratch_operands = 0 : i64, tpu.core_type = #tpu.core_type<tc>, window_params = [{transform_indices = @transform_0, window_bounds = array<i64: 1, 32, 128>}, {pipeline_mode = #tpu.pipeline_mode<synchronous>, transform_indices = @transform_1, window_bounds = array<i64: 128, 128>}, {pipeline_mode = #tpu.pipeline_mode<synchronous>, transform_indices = @transform_2, window_bounds = array<i64: 128, 1>}, {pipeline_mode = #tpu.pipeline_mode<synchronous>, transform_indices = @transform_3, window_bounds = array<i64: 64, 128>}, {pipeline_mode = #tpu.pipeline_mode<synchronous>, transform_indices = @transform_4, window_bounds = array<i64: 64, 1>}, {pipeline_mode = #tpu.pipeline_mode<synchronous>, transform_indices = @transform_5, window_bounds = array<i64: 32, 64>}, {pipeline_mode = #tpu.pipeline_mode<synchronous>, transform_indices = @transform_6, window_bounds = array<i64: 32, 1>}, {pipeline_mode = #tpu.pipeline_mode<synchronous>, transform_indices = @transform_7, window_bounds = array<i64: 32, 32>}, {pipeline_mode = #tpu.pipeline_mode<synchronous>, transform_indices = @transform_8, window_bounds = array<i64: 32, 1>}, {pipeline_mode = #tpu.pipeline_mode<synchronous>, transform_indices = @transform_9, window_bounds = array<i64: 4, 123, 128>}, {pipeline_mode = #tpu.pipeline_mode<synchronous>, transform_indices = @transform_10, window_bounds = array<i64: 4, 121, 128>}, {pipeline_mode = #tpu.pipeline_mode<synchronous>, transform_indices = @transform_11, window_bounds = array<i64: 4, 117, 384>}, {transform_indices = @transform_12, window_bounds = array<i64: 1, 32, 365>}]} {
    %c0 = arith.constant 0 : index
    %c0_0 = arith.constant 0 : index
    %c0_1 = arith.constant 0 : index
    %0 = vector.load %arg1[%c0, %c0_0, %c0_1] : memref<1x32x128xf32, #tpu.memory_space<vmem>>, vector<1x32x128xf32>
    %1 = vector.shape_cast %0 : vector<1x32x128xf32> to vector<32x128xf32>
    %2 = vector.extract_strided_slice %1 {offsets = [0, 0], sizes = [32, 123], strides = [1, 1]} : vector<32x128xf32> to vector<32x123xf32>
    %3 = vector.extract_strided_slice %1 {offsets = [0, 1], sizes = [32, 123], strides = [1, 1]} : vector<32x128xf32> to vector<32x123xf32>
    %4 = vector.extract_strided_slice %1 {offsets = [0, 4], sizes = [32, 123], strides = [1, 1]} : vector<32x128xf32> to vector<32x123xf32>
    %5 = vector.extract_strided_slice %1 {offsets = [0, 5], sizes = [32, 123], strides = [1, 1]} : vector<32x128xf32> to vector<32x123xf32>
    %6 = tpu.concatenate %2, %3, %4, %5 in 0 : vector<32x123xf32>, vector<32x123xf32>, vector<32x123xf32>, vector<32x123xf32> -> vector<128x123xf32>
    %c0_2 = arith.constant 0 : index
    %c0_3 = arith.constant 0 : index
    %7 = vector.load %arg2[%c0_2, %c0_3] : memref<128x128xf32, #tpu.memory_space<vmem>>, vector<128x128xf32>
    %cst = arith.constant dense<0.000000e+00> : vector<128x123xf32>
    %8 = tpu.matmul %7, %6, %cst {dimension_numbers = #tpu.dot_dimension_numbers<[1], [0], [0], [1], [0, 0, 1, 1], [], []>} : vector<128x128xf32>, vector<128x123xf32>, vector<128x123xf32> -> vector<128x123xf32>
    %c0_4 = arith.constant 0 : index
    %c0_5 = arith.constant 0 : index
    %9 = vector.load %arg3[%c0_4, %c0_5] : memref<128x1xf32, #tpu.memory_space<vmem>>, vector<128x1xf32>
    %10 = vector.broadcast %9 : vector<128x1xf32> to vector<128x123xf32>
    %11 = arith.addf %8, %10 : vector<128x123xf32>
    %cst_6 = arith.constant 0.000000e+00 : f32
    %12 = vector.broadcast %cst_6 : f32 to vector<128x123xf32>
    %13 = arith.maximumf %11, %12 : vector<128x123xf32>
    %14 = vector.extract_strided_slice %13 {offsets = [0, 0], sizes = [32, 123], strides = [1, 1]} : vector<128x123xf32> to vector<32x123xf32>
    %c0_7 = arith.constant 0 : index
    %c0_8 = arith.constant 0 : index
    %c0_9 = arith.constant 0 : index
    %15 = vector.load %arg10[%c0_7, %c0_8, %c0_9] : memref<4x123x128xf32, #tpu.memory_space<vmem>>, vector<1x123x128xf32>
    %16 = vector.shape_cast %15 : vector<1x123x128xf32> to vector<123x128xf32>
    %cst_10 = arith.constant dense<0.000000e+00> : vector<32x128xf32>
    %17 = tpu.matmul %14, %16, %cst_10 {dimension_numbers = #tpu.dot_dimension_numbers<[1], [0], [0], [1], [0, 0, 1, 1], [], []>} : vector<32x123xf32>, vector<123x128xf32>, vector<32x128xf32> -> vector<32x128xf32>
    %18 = vector.extract_strided_slice %13 {offsets = [32, 0], sizes = [32, 123], strides = [1, 1]} : vector<128x123xf32> to vector<32x123xf32>
    %c1 = arith.constant 1 : index
    %c0_11 = arith.constant 0 : index
    %c0_12 = arith.constant 0 : index
    %19 = vector.load %arg10[%c1, %c0_11, %c0_12] : memref<4x123x128xf32, #tpu.memory_space<vmem>>, vector<1x123x128xf32>
    %20 = vector.shape_cast %19 : vector<1x123x128xf32> to vector<123x128xf32>
    %cst_13 = arith.constant dense<0.000000e+00> : vector<32x128xf32>
    %21 = tpu.matmul %18, %20, %cst_13 {dimension_numbers = #tpu.dot_dimension_numbers<[1], [0], [0], [1], [0, 0, 1, 1], [], []>} : vector<32x123xf32>, vector<123x128xf32>, vector<32x128xf32> -> vector<32x128xf32>
    %22 = arith.addf %17, %21 : vector<32x128xf32>
    %23 = vector.extract_strided_slice %13 {offsets = [64, 0], sizes = [32, 123], strides = [1, 1]} : vector<128x123xf32> to vector<32x123xf32>
    %c2 = arith.constant 2 : index
    %c0_14 = arith.constant 0 : index
    %c0_15 = arith.constant 0 : index
    %24 = vector.load %arg10[%c2, %c0_14, %c0_15] : memref<4x123x128xf32, #tpu.memory_space<vmem>>, vector<1x123x128xf32>
    %25 = vector.shape_cast %24 : vector<1x123x128xf32> to vector<123x128xf32>
    %cst_16 = arith.constant dense<0.000000e+00> : vector<32x128xf32>
    %26 = tpu.matmul %23, %25, %cst_16 {dimension_numbers = #tpu.dot_dimension_numbers<[1], [0], [0], [1], [0, 0, 1, 1], [], []>} : vector<32x123xf32>, vector<123x128xf32>, vector<32x128xf32> -> vector<32x128xf32>
    %27 = arith.addf %22, %26 : vector<32x128xf32>
    %28 = vector.extract_strided_slice %13 {offsets = [96, 0], sizes = [32, 123], strides = [1, 1]} : vector<128x123xf32> to vector<32x123xf32>
    %c3 = arith.constant 3 : index
    %c0_17 = arith.constant 0 : index
    %c0_18 = arith.constant 0 : index
    %29 = vector.load %arg10[%c3, %c0_17, %c0_18] : memref<4x123x128xf32, #tpu.memory_space<vmem>>, vector<1x123x128xf32>
    %30 = vector.shape_cast %29 : vector<1x123x128xf32> to vector<123x128xf32>
    %cst_19 = arith.constant dense<0.000000e+00> : vector<32x128xf32>
    %31 = tpu.matmul %28, %30, %cst_19 {dimension_numbers = #tpu.dot_dimension_numbers<[1], [0], [0], [1], [0, 0, 1, 1], [], []>} : vector<32x123xf32>, vector<123x128xf32>, vector<32x128xf32> -> vector<32x128xf32>
    %32 = arith.addf %27, %31 : vector<32x128xf32>
    %33 = vector.extract_strided_slice %32 {offsets = [0, 0], sizes = [32, 121], strides = [1, 1]} : vector<32x128xf32> to vector<32x121xf32>
    %34 = vector.extract_strided_slice %32 {offsets = [0, 1], sizes = [32, 121], strides = [1, 1]} : vector<32x128xf32> to vector<32x121xf32>
    %35 = vector.extract_strided_slice %32 {offsets = [0, 6], sizes = [32, 121], strides = [1, 1]} : vector<32x128xf32> to vector<32x121xf32>
    %36 = vector.extract_strided_slice %32 {offsets = [0, 7], sizes = [32, 121], strides = [1, 1]} : vector<32x128xf32> to vector<32x121xf32>
    %37 = tpu.concatenate %33, %34, %35, %36 in 0 : vector<32x121xf32>, vector<32x121xf32>, vector<32x121xf32>, vector<32x121xf32> -> vector<128x121xf32>
    %c0_20 = arith.constant 0 : index
    %c0_21 = arith.constant 0 : index
    %38 = vector.load %arg4[%c0_20, %c0_21] : memref<64x128xf32, #tpu.memory_space<vmem>>, vector<64x128xf32>
    %cst_22 = arith.constant dense<0.000000e+00> : vector<64x121xf32>
    %39 = tpu.matmul %38, %37, %cst_22 {dimension_numbers = #tpu.dot_dimension_numbers<[1], [0], [0], [1], [0, 0, 1, 1], [], []>} : vector<64x128xf32>, vector<128x121xf32>, vector<64x121xf32> -> vector<64x121xf32>
    %c0_23 = arith.constant 0 : index
    %c0_24 = arith.constant 0 : index
    %40 = vector.load %arg5[%c0_23, %c0_24] : memref<64x1xf32, #tpu.memory_space<vmem>>, vector<64x1xf32>
    %41 = vector.broadcast %40 : vector<64x1xf32> to vector<64x121xf32>
    %42 = arith.addf %39, %41 : vector<64x121xf32>
    %cst_25 = arith.constant 0.000000e+00 : f32
    %43 = vector.broadcast %cst_25 : f32 to vector<64x121xf32>
    %44 = arith.maximumf %42, %43 : vector<64x121xf32>
    %45 = vector.extract_strided_slice %44 {offsets = [0, 0], sizes = [16, 121], strides = [1, 1]} : vector<64x121xf32> to vector<16x121xf32>
    %c0_26 = arith.constant 0 : index
    %c0_27 = arith.constant 0 : index
    %c0_28 = arith.constant 0 : index
    %46 = vector.load %arg11[%c0_26, %c0_27, %c0_28] : memref<4x121x128xf32, #tpu.memory_space<vmem>>, vector<1x121x128xf32>
    %47 = vector.shape_cast %46 : vector<1x121x128xf32> to vector<121x128xf32>
    %cst_29 = arith.constant dense<0.000000e+00> : vector<16x128xf32>
    %48 = tpu.matmul %45, %47, %cst_29 {dimension_numbers = #tpu.dot_dimension_numbers<[1], [0], [0], [1], [0, 0, 1, 1], [], []>} : vector<16x121xf32>, vector<121x128xf32>, vector<16x128xf32> -> vector<16x128xf32>
    %49 = vector.extract_strided_slice %44 {offsets = [16, 0], sizes = [16, 121], strides = [1, 1]} : vector<64x121xf32> to vector<16x121xf32>
    %c1_30 = arith.constant 1 : index
    %c0_31 = arith.constant 0 : index
    %c0_32 = arith.constant 0 : index
    %50 = vector.load %arg11[%c1_30, %c0_31, %c0_32] : memref<4x121x128xf32, #tpu.memory_space<vmem>>, vector<1x121x128xf32>
    %51 = vector.shape_cast %50 : vector<1x121x128xf32> to vector<121x128xf32>
    %cst_33 = arith.constant dense<0.000000e+00> : vector<16x128xf32>
    %52 = tpu.matmul %49, %51, %cst_33 {dimension_numbers = #tpu.dot_dimension_numbers<[1], [0], [0], [1], [0, 0, 1, 1], [], []>} : vector<16x121xf32>, vector<121x128xf32>, vector<16x128xf32> -> vector<16x128xf32>
    %53 = arith.addf %48, %52 : vector<16x128xf32>
    %54 = vector.extract_strided_slice %44 {offsets = [32, 0], sizes = [16, 121], strides = [1, 1]} : vector<64x121xf32> to vector<16x121xf32>
    %c2_34 = arith.constant 2 : index
    %c0_35 = arith.constant 0 : index
    %c0_36 = arith.constant 0 : index
    %55 = vector.load %arg11[%c2_34, %c0_35, %c0_36] : memref<4x121x128xf32, #tpu.memory_space<vmem>>, vector<1x121x128xf32>
    %56 = vector.shape_cast %55 : vector<1x121x128xf32> to vector<121x128xf32>
    %cst_37 = arith.constant dense<0.000000e+00> : vector<16x128xf32>
    %57 = tpu.matmul %54, %56, %cst_37 {dimension_numbers = #tpu.dot_dimension_numbers<[1], [0], [0], [1], [0, 0, 1, 1], [], []>} : vector<16x121xf32>, vector<121x128xf32>, vector<16x128xf32> -> vector<16x128xf32>
    %58 = arith.addf %53, %57 : vector<16x128xf32>
    %59 = vector.extract_strided_slice %44 {offsets = [48, 0], sizes = [16, 121], strides = [1, 1]} : vector<64x121xf32> to vector<16x121xf32>
    %c3_38 = arith.constant 3 : index
    %c0_39 = arith.constant 0 : index
    %c0_40 = arith.constant 0 : index
    %60 = vector.load %arg11[%c3_38, %c0_39, %c0_40] : memref<4x121x128xf32, #tpu.memory_space<vmem>>, vector<1x121x128xf32>
    %61 = vector.shape_cast %60 : vector<1x121x128xf32> to vector<121x128xf32>
    %cst_41 = arith.constant dense<0.000000e+00> : vector<16x128xf32>
    %62 = tpu.matmul %59, %61, %cst_41 {dimension_numbers = #tpu.dot_dimension_numbers<[1], [0], [0], [1], [0, 0, 1, 1], [], []>} : vector<16x121xf32>, vector<121x128xf32>, vector<16x128xf32> -> vector<16x128xf32>
    %63 = arith.addf %58, %62 : vector<16x128xf32>
    %64 = vector.extract_strided_slice %63 {offsets = [0, 0], sizes = [16, 117], strides = [1, 1]} : vector<16x128xf32> to vector<16x117xf32>
    %65 = vector.extract_strided_slice %63 {offsets = [0, 1], sizes = [16, 117], strides = [1, 1]} : vector<16x128xf32> to vector<16x117xf32>
    %66 = vector.extract_strided_slice %63 {offsets = [0, 10], sizes = [16, 117], strides = [1, 1]} : vector<16x128xf32> to vector<16x117xf32>
    %67 = vector.extract_strided_slice %63 {offsets = [0, 11], sizes = [16, 117], strides = [1, 1]} : vector<16x128xf32> to vector<16x117xf32>
    %68 = tpu.concatenate %64, %65, %66, %67 in 0 : vector<16x117xf32>, vector<16x117xf32>, vector<16x117xf32>, vector<16x117xf32> -> vector<64x117xf32>
    %c0_42 = arith.constant 0 : index
    %c0_43 = arith.constant 0 : index
    %69 = vector.load %arg6[%c0_42, %c0_43] : memref<32x64xf32, #tpu.memory_space<vmem>>, vector<32x64xf32>
    %cst_44 = arith.constant dense<0.000000e+00> : vector<32x117xf32>
    %70 = tpu.matmul %69, %68, %cst_44 {dimension_numbers = #tpu.dot_dimension_numbers<[1], [0], [0], [1], [0, 0, 1, 1], [], []>} : vector<32x64xf32>, vector<64x117xf32>, vector<32x117xf32> -> vector<32x117xf32>
    %c0_45 = arith.constant 0 : index
    %c0_46 = arith.constant 0 : index
    %71 = vector.load %arg7[%c0_45, %c0_46] : memref<32x1xf32, #tpu.memory_space<vmem>>, vector<32x1xf32>
    %72 = vector.broadcast %71 : vector<32x1xf32> to vector<32x117xf32>
    %73 = arith.addf %70, %72 : vector<32x117xf32>
    %cst_47 = arith.constant 0.000000e+00 : f32
    %74 = vector.broadcast %cst_47 : f32 to vector<32x117xf32>
    %75 = arith.maximumf %73, %74 : vector<32x117xf32>
    %76 = vector.extract_strided_slice %75 {offsets = [0, 0], sizes = [8, 117], strides = [1, 1]} : vector<32x117xf32> to vector<8x117xf32>
    %c0_48 = arith.constant 0 : index
    %c0_49 = arith.constant 0 : index
    %c0_50 = arith.constant 0 : index
    %77 = vector.load %arg12[%c0_48, %c0_49, %c0_50] : memref<4x117x384xf32, #tpu.memory_space<vmem>>, vector<1x117x384xf32>
    %78 = vector.shape_cast %77 : vector<1x117x384xf32> to vector<117x384xf32>
    %cst_51 = arith.constant dense<0.000000e+00> : vector<8x384xf32>
    %79 = tpu.matmul %76, %78, %cst_51 {dimension_numbers = #tpu.dot_dimension_numbers<[1], [0], [0], [1], [0, 0, 1, 1], [], []>} : vector<8x117xf32>, vector<117x384xf32>, vector<8x384xf32> -> vector<8x384xf32>
    %80 = vector.extract_strided_slice %75 {offsets = [8, 0], sizes = [8, 117], strides = [1, 1]} : vector<32x117xf32> to vector<8x117xf32>
    %c1_52 = arith.constant 1 : index
    %c0_53 = arith.constant 0 : index
    %c0_54 = arith.constant 0 : index
    %81 = vector.load %arg12[%c1_52, %c0_53, %c0_54] : memref<4x117x384xf32, #tpu.memory_space<vmem>>, vector<1x117x384xf32>
    %82 = vector.shape_cast %81 : vector<1x117x384xf32> to vector<117x384xf32>
    %cst_55 = arith.constant dense<0.000000e+00> : vector<8x384xf32>
    %83 = tpu.matmul %80, %82, %cst_55 {dimension_numbers = #tpu.dot_dimension_numbers<[1], [0], [0], [1], [0, 0, 1, 1], [], []>} : vector<8x117xf32>, vector<117x384xf32>, vector<8x384xf32> -> vector<8x384xf32>
    %84 = arith.addf %79, %83 : vector<8x384xf32>
    %85 = vector.extract_strided_slice %75 {offsets = [16, 0], sizes = [8, 117], strides = [1, 1]} : vector<32x117xf32> to vector<8x117xf32>
    %c2_56 = arith.constant 2 : index
    %c0_57 = arith.constant 0 : index
    %c0_58 = arith.constant 0 : index
    %86 = vector.load %arg12[%c2_56, %c0_57, %c0_58] : memref<4x117x384xf32, #tpu.memory_space<vmem>>, vector<1x117x384xf32>
    %87 = vector.shape_cast %86 : vector<1x117x384xf32> to vector<117x384xf32>
    %cst_59 = arith.constant dense<0.000000e+00> : vector<8x384xf32>
    %88 = tpu.matmul %85, %87, %cst_59 {dimension_numbers = #tpu.dot_dimension_numbers<[1], [0], [0], [1], [0, 0, 1, 1], [], []>} : vector<8x117xf32>, vector<117x384xf32>, vector<8x384xf32> -> vector<8x384xf32>
    %89 = arith.addf %84, %88 : vector<8x384xf32>
    %90 = vector.extract_strided_slice %75 {offsets = [24, 0], sizes = [8, 117], strides = [1, 1]} : vector<32x117xf32> to vector<8x117xf32>
    %c3_60 = arith.constant 3 : index
    %c0_61 = arith.constant 0 : index
    %c0_62 = arith.constant 0 : index
    %91 = vector.load %arg12[%c3_60, %c0_61, %c0_62] : memref<4x117x384xf32, #tpu.memory_space<vmem>>, vector<1x117x384xf32>
    %92 = vector.shape_cast %91 : vector<1x117x384xf32> to vector<117x384xf32>
    %cst_63 = arith.constant dense<0.000000e+00> : vector<8x384xf32>
    %93 = tpu.matmul %90, %92, %cst_63 {dimension_numbers = #tpu.dot_dimension_numbers<[1], [0], [0], [1], [0, 0, 1, 1], [], []>} : vector<8x117xf32>, vector<117x384xf32>, vector<8x384xf32> -> vector<8x384xf32>
    %94 = arith.addf %89, %93 : vector<8x384xf32>
    %95 = vector.extract_strided_slice %94 {offsets = [0, 0], sizes = [8, 365], strides = [1, 1]} : vector<8x384xf32> to vector<8x365xf32>
    %96 = vector.extract_strided_slice %94 {offsets = [0, 1], sizes = [8, 365], strides = [1, 1]} : vector<8x384xf32> to vector<8x365xf32>
    %97 = vector.extract_strided_slice %94 {offsets = [0, 18], sizes = [8, 365], strides = [1, 1]} : vector<8x384xf32> to vector<8x365xf32>
    %98 = vector.extract_strided_slice %94 {offsets = [0, 19], sizes = [8, 365], strides = [1, 1]} : vector<8x384xf32> to vector<8x365xf32>
    %99 = tpu.concatenate %95, %96, %97, %98 in 0 : vector<8x365xf32>, vector<8x365xf32>, vector<8x365xf32>, vector<8x365xf32> -> vector<32x365xf32>
    %c0_64 = arith.constant 0 : index
    %c0_65 = arith.constant 0 : index
    %100 = vector.load %arg8[%c0_64, %c0_65] : memref<32x32xf32, #tpu.memory_space<vmem>>, vector<32x32xf32>
    %cst_66 = arith.constant dense<0.000000e+00> : vector<32x365xf32>
    %101 = tpu.matmul %100, %99, %cst_66 {dimension_numbers = #tpu.dot_dimension_numbers<[1], [0], [0], [1], [0, 0, 1, 1], [], []>} : vector<32x32xf32>, vector<32x365xf32>, vector<32x365xf32> -> vector<32x365xf32>
    %c0_67 = arith.constant 0 : index
    %c0_68 = arith.constant 0 : index
    %102 = vector.load %arg9[%c0_67, %c0_68] : memref<32x1xf32, #tpu.memory_space<vmem>>, vector<32x1xf32>
    %103 = vector.broadcast %102 : vector<32x1xf32> to vector<32x365xf32>
    %104 = arith.addf %101, %103 : vector<32x365xf32>
    %105 = arith.negf %104 : vector<32x365xf32>
    %106 = math.exp %105 : vector<32x365xf32>
    %cst_69 = arith.constant 1.000000e+00 : f32
    %107 = vector.broadcast %cst_69 : f32 to vector<32x365xf32>
    %108 = arith.addf %107, %106 : vector<32x365xf32>
    %109 = arith.divf %107, %108 : vector<32x365xf32>
    %c0_70 = arith.constant 0 : index
    %c0_71 = arith.constant 0 : index
    %c0_72 = arith.constant 0 : index
    %110 = vector.load %arg13[%c0_70, %c0_71, %c0_72] : memref<1x32x365xf32, #tpu.memory_space<vmem>>, vector<1x32x365xf32>
    %111 = vector.shape_cast %110 : vector<1x32x365xf32> to vector<32x365xf32>
    %112 = vector.shape_cast %109 : vector<32x365xf32> to vector<1x32x365xf32>
    tpu.vector_store %arg13[%c0_70, %c0_71, %c0_72], %112 {strides = array<i32>} : memref<1x32x365xf32, #tpu.memory_space<vmem>>, vector<1x32x365xf32>,
    return
  }
  func.func @transform_0(%arg0: i32) -> (i32, i32, i32) {
    %c0_i32 = arith.constant 0 : i32
    %c0_i32_0 = arith.constant 0 : i32
    %c0_i32_1 = arith.constant 0 : i32
    return %arg0, %c0_i32, %c0_i32_0 : i32, i32, i32
  }
  func.func @transform_1(%arg0: i32) -> (i32, i32) {
    %c0_i32 = arith.constant 0 : i32
    %c0_i32_0 = arith.constant 0 : i32
    %c0_i32_1 = arith.constant 0 : i32
    return %c0_i32, %c0_i32_0 : i32, i32
  }
  func.func @transform_2(%arg0: i32) -> (i32, i32) {
    %c0_i32 = arith.constant 0 : i32
    %c0_i32_0 = arith.constant 0 : i32
    %c0_i32_1 = arith.constant 0 : i32
    return %c0_i32, %c0_i32_0 : i32, i32
  }
  func.func @transform_3(%arg0: i32) -> (i32, i32) {
    %c0_i32 = arith.constant 0 : i32
    %c0_i32_0 = arith.constant 0 : i32
    %c0_i32_1 = arith.constant 0 : i32
    return %c0_i32, %c0_i32_0 : i32, i32
  }
  func.func @transform_4(%arg0: i32) -> (i32, i32) {
    %c0_i32 = arith.constant 0 : i32
    %c0_i32_0 = arith.constant 0 : i32
    %c0_i32_1 = arith.constant 0 : i32
    return %c0_i32, %c0_i32_0 : i32, i32
  }
  func.func @transform_5(%arg0: i32) -> (i32, i32) {
    %c0_i32 = arith.constant 0 : i32
    %c0_i32_0 = arith.constant 0 : i32
    %c0_i32_1 = arith.constant 0 : i32
    return %c0_i32, %c0_i32_0 : i32, i32
  }
  func.func @transform_6(%arg0: i32) -> (i32, i32) {
    %c0_i32 = arith.constant 0 : i32
    %c0_i32_0 = arith.constant 0 : i32
    %c0_i32_1 = arith.constant 0 : i32
    return %c0_i32, %c0_i32_0 : i32, i32
  }
  func.func @transform_7(%arg0: i32) -> (i32, i32) {
    %c0_i32 = arith.constant 0 : i32
    %c0_i32_0 = arith.constant 0 : i32
    %c0_i32_1 = arith.constant 0 : i32
    return %c0_i32, %c0_i32_0 : i32, i32
  }
  func.func @transform_8(%arg0: i32) -> (i32, i32) {
    %c0_i32 = arith.constant 0 : i32
    %c0_i32_0 = arith.constant 0 : i32
    %c0_i32_1 = arith.constant 0 : i32
    return %c0_i32, %c0_i32_0 : i32, i32
  }
  func.func @transform_9(%arg0: i32) -> (i32, i32, i32) {
    %c0_i32 = arith.constant 0 : i32
    %c0_i32_0 = arith.constant 0 : i32
    %c0_i32_1 = arith.constant 0 : i32
    %c0_i32_2 = arith.constant 0 : i32
    return %c0_i32, %c0_i32_0, %c0_i32_1 : i32, i32, i32
  }
  func.func @transform_10(%arg0: i32) -> (i32, i32, i32) {
    %c0_i32 = arith.constant 0 : i32
    %c0_i32_0 = arith.constant 0 : i32
    %c0_i32_1 = arith.constant 0 : i32
    %c0_i32_2 = arith.constant 0 : i32
    return %c0_i32, %c0_i32_0, %c0_i32_1 : i32, i32, i32
  }
  func.func @transform_11(%arg0: i32) -> (i32, i32, i32) {
    %c0_i32 = arith.constant 0 : i32
    %c0_i32_0 = arith.constant 0 : i32
    %c0_i32_1 = arith.constant 0 : i32
    %c0_i32_2 = arith.constant 0 : i32
    return %c0_i32, %c0_i32_0, %c0_i32_1 : i32, i32, i32
  }
  func.func @transform_12(%arg0: i32) -> (i32, i32, i32) {
    %c0_i32 = arith.constant 0 : i32
    %c0_i32_0 = arith.constant 0 : i32
    %c0_i32_1 = arith.constant 0 : i32
    return %arg0, %c0_i32, %c0_i32_0 : i32, i32, i32
  }
}

</mosaic_0001>

<llo_original>
// kernel: decode.1
$region0: #{decode.1}
  #allocation0 [shape = 'u32[]', space=smem, size = 0x4, offset = 0x4, fixed_abs, tag = 'smem constant byte address 0x4 - core index']
  #allocation1 [shape = 'u32[144,128]{1,0:T(1,128)}', space=vmem, size = 0x12000, scoped, tag = 'internal scratch']
  %s0 = inlined_call_operand.vmem [shape: f32[2,32,128], index: 0, kind: input, shape index: {}]
  %s1 = inlined_call_operand.hbm [shape: f32[128,128], index: 1, kind: input, shape index: {}]
  %s2 = inlined_call_operand.hbm [shape: f32[128,1], index: 2, kind: input, shape index: {}]
  %s3 = inlined_call_operand.hbm [shape: f32[64,128], index: 3, kind: input, shape index: {}]
  %s4 = inlined_call_operand.hbm [shape: f32[64,1], index: 4, kind: input, shape index: {}]
  %s5 = inlined_call_operand.hbm [shape: f32[32,64], index: 5, kind: input, shape index: {}]
  %s6 = inlined_call_operand.hbm [shape: f32[32,1], index: 6, kind: input, shape index: {}]
  %s7 = inlined_call_operand.hbm [shape: f32[32,32], index: 7, kind: input, shape index: {}]
  %s8 = inlined_call_operand.hbm [shape: f32[32,1], index: 8, kind: input, shape index: {}]
  %s9 = inlined_call_operand.hbm [shape: f32[4,123,128], index: 9, kind: input, shape index: {}]
  %s10 = inlined_call_operand.hbm [shape: f32[4,121,128], index: 10, kind: input, shape index: {}]
  %s11 = inlined_call_operand.hbm [shape: f32[4,117,384], index: 11, kind: input, shape index: {}]
  %s12 = inlined_call_operand.vmem [shape: f32[2,32,365], index: 12, kind: output, shape index: {}]
  %s13 = sld [smem:[#allocation0]]
  $region125: #{decode.1} parent=0
    _
  %s15 = ssub.s32 1, %s13
  %s16 = scalar_select 0, %s15, %s13
  $region1: #{decode.1} parent=0
    #allocation2 [shape = 'u8[65536]{0}', space=vmem, size = 0x10000, scoped, tag = 'input window, operand 1, single buffered']
    #allocation3 [shape = 's32[2]{0}', space=sflag, size = 0x8, scoped, tag = 'scoped memory for decode.1']
    #allocation4 [shape = 'u8[65536]{0}', space=vmem, size = 0x10000, scoped, tag = 'input window, operand 2, single buffered']
    #allocation5 [shape = 's32[1]{0}', space=sflag, size = 0x4, scoped, tag = 'scoped memory for decode.1']
    #allocation6 [shape = 'u8[32768]{0}', space=vmem, size = 0x8000, scoped, tag = 'input window, operand 3, single buffered']
    #allocation7 [shape = 'u8[32768]{0}', space=vmem, size = 0x8000, scoped, tag = 'input window, operand 4, single buffered']
    #allocation8 [shape = 's32[1]{0}', space=sflag, size = 0x4, scoped, tag = 'scoped memory for decode.1']
    #allocation9 [shape = 'u8[16384]{0}', space=vmem, size = 0x4000, scoped, tag = 'input window, operand 5, single buffered']
    #allocation10 [shape = 'u8[16384]{0}', space=vmem, size = 0x4000, scoped, tag = 'input window, operand 6, single buffered']
    #allocation11 [shape = 's32[1]{0}', space=sflag, size = 0x4, scoped, tag = 'scoped memory for decode.1']
    #allocation12 [shape = 'u8[16384]{0}', space=vmem, size = 0x4000, scoped, tag = 'input window, operand 7, single buffered']
    #allocation13 [shape = 'u8[16384]{0}', space=vmem, size = 0x4000, scoped, tag = 'input window, operand 8, single buffered']
    #allocation14 [shape = 's32[1]{0}', space=sflag, size = 0x4, scoped, tag = 'scoped memory for decode.1']
    #allocation15 [shape = 'u8[262144]{0}', space=vmem, size = 0x40000, scoped, tag = 'input window, operand 9, single buffered']
    #allocation16 [shape = 'u8[262144]{0}', space=vmem, size = 0x40000, scoped, tag = 'input window, operand 10, single buffered']
    #allocation17 [shape = 's32[1]{0}', space=sflag, size = 0x4, scoped, tag = 'scoped memory for decode.1']
    #allocation18 [shape = 'u8[737280]{0}', space=vmem, size = 0xb4000, scoped, tag = 'input window, operand 11, single buffered']
    %17 = vsyncpa [#allocation3], 0
    %18 = vsyncpa [#allocation5], 0
    %19 = vsyncpa [#allocation8], 0
    %20 = vsyncpa [#allocation11], 0
    %21 = vsyncpa [#allocation14], 0
    %22 = vsyncpa [#allocation17], 0
    loop: start=0, step=1, limit=4
    $region2: #{decode.1} parent=1 // loop_pre_header
      _
    $region3: #{decode.1} parent=1 // loop_header
      %s24 = sphi 0, %s28
      %p25 = scmp.ge.s32.totalorder %s24, 4
      %s34 = sphi 0, %s36
      %s37 = sphi 0, %s34
      %s38 = sphi 0, %s37
      %s54 = sphi 0, %s38
      %s58 = sphi 0, %s58
      %s60 = sphi 0, %s58
      %s61 = sphi 0, %s60
      %s75 = sphi 0, %s61
      %s79 = sphi 0, %s79
      %s81 = sphi 0, %s79
      %s82 = sphi 0, %s81
      %s96 = sphi 0, %s82
      %s100 = sphi 0, %s100
      %s102 = sphi 0, %s100
      %s103 = sphi 0, %s102
      %s117 = sphi 0, %s103
      %s121 = sphi 0, %s121
      %s123 = sphi 0, %s121
      %s124 = sphi 0, %s123
      %s138 = sphi 0, %s124
      %s142 = sphi 0, %s142
      %s144 = sphi 0, %s142
      %s145 = sphi 0, %s144
      %s159 = sphi 0, %s145
      %s163 = sphi 0, %s163
      %s165 = sphi 0, %s163
      %s166 = sphi 0, %s165
      %s180 = sphi 0, %s166
      %s184 = sphi 0, %s184
      %s186 = sphi 0, %s184
      %s187 = sphi 0, %s186
      %s201 = sphi 0, %s187
      %s205 = sphi 0, %s205
      %s207 = sphi 0, %s205
      %s208 = sphi 0, %s207
      %s222 = sphi 0, %s208
      %s226 = sphi 0, %s226
      %s228 = sphi 0, %s226
      %s229 = sphi 0, %s228
      %s243 = sphi 0, %s229
      %s247 = sphi 0, %s247
      %s249 = sphi 0, %s247
      %s250 = sphi 0, %s249
      %s264 = sphi 0, %s250
      %s268 = sphi 0, %s268
      %s270 = sphi 0, %s268
      %s271 = sphi 0, %s270
      %s285 = sphi 0, %s271
      %s291 = sphi 0, %s293
      %s294 = sphi 0, %s291
      %s295 = sphi 0, %s294
      %s311 = sphi 0, %s295
    $region4: #{decode.1} parent=1 // loop_header_branch
      %27 = sbr.rel (%p25) target = $region8
    $region5: #{decode.1} parent=1 // loop_body
      %s29 = ssub.s32 %s24, 1
      %s30 = ssub.s32 %s24, 2
      %s31 = sadd.s32 %s24, 1
      %s32 = ssub.s32 %s24, %s31
      %p33 = scmp.eq.s32.totalorder %s32, 0
      %s35 = sadd.s32 %s34, 1
      %s36 = scalar_select %p33, %s34, %s35
      %p39 = pneg %p33
      %p40 = scmp.eq.s32.totalorder %s24, 1
      %p41 = por %p39, %p40
      %p42 = scmp.ne.s32.totalorder %s34, %s37
      %p43 = scmp.eq.s32.totalorder %s24, 0
      %p44 = por %p42, %p43
      %p45 = scmp.ne.s32.totalorder %s34, %s37
      %p46 = scmp.eq.s32.totalorder %s29, 1
      %p47 = por %p45, %p46
      %p48 = scmp.ne.s32.totalorder %s37, %s38
      %p49 = scmp.eq.s32.totalorder %s29, 0
      %p50 = por %p48, %p49
      %p51 = scmp.ne.s32.totalorder %s37, %s38
      %p52 = scmp.eq.s32.totalorder %s30, 1
      %p53 = por %p51, %p52
      %p55 = scmp.ne.s32.totalorder %s38, %s54
      %p56 = scmp.eq.s32.totalorder %s30, 0
      %p57 = por %p55, %p56
      %s59 = sadd.s32 %s58, 1
      %p62 = scmp.eq.s32.totalorder %s24, 1
      %p63 = scmp.ne.s32.totalorder %s58, %s60
      %p64 = scmp.eq.s32.totalorder %s24, 0
      %p65 = por %p63, %p64
      %p66 = scmp.ne.s32.totalorder %s58, %s60
      %p67 = scmp.eq.s32.totalorder %s29, 1
      %p68 = por %p66, %p67
      %p69 = scmp.ne.s32.totalorder %s60, %s61
      %p70 = scmp.eq.s32.totalorder %s29, 0
      %p71 = por %p69, %p70
      %p72 = scmp.ne.s32.totalorder %s60, %s61
      %p73 = scmp.eq.s32.totalorder %s30, 1
      %p74 = por %p72, %p73
      %p76 = scmp.ne.s32.totalorder %s61, %s75
      %p77 = scmp.eq.s32.totalorder %s30, 0
      %p78 = por %p76, %p77
      %s80 = sadd.s32 %s79, 1
      %p83 = scmp.eq.s32.totalorder %s24, 1
      %p84 = scmp.ne.s32.totalorder %s79, %s81
      %p85 = scmp.eq.s32.totalorder %s24, 0
      %p86 = por %p84, %p85
      %p87 = scmp.ne.s32.totalorder %s79, %s81
      %p88 = scmp.eq.s32.totalorder %s29, 1
      %p89 = por %p87, %p88
      %p90 = scmp.ne.s32.totalorder %s81, %s82
      %p91 = scmp.eq.s32.totalorder %s29, 0
      %p92 = por %p90, %p91
      %p93 = scmp.ne.s32.totalorder %s81, %s82
      %p94 = scmp.eq.s32.totalorder %s30, 1
      %p95 = por %p93, %p94
      %p97 = scmp.ne.s32.totalorder %s82, %s96
      %p98 = scmp.eq.s32.totalorder %s30, 0
      %p99 = por %p97, %p98
      %s101 = sadd.s32 %s100, 1
      %p104 = scmp.eq.s32.totalorder %s24, 1
      %p105 = scmp.ne.s32.totalorder %s100, %s102
      %p106 = scmp.eq.s32.totalorder %s24, 0
      %p107 = por %p105, %p106
      %p108 = scmp.ne.s32.totalorder %s100, %s102
      %p109 = scmp.eq.s32.totalorder %s29, 1
      %p110 = por %p108, %p109
      %p111 = scmp.ne.s32.totalorder %s102, %s103
      %p112 = scmp.eq.s32.totalorder %s29, 0
      %p113 = por %p111, %p112
      %p114 = scmp.ne.s32.totalorder %s102, %s103
      %p115 = scmp.eq.s32.totalorder %s30, 1
      %p116 = por %p114, %p115
      %p118 = scmp.ne.s32.totalorder %s103, %s117
      %p119 = scmp.eq.s32.totalorder %s30, 0
      %p120 = por %p118, %p119
      %s122 = sadd.s32 %s121, 1
      %p125 = scmp.eq.s32.totalorder %s24, 1
      %p126 = scmp.ne.s32.totalorder %s121, %s123
      %p127 = scmp.eq.s32.totalorder %s24, 0
      %p128 = por %p126, %p127
      %p129 = scmp.ne.s32.totalorder %s121, %s123
      %p130 = scmp.eq.s32.totalorder %s29, 1
      %p131 = por %p129, %p130
      %p132 = scmp.ne.s32.totalorder %s123, %s124
      %p133 = scmp.eq.s32.totalorder %s29, 0
      %p134 = por %p132, %p133
      %p135 = scmp.ne.s32.totalorder %s123, %s124
      %p136 = scmp.eq.s32.totalorder %s30, 1
      %p137 = por %p135, %p136
      %p139 = scmp.ne.s32.totalorder %s124, %s138
      %p140 = scmp.eq.s32.totalorder %s30, 0
      %p141 = por %p139, %p140
      %s143 = sadd.s32 %s142, 1
      %p146 = scmp.eq.s32.totalorder %s24, 1
      %p147 = scmp.ne.s32.totalorder %s142, %s144
      %p148 = scmp.eq.s32.totalorder %s24, 0
      %p149 = por %p147, %p148
      %p150 = scmp.ne.s32.totalorder %s142, %s144
      %p151 = scmp.eq.s32.totalorder %s29, 1
      %p152 = por %p150, %p151
      %p153 = scmp.ne.s32.totalorder %s144, %s145
      %p154 = scmp.eq.s32.totalorder %s29, 0
      %p155 = por %p153, %p154
      %p156 = scmp.ne.s32.totalorder %s144, %s145
      %p157 = scmp.eq.s32.totalorder %s30, 1
      %p158 = por %p156, %p157
      %p160 = scmp.ne.s32.totalorder %s145, %s159
      %p161 = scmp.eq.s32.totalorder %s30, 0
      %p162 = por %p160, %p161
      %s164 = sadd.s32 %s163, 1
      %p167 = scmp.eq.s32.totalorder %s24, 1
      %p168 = scmp.ne.s32.totalorder %s163, %s165
      %p169 = scmp.eq.s32.totalorder %s24, 0
      %p170 = por %p168, %p169
      %p171 = scmp.ne.s32.totalorder %s163, %s165
      %p172 = scmp.eq.s32.totalorder %s29, 1
      %p173 = por %p171, %p172
      %p174 = scmp.ne.s32.totalorder %s165, %s166
      %p175 = scmp.eq.s32.totalorder %s29, 0
      %p176 = por %p174, %p175
      %p177 = scmp.ne.s32.totalorder %s165, %s166
      %p178 = scmp.eq.s32.totalorder %s30, 1
      %p179 = por %p177, %p178
      %p181 = scmp.ne.s32.totalorder %s166, %s180
      %p182 = scmp.eq.s32.totalorder %s30, 0
      %p183 = por %p181, %p182
      %s185 = sadd.s32 %s184, 1
      %p188 = scmp.eq.s32.totalorder %s24, 1
      %p189 = scmp.ne.s32.totalorder %s184, %s186
      %p190 = scmp.eq.s32.totalorder %s24, 0
      %p191 = por %p189, %p190
      %p192 = scmp.ne.s32.totalorder %s184, %s186
      %p193 = scmp.eq.s32.totalorder %s29, 1
      %p194 = por %p192, %p193
      %p195 = scmp.ne.s32.totalorder %s186, %s187
      %p196 = scmp.eq.s32.totalorder %s29, 0
      %p197 = por %p195, %p196
      %p198 = scmp.ne.s32.totalorder %s186, %s187
      %p199 = scmp.eq.s32.totalorder %s30, 1
      %p200 = por %p198, %p199
      %p202 = scmp.ne.s32.totalorder %s187, %s201
      %p203 = scmp.eq.s32.totalorder %s30, 0
      %p204 = por %p202, %p203
      %s206 = sadd.s32 %s205, 1
      %p209 = scmp.eq.s32.totalorder %s24, 1
      %p210 = scmp.ne.s32.totalorder %s205, %s207
      %p211 = scmp.eq.s32.totalorder %s24, 0
      %p212 = por %p210, %p211
      %p213 = scmp.ne.s32.totalorder %s205, %s207
      %p214 = scmp.eq.s32.totalorder %s29, 1
      %p215 = por %p213, %p214
      %p216 = scmp.ne.s32.totalorder %s207, %s208
      %p217 = scmp.eq.s32.totalorder %s29, 0
      %p218 = por %p216, %p217
      %p219 = scmp.ne.s32.totalorder %s207, %s208
      %p220 = scmp.eq.s32.totalorder %s30, 1
      %p221 = por %p219, %p220
      %p223 = scmp.ne.s32.totalorder %s208, %s222
      %p224 = scmp.eq.s32.totalorder %s30, 0
      %p225 = por %p223, %p224
      %s227 = sadd.s32 %s226, 1
      %p230 = scmp.eq.s32.totalorder %s24, 1
      %p231 = scmp.ne.s32.totalorder %s226, %s228
      %p232 = scmp.eq.s32.totalorder %s24, 0
      %p233 = por %p231, %p232
      %p234 = scmp.ne.s32.totalorder %s226, %s228
      %p235 = scmp.eq.s32.totalorder %s29, 1
      %p236 = por %p234, %p235
      %p237 = scmp.ne.s32.totalorder %s228, %s229
      %p238 = scmp.eq.s32.totalorder %s29, 0
      %p239 = por %p237, %p238
      %p240 = scmp.ne.s32.totalorder %s228, %s229
      %p241 = scmp.eq.s32.totalorder %s30, 1
      %p242 = por %p240, %p241
      %p244 = scmp.ne.s32.totalorder %s229, %s243
      %p245 = scmp.eq.s32.totalorder %s30, 0
      %p246 = por %p244, %p245
      %s248 = sadd.s32 %s247, 1
      %p251 = scmp.eq.s32.totalorder %s24, 1
      %p252 = scmp.ne.s32.totalorder %s247, %s249
      %p253 = scmp.eq.s32.totalorder %s24, 0
      %p254 = por %p252, %p253
      %p255 = scmp.ne.s32.totalorder %s247, %s249
      %p256 = scmp.eq.s32.totalorder %s29, 1
      %p257 = por %p255, %p256
      %p258 = scmp.ne.s32.totalorder %s249, %s250
      %p259 = scmp.eq.s32.totalorder %s29, 0
      %p260 = por %p258, %p259
      %p261 = scmp.ne.s32.totalorder %s249, %s250
      %p262 = scmp.eq.s32.totalorder %s30, 1
      %p263 = por %p261, %p262
      %p265 = scmp.ne.s32.totalorder %s250, %s264
      %p266 = scmp.eq.s32.totalorder %s30, 0
      %p267 = por %p265, %p266
      %s269 = sadd.s32 %s268, 1
      %p272 = scmp.eq.s32.totalorder %s24, 1
      %p273 = scmp.ne.s32.totalorder %s268, %s270
      %p274 = scmp.eq.s32.totalorder %s24, 0
      %p275 = por %p273, %p274
      %p276 = scmp.ne.s32.totalorder %s268, %s270
      %p277 = scmp.eq.s32.totalorder %s29, 1
      %p278 = por %p276, %p277
      %p279 = scmp.ne.s32.totalorder %s270, %s271
      %p280 = scmp.eq.s32.totalorder %s29, 0
      %p281 = por %p279, %p280
      %p282 = scmp.ne.s32.totalorder %s270, %s271
      %p283 = scmp.eq.s32.totalorder %s30, 1
      %p284 = por %p282, %p283
      %p286 = scmp.ne.s32.totalorder %s271, %s285
      %p287 = scmp.eq.s32.totalorder %s30, 0
      %p288 = por %p286, %p287
      %s289 = ssub.s32 %s24, %s31
      %p290 = scmp.eq.s32.totalorder %s289, 0
      %s292 = sadd.s32 %s291, 1
      %s293 = scalar_select %p290, %s291, %s292
      %p296 = pneg %p290
      %p297 = scmp.eq.s32.totalorder %s24, 1
      %p298 = por %p296, %p297
      %p299 = scmp.ne.s32.totalorder %s291, %s294
      %p300 = scmp.eq.s32.totalorder %s24, 0
      %p301 = por %p299, %p300
      %p302 = scmp.ne.s32.totalorder %s291, %s294
      %p303 = scmp.eq.s32.totalorder %s29, 1
      %p304 = por %p302, %p303
      %p305 = scmp.ne.s32.totalorder %s294, %s295
      %p306 = scmp.eq.s32.totalorder %s29, 0
      %p307 = por %p305, %p306
      %p308 = scmp.ne.s32.totalorder %s294, %s295
      %p309 = scmp.eq.s32.totalorder %s30, 1
      %p310 = por %p308, %p309
      %p312 = scmp.ne.s32.totalorder %s295, %s311
      %p313 = scmp.eq.s32.totalorder %s30, 0
      %p314 = por %p312, %p313
      %p315 = scmp.le.s32.totalorder 1, %s24
      %p316 = scmp.lt.s32.totalorder %s24, 3
      %p317 = pnand %p315, %p316
      %p318 = pneg %p317
      // Predicated region
      $region9: #{decode.1} parent=5 // pred_check
        _
      $region10: #{decode.1} parent=5 // pred_check_branch
        %320 = sbr.rel (%p317) target = $region12
      $region11: #{decode.1} parent=5 // pred_region
        %s321 = ssub.s32 %s24, 1
        // Predicated region
        $region13: #{decode.1} parent=11 // pred_check
          %p322 = pneg %p71
        $region14: #{decode.1} parent=11 // pred_check_branch
          %324 = sbr.rel (%p322) target = $region16
        $region15: #{decode.1} parent=11 // pred_region
          %s326 = ssub.s32 2048, 2048
          %327 = vsyncadd [#allocation3], %s326
          %s328 = sshll.u32 [#allocation2], 4
          %s329 = int_to_ptr.vmem [resolvable:$true] %s328
          %334 = dma.hbm_to_vmem [thread:$0]  %s1, 2048, %s329, [#allocation3], 128, 128, 8
        $region16: #{decode.1} parent=11 // pred_fallthru
          _
        // Predicated region
        $region17: #{decode.1} parent=11 // pred_check
          %p335 = pneg %p92
        $region18: #{decode.1} parent=11 // pred_check_branch
          %337 = sbr.rel (%p335) target = $region20
        $region19: #{decode.1} parent=11 // pred_region
          %s339 = ssub.s32 2048, 2048
          %340 = vsyncadd [#allocation5], %s339
          %s341 = sshll.u32 [#allocation4], 4
          %s342 = int_to_ptr.vmem [resolvable:$true] %s341
          %347 = dma.hbm_to_vmem [thread:$0]  %s2, 2048, %s342, [#allocation5], 128, 128, 8
        $region20: #{decode.1} parent=11 // pred_fallthru
          _
        // Predicated region
        $region21: #{decode.1} parent=11 // pred_check
          %p348 = pneg %p113
        $region22: #{decode.1} parent=11 // pred_check_branch
          %350 = sbr.rel (%p348) target = $region24
        $region23: #{decode.1} parent=11 // pred_region
          %s352 = ssub.s32 1024, 1024
          %353 = vsyncadd [#allocation5], %s352
          %s354 = sshll.u32 [#allocation6], 4
          %s355 = int_to_ptr.vmem [resolvable:$true] %s354
          %360 = dma.hbm_to_vmem [thread:$0]  %s3, 1024, %s355, [#allocation5], 128, 128, 8
        $region24: #{decode.1} parent=11 // pred_fallthru
          _
        // Predicated region
        $region25: #{decode.1} parent=11 // pred_check
          %p361 = pneg %p134
        $region26: #{decode.1} parent=11 // pred_check_branch
          %363 = sbr.rel (%p361) target = $region28
        $region27: #{decode.1} parent=11 // pred_region
          %s365 = ssub.s32 1024, 1024
          %366 = vsyncadd [#allocation8], %s365
          %s367 = sshll.u32 [#allocation7], 4
          %s368 = int_to_ptr.vmem [resolvable:$true] %s367
          %373 = dma.hbm_to_vmem [thread:$0]  %s4, 1024, %s368, [#allocation8], 128, 128, 8
        $region28: #{decode.1} parent=11 // pred_fallthru
          _
        // Predicated region
        $region29: #{decode.1} parent=11 // pred_check
          %p374 = pneg %p155
        $region30: #{decode.1} parent=11 // pred_check_branch
          %376 = sbr.rel (%p374) target = $region32
        $region31: #{decode.1} parent=11 // pred_region
          %s378 = ssub.s32 512, 512
          %379 = vsyncadd [#allocation8], %s378
          %s380 = sshll.u32 [#allocation9], 4
          %s381 = int_to_ptr.vmem [resolvable:$true] %s380
          %386 = dma.hbm_to_vmem [thread:$0]  %s5, 512, %s381, [#allocation8], 128, 128, 8
        $region32: #{decode.1} parent=11 // pred_fallthru
          _
        // Predicated region
        $region33: #{decode.1} parent=11 // pred_check
          %p387 = pneg %p176
        $region34: #{decode.1} parent=11 // pred_check_branch
          %389 = sbr.rel (%p387) target = $region36
        $region35: #{decode.1} parent=11 // pred_region
          %s391 = ssub.s32 512, 512
          %392 = vsyncadd [#allocation11], %s391
          %s393 = sshll.u32 [#allocation10], 4
          %s394 = int_to_ptr.vmem [resolvable:$true] %s393
          %399 = dma.hbm_to_vmem [thread:$0]  %s6, 512, %s394, [#allocation11], 128, 128, 8
        $region36: #{decode.1} parent=11 // pred_fallthru
          _
        // Predicated region
        $region37: #{decode.1} parent=11 // pred_check
          %p400 = pneg %p197
        $region38: #{decode.1} parent=11 // pred_check_branch
          %402 = sbr.rel (%p400) target = $region40
        $region39: #{decode.1} parent=11 // pred_region
          %s404 = ssub.s32 512, 512
          %405 = vsyncadd [#allocation11], %s404
          %s406 = sshll.u32 [#allocation12], 4
          %s407 = int_to_ptr.vmem [resolvable:$true] %s406
          %412 = dma.hbm_to_vmem [thread:$0]  %s7, 512, %s407, [#allocation11], 128, 128, 8
        $region40: #{decode.1} parent=11 // pred_fallthru
          _
        // Predicated region
        $region41: #{decode.1} parent=11 // pred_check
          %p413 = pneg %p218
        $region42: #{decode.1} parent=11 // pred_check_branch
          %415 = sbr.rel (%p413) target = $region44
        $region43: #{decode.1} parent=11 // pred_region
          %s417 = ssub.s32 512, 512
          %418 = vsyncadd [#allocation14], %s417
          %s419 = sshll.u32 [#allocation13], 4
          %s420 = int_to_ptr.vmem [resolvable:$true] %s419
          %425 = dma.hbm_to_vmem [thread:$0]  %s8, 512, %s420, [#allocation14], 128, 128, 8
        $region44: #{decode.1} parent=11 // pred_fallthru
          _
        // Predicated region
        $region45: #{decode.1} parent=11 // pred_check
          %p426 = pneg %p239
        $region46: #{decode.1} parent=11 // pred_check_branch
          %428 = sbr.rel (%p426) target = $region48
        $region47: #{decode.1} parent=11 // pred_region
          %s430 = ssub.s32 8192, 8192
          %431 = vsyncadd [#allocation14], %s430
          %s432 = sshll.u32 [#allocation15], 4
          %s433 = int_to_ptr.vmem [resolvable:$true] %s432
          %438 = dma.hbm_to_vmem [thread:$0]  %s9, 8192, %s433, [#allocation14], 128, 128, 8
        $region48: #{decode.1} parent=11 // pred_fallthru
          _
        // Predicated region
        $region49: #{decode.1} parent=11 // pred_check
          %p439 = pneg %p260
        $region50: #{decode.1} parent=11 // pred_check_branch
          %441 = sbr.rel (%p439) target = $region52
        $region51: #{decode.1} parent=11 // pred_region
          %s443 = ssub.s32 8192, 8192
          %444 = vsyncadd [#allocation17], %s443
          %s445 = sshll.u32 [#allocation16], 4
          %s446 = int_to_ptr.vmem [resolvable:$true] %s445
          %451 = dma.hbm_to_vmem [thread:$0]  %s10, 8192, %s446, [#allocation17], 128, 128, 8
        $region52: #{decode.1} parent=11 // pred_fallthru
          _
        // Predicated region
        $region53: #{decode.1} parent=11 // pred_check
          %p452 = pneg %p281
        $region54: #{decode.1} parent=11 // pred_check_branch
          %454 = sbr.rel (%p452) target = $region56
        $region55: #{decode.1} parent=11 // pred_region
          %s456 = ssub.s32 23040, 23040
          %457 = vsyncadd [#allocation17], %s456
          %s458 = sshll.u32 [#allocation18], 4
          %s459 = int_to_ptr.vmem [resolvable:$true] %s458
          %464 = dma.hbm_to_vmem [thread:$0]  %s11, 23040, %s459, [#allocation17], 384, 384, 24
        $region56: #{decode.1} parent=11 // pred_fallthru
          _
      $region12: #{decode.1} parent=5 // pred_fallthru
        _
      %p465 = scmp.lt.s32.totalorder %s24, 2
      // Predicated region
      $region57: #{decode.1} parent=5 // pred_check
        %p466 = pneg %p465
      $region58: #{decode.1} parent=5 // pred_check_branch
        %468 = sbr.rel (%p466) target = $region60
      $region59: #{decode.1} parent=5 // pred_region
        // Predicated region
        $region61: #{decode.1} parent=59 // pred_check
          %p469 = pneg %p44
        $region62: #{decode.1} parent=59 // pred_check_branch
          %471 = sbr.rel (%p469) target = $region64
        $region63: #{decode.1} parent=59 // pred_region
          %p472 = scmp.lt.s32.totalorder %s24, 1
          %s473 = scalar_select %p472, %s24, 1
          %s474 = smul.addr %s473, 4
          %s475 = smul.addr %s474, 8
          %s476 = scalar_lea.vmem %s0, %s475
        $region64: #{decode.1} parent=59 // pred_fallthru
          _
      $region60: #{decode.1} parent=5 // pred_fallthru
        _
      %p477 = scmp.le.s32.totalorder 1, %s24
      %p478 = scmp.lt.s32.totalorder %s24, 3
      %p479 = pnand %p477, %p478
      %p480 = pneg %p479
      // Predicated region
      $region65: #{decode.1} parent=5 // pred_check
        _
      $region66: #{decode.1} parent=5 // pred_check_branch
        %482 = sbr.rel (%p479) target = $region68
      $region67: #{decode.1} parent=5 // pred_region
        %s483 = ssub.s32 %s24, 1
        // Predicated region
        $region69: #{decode.1} parent=67 // pred_check
          %p484 = pneg %p71
        $region70: #{decode.1} parent=67 // pred_check_branch
          %486 = sbr.rel (%p484) target = $region72
        $region71: #{decode.1} parent=67 // pred_region
          %487 = dma.done [#allocation3], 2048
        $region72: #{decode.1} parent=67 // pred_fallthru
          _
        // Predicated region
        $region73: #{decode.1} parent=67 // pred_check
          %p488 = pneg %p92
        $region74: #{decode.1} parent=67 // pred_check_branch
          %490 = sbr.rel (%p488) target = $region76
        $region75: #{decode.1} parent=67 // pred_region
          %491 = dma.done [#allocation5], 2048
        $region76: #{decode.1} parent=67 // pred_fallthru
          _
        // Predicated region
        $region77: #{decode.1} parent=67 // pred_check
          %p492 = pneg %p113
        $region78: #{decode.1} parent=67 // pred_check_branch
          %494 = sbr.rel (%p492) target = $region80
        $region79: #{decode.1} parent=67 // pred_region
          %495 = dma.done [#allocation5], 1024
        $region80: #{decode.1} parent=67 // pred_fallthru
          _
        // Predicated region
        $region81: #{decode.1} parent=67 // pred_check
          %p496 = pneg %p134
        $region82: #{decode.1} parent=67 // pred_check_branch
          %498 = sbr.rel (%p496) target = $region84
        $region83: #{decode.1} parent=67 // pred_region
          %499 = dma.done [#allocation8], 1024
        $region84: #{decode.1} parent=67 // pred_fallthru
          _
        // Predicated region
        $region85: #{decode.1} parent=67 // pred_check
          %p500 = pneg %p155
        $region86: #{decode.1} parent=67 // pred_check_branch
          %502 = sbr.rel (%p500) target = $region88
        $region87: #{decode.1} parent=67 // pred_region
          %503 = dma.done [#allocation8], 512
        $region88: #{decode.1} parent=67 // pred_fallthru
          _
        // Predicated region
        $region89: #{decode.1} parent=67 // pred_check
          %p504 = pneg %p176
        $region90: #{decode.1} parent=67 // pred_check_branch
          %506 = sbr.rel (%p504) target = $region92
        $region91: #{decode.1} parent=67 // pred_region
          %507 = dma.done [#allocation11], 512
        $region92: #{decode.1} parent=67 // pred_fallthru
          _
        // Predicated region
        $region93: #{decode.1} parent=67 // pred_check
          %p508 = pneg %p197
        $region94: #{decode.1} parent=67 // pred_check_branch
          %510 = sbr.rel (%p508) target = $region96
        $region95: #{decode.1} parent=67 // pred_region
          %511 = dma.done [#allocation11], 512
        $region96: #{decode.1} parent=67 // pred_fallthru
          _
        // Predicated region
        $region97: #{decode.1} parent=67 // pred_check
          %p512 = pneg %p218
        $region98: #{decode.1} parent=67 // pred_check_branch
          %514 = sbr.rel (%p512) target = $region100
        $region99: #{decode.1} parent=67 // pred_region
          %515 = dma.done [#allocation14], 512
        $region100: #{decode.1} parent=67 // pred_fallthru
          _
        // Predicated region
        $region101: #{decode.1} parent=67 // pred_check
          %p516 = pneg %p239
        $region102: #{decode.1} parent=67 // pred_check_branch
          %518 = sbr.rel (%p516) target = $region104
        $region103: #{decode.1} parent=67 // pred_region
          %519 = dma.done [#allocation14], 8192
        $region104: #{decode.1} parent=67 // pred_fallthru
          _
        // Predicated region
        $region105: #{decode.1} parent=67 // pred_check
          %p520 = pneg %p260
        $region106: #{decode.1} parent=67 // pred_check_branch
          %522 = sbr.rel (%p520) target = $region108
        $region107: #{decode.1} parent=67 // pred_region
          %523 = dma.done [#allocation17], 8192
        $region108: #{decode.1} parent=67 // pred_fallthru
          _
        // Predicated region
        $region109: #{decode.1} parent=67 // pred_check
          %p524 = pneg %p281
        $region110: #{decode.1} parent=67 // pred_check_branch
          %526 = sbr.rel (%p524) target = $region112
        $region111: #{decode.1} parent=67 // pred_region
          %527 = dma.done [#allocation17], 23040
        $region112: #{decode.1} parent=67 // pred_fallthru
          _
        %p528 = scmp.lt.s32.totalorder %s29, 1
        %s529 = scalar_select %p528, %s29, 1
        %s530 = smul.addr %s529, 4
        %s531 = smul.addr %s530, 8
        %s532 = scalar_lea.vmem %s0, %s531
        %p533 = pneg %p50
        %p534 = pneg %p47
        %p535 = pneg %p71
        %p536 = pneg %p68
        %p537 = pneg %p92
        %p538 = pneg %p89
        %p539 = pneg %p113
        %p540 = pneg %p110
        %p541 = pneg %p134
        %p542 = pneg %p131
        %p543 = pneg %p155
        %p544 = pneg %p152
        %p545 = pneg %p176
        %p546 = pneg %p173
        %p547 = pneg %p197
        %p548 = pneg %p194
        %p549 = pneg %p218
        %p550 = pneg %p215
        %p551 = pneg %p239
        %p552 = pneg %p236
        %p553 = pneg %p260
        %p554 = pneg %p257
        %p555 = pneg %p281
        %p556 = pneg %p278
        %p557 = pneg %p307
        %p558 = pneg %p304
        %p559 = scmp.lt.s32.totalorder %s29, 1
        %s560 = scalar_select %p559, %s29, 1
        %s561 = smul.addr %s560, 12
        %s562 = smul.addr %s561, 8
        %s563 = scalar_lea.vmem %s12, %s562
        %p564 = scmp.lt.s32.totalorder %s29, 1
        %s565 = scalar_select %p564, %s29, 1
        %s566 = smul.addr %s565, 4
        %s567 = smul.addr %s566, 8
        %s568 = scalar_lea.vmem %s0, %s567
        %p569 = scmp.lt.s32.totalorder %s29, 1
        %s570 = scalar_select %p569, %s29, 1
        %s571 = smul.addr %s570, 12
        %s572 = smul.addr %s571, 8
        %s573 = scalar_lea.vmem %s12, %s572
        %v574 = vld [vmem:[%s568] sm:$0xff]
        %v575 = vld [vmem:[%s568 + $0x8] sm:$0xff]
        %v576 = vld [vmem:[%s568 + $0x10] sm:$0xff]
        %v577 = vld [vmem:[%s568 + $0x18] sm:$0xff]
        %582 = vrot.lane.b32.xlu0 %v574, 127
        %v583 = vpop.permute.xlu0 %582
        %584 = vrot.lane.b32.xlu0 %v575, 127
        %v585 = vpop.permute.xlu0 %584
        %586 = vrot.lane.b32.xlu0 %v576, 127
        %v587 = vpop.permute.xlu0 %586
        %588 = vrot.lane.b32.xlu0 %v577, 127
        %v589 = vpop.permute.xlu0 %588
        %594 = vrot.lane.b32.xlu0 %v574, 124
        %v595 = vpop.permute.xlu0 %594
        %596 = vrot.lane.b32.xlu0 %v575, 124
        %v597 = vpop.permute.xlu0 %596
        %598 = vrot.lane.b32.xlu0 %v576, 124
        %v599 = vpop.permute.xlu0 %598
        %600 = vrot.lane.b32.xlu0 %v577, 124
        %v601 = vpop.permute.xlu0 %600
        %606 = vrot.lane.b32.xlu0 %v574, 123
        %v607 = vpop.permute.xlu0 %606
        %608 = vrot.lane.b32.xlu0 %v575, 123
        %v609 = vpop.permute.xlu0 %608
        %610 = vrot.lane.b32.xlu0 %v576, 123
        %v611 = vpop.permute.xlu0 %610
        %612 = vrot.lane.b32.xlu0 %v577, 123
        %v613 = vpop.permute.xlu0 %612
        %v618 = vld [vmem:[#allocation2] sm:$0xff]
        %v619 = vld [vmem:[#allocation2 + $0x8] sm:$0xff]
        %v620 = vld [vmem:[#allocation2 + $0x10] sm:$0xff]
        %v621 = vld [vmem:[#allocation2 + $0x18] sm:$0xff]
        %v622 = vld [vmem:[#allocation2 + $0x20] sm:$0xff]
        %v623 = vld [vmem:[#allocation2 + $0x28] sm:$0xff]
        %v624 = vld [vmem:[#allocation2 + $0x30] sm:$0xff]
        %v625 = vld [vmem:[#allocation2 + $0x38] sm:$0xff]
        %v626 = vld [vmem:[#allocation2 + $0x40] sm:$0xff]
        %v627 = vld [vmem:[#allocation2 + $0x48] sm:$0xff]
        %v628 = vld [vmem:[#allocation2 + $0x50] sm:$0xff]
        %v629 = vld [vmem:[#allocation2 + $0x58] sm:$0xff]
        %v630 = vld [vmem:[#allocation2 + $0x60] sm:$0xff]
        %v631 = vld [vmem:[#allocation2 + $0x68] sm:$0xff]
        %v632 = vld [vmem:[#allocation2 + $0x70] sm:$0xff]
        %v633 = vld [vmem:[#allocation2 + $0x78] sm:$0xff]
        %v634 = vld [vmem:[#allocation4] sm:$0xff]
        %v635 = vld [vmem:[#allocation4 + $0x8] sm:$0xff]
        %v636 = vld [vmem:[#allocation4 + $0x10] sm:$0xff]
        %v637 = vld [vmem:[#allocation4 + $0x18] sm:$0xff]
        %v638 = vld [vmem:[#allocation4 + $0x20] sm:$0xff]
        %v639 = vld [vmem:[#allocation4 + $0x28] sm:$0xff]
        %v640 = vld [vmem:[#allocation4 + $0x30] sm:$0xff]
        %v641 = vld [vmem:[#allocation4 + $0x38] sm:$0xff]
        %v642 = vld [vmem:[#allocation4 + $0x40] sm:$0xff]
        %v643 = vld [vmem:[#allocation4 + $0x48] sm:$0xff]
        %v644 = vld [vmem:[#allocation4 + $0x50] sm:$0xff]
        %v645 = vld [vmem:[#allocation4 + $0x58] sm:$0xff]
        %v646 = vld [vmem:[#allocation4 + $0x60] sm:$0xff]
        %v647 = vld [vmem:[#allocation4 + $0x68] sm:$0xff]
        %v648 = vld [vmem:[#allocation4 + $0x70] sm:$0xff]
        %v649 = vld [vmem:[#allocation4 + $0x78] sm:$0xff]
        %651 = vset.pattern.permute.xlu0 0
        %652 = vperm.xlu0 %651, %v634
        %v653 = vpop.permute.xlu0 %652
        %656 = vset.pattern.permute.xlu0 0
        %657 = vperm.xlu0 %656, %v635
        %v658 = vpop.permute.xlu0 %657
        %661 = vset.pattern.permute.xlu0 0
        %662 = vperm.xlu0 %661, %v636
        %v663 = vpop.permute.xlu0 %662
        %666 = vset.pattern.permute.xlu0 0
        %667 = vperm.xlu0 %666, %v637
        %v668 = vpop.permute.xlu0 %667
        %671 = vset.pattern.permute.xlu0 0
        %672 = vperm.xlu0 %671, %v638
        %v673 = vpop.permute.xlu0 %672
        %676 = vset.pattern.permute.xlu0 0
        %677 = vperm.xlu0 %676, %v639
        %v678 = vpop.permute.xlu0 %677
        %681 = vset.pattern.permute.xlu0 0
        %682 = vperm.xlu0 %681, %v640
        %v683 = vpop.permute.xlu0 %682
        %686 = vset.pattern.permute.xlu0 0
        %687 = vperm.xlu0 %686, %v641
        %v688 = vpop.permute.xlu0 %687
        %691 = vset.pattern.permute.xlu0 0
        %692 = vperm.xlu0 %691, %v642
        %v693 = vpop.permute.xlu0 %692
        %696 = vset.pattern.permute.xlu0 0
        %697 = vperm.xlu0 %696, %v643
        %v698 = vpop.permute.xlu0 %697
        %701 = vset.pattern.permute.xlu0 0
        %702 = vperm.xlu0 %701, %v644
        %v703 = vpop.permute.xlu0 %702
        %706 = vset.pattern.permute.xlu0 0
        %707 = vperm.xlu0 %706, %v645
        %v708 = vpop.permute.xlu0 %707
        %711 = vset.pattern.permute.xlu0 0
        %712 = vperm.xlu0 %711, %v646
        %v713 = vpop.permute.xlu0 %712
        %716 = vset.pattern.permute.xlu0 0
        %717 = vperm.xlu0 %716, %v647
        %v718 = vpop.permute.xlu0 %717
        %721 = vset.pattern.permute.xlu0 0
        %722 = vperm.xlu0 %721, %v648
        %v723 = vpop.permute.xlu0 %722
        %726 = vset.pattern.permute.xlu0 0
        %727 = vperm.xlu0 %726, %v649
        %v728 = vpop.permute.xlu0 %727
        %730 = vmatprep.subr.mxu0 0.0
        %731 = vmatpush1.msra.mxu0 %v613
        %732 = vmatprep.subr.mxu0 0.0
        %733 = vmatpush1.msra.mxu0 %v611
        %734 = vmatprep.subr.mxu0 0.0
        %735 = vmatpush1.msra.mxu0 %v609
        %736 = vmatprep.subr.mxu0 0.0
        %737 = vmatpush1.msra.mxu0 %v607
        %738 = vmatprep.subr.mxu0 0.0
        %739 = vmatpush1.msra.mxu0 %v601
        %740 = vmatprep.subr.mxu0 0.0
        %741 = vmatpush1.msra.mxu0 %v599
        %742 = vmatprep.subr.mxu0 0.0
        %743 = vmatpush1.msra.mxu0 %v597
        %744 = vmatprep.subr.mxu0 0.0
        %745 = vmatpush1.msra.mxu0 %v595
        %746 = vmatprep.subr.mxu0 0.0
        %747 = vmatpush1.msra.mxu0 %v589
        %748 = vmatprep.subr.mxu0 0.0
        %749 = vmatpush1.msra.mxu0 %v587
        %750 = vmatprep.subr.mxu0 0.0
        %751 = vmatpush1.msra.mxu0 %v585
        %752 = vmatprep.subr.mxu0 0.0
        %753 = vmatpush1.msra.mxu0 %v583
        %754 = vmatprep.subr.mxu0 0.0
        %755 = vmatpush1.msra.mxu0 %v577
        %756 = vmatprep.subr.mxu0 0.0
        %757 = vmatpush1.msra.mxu0 %v576
        %758 = vmatprep.subr.mxu0 0.0
        %759 = vmatpush1.msra.mxu0 %v575
        %760 = vmatprep.subr.mxu0 0.0
        %761 = vmatpush1.msra.mxu0 %v574
        %762 = vmatprep.subr.mxu0 0.0
        %763 = vmatpush2.msra.mxu0 0.0
        %764 = vmatprep.subr.mxu0 0.0
        %765 = vmatpush2.msra.mxu0 0.0
        %766 = vmatprep.subr.mxu0 0.0
        %767 = vmatpush2.msra.mxu0 0.0
        %768 = vmatprep.subr.mxu0 0.0
        %769 = vmatpush2.msra.mxu0 0.0
        %770 = vmatprep.subr.mxu0 0.0
        %771 = vmatpush2.msra.mxu0 0.0
        %772 = vmatprep.subr.mxu0 0.0
        %773 = vmatpush2.msra.mxu0 0.0
        %774 = vmatprep.subr.mxu0 0.0
        %775 = vmatpush2.msra.mxu0 0.0
        %776 = vmatprep.subr.mxu0 0.0
        %777 = vmatpush2.msra.mxu0 0.0
        %778 = vmatprep.subr.mxu0 0.0
        %779 = vmatpush2.msra.mxu0 0.0
        %780 = vmatprep.subr.mxu0 0.0
        %781 = vmatpush2.msra.mxu0 0.0
        %782 = vmatprep.subr.mxu0 0.0
        %783 = vmatpush2.msra.mxu0 0.0
        %784 = vmatprep.subr.mxu0 0.0
        %785 = vmatpush2.msra.mxu0 0.0
        %786 = vmatprep.subr.mxu0 0.0
        %787 = vmatpush2.msra.mxu0 0.0
        %788 = vmatprep.subr.mxu0 0.0
        %789 = vmatpush2.msra.mxu0 0.0
        %790 = vmatprep.subr.mxu0 0.0
        %791 = vmatpush2.msra.mxu0 0.0
        %792 = vmatprep.subr.mxu0 0.0
        %793 = vmatpush2.msra.mxu0 0.0
        %794 = vmatprep.mubr.f32.mxu0 0.0
        %795 = vmatmul.mubr.f32.gmra.mxu0 %v618
        %v796 = vpop.f32.mrf.mxu0
        %v797 = vadd.f32 %v653, %v796
        %v798 = vpop.f32.mrf.mxu0
        %799 = vmatprep.mubr.f32.mxu0 0.0
        %800 = vmatmul.mubr.f32.gmra.mxu0 %v619
        %v801 = vpop.f32.mrf.mxu0
        %v802 = vadd.f32 %v658, %v801
        %v803 = vpop.f32.mrf.mxu0
        %804 = vmatprep.mubr.f32.mxu0 0.0
        %805 = vmatmul.mubr.f32.gmra.mxu0 %v620
        %v806 = vpop.f32.mrf.mxu0
        %v807 = vadd.f32 %v663, %v806
        %v808 = vpop.f32.mrf.mxu0
        %809 = vmatprep.mubr.f32.mxu0 0.0
        %810 = vmatmul.mubr.f32.gmra.mxu0 %v621
        %v811 = vpop.f32.mrf.mxu0
        %v812 = vadd.f32 %v668, %v811
        %v813 = vpop.f32.mrf.mxu0
        %814 = vmatprep.mubr.f32.mxu0 0.0
        %815 = vmatmul.mubr.f32.gmra.mxu0 %v622
        %v816 = vpop.f32.mrf.mxu0
        %v817 = vadd.f32 %v673, %v816
        %v818 = vpop.f32.mrf.mxu0
        %819 = vmatprep.mubr.f32.mxu0 0.0
        %820 = vmatmul.mubr.f32.gmra.mxu0 %v623
        %v821 = vpop.f32.mrf.mxu0
        %v822 = vadd.f32 %v678, %v821
        %v823 = vpop.f32.mrf.mxu0
        %824 = vmatprep.mubr.f32.mxu0 0.0
        %825 = vmatmul.mubr.f32.gmra.mxu0 %v624
        %v826 = vpop.f32.mrf.mxu0
        %v827 = vadd.f32 %v683, %v826
        %v828 = vpop.f32.mrf.mxu0
        %829 = vmatprep.mubr.f32.mxu0 0.0
        %830 = vmatmul.mubr.f32.gmra.mxu0 %v625
        %v831 = vpop.f32.mrf.mxu0
        %v832 = vadd.f32 %v688, %v831
        %v833 = vpop.f32.mrf.mxu0
        %834 = vmatprep.mubr.f32.mxu0 0.0
        %835 = vmatmul.mubr.f32.gmra.mxu0 %v626
        %v836 = vpop.f32.mrf.mxu0
        %v837 = vadd.f32 %v693, %v836
        %v838 = vpop.f32.mrf.mxu0
        %839 = vmatprep.mubr.f32.mxu0 0.0
        %840 = vmatmul.mubr.f32.gmra.mxu0 %v627
        %v841 = vpop.f32.mrf.mxu0
        %v842 = vadd.f32 %v698, %v841
        %v843 = vpop.f32.mrf.mxu0
        %844 = vmatprep.mubr.f32.mxu0 0.0
        %845 = vmatmul.mubr.f32.gmra.mxu0 %v628
        %v846 = vpop.f32.mrf.mxu0
        %v847 = vadd.f32 %v703, %v846
        %v848 = vpop.f32.mrf.mxu0
        %849 = vmatprep.mubr.f32.mxu0 0.0
        %850 = vmatmul.mubr.f32.gmra.mxu0 %v629
        %v851 = vpop.f32.mrf.mxu0
        %v852 = vadd.f32 %v708, %v851
        %v853 = vpop.f32.mrf.mxu0
        %854 = vmatprep.mubr.f32.mxu0 0.0
        %855 = vmatmul.mubr.f32.gmra.mxu0 %v630
        %v856 = vpop.f32.mrf.mxu0
        %v857 = vadd.f32 %v713, %v856
        %v858 = vpop.f32.mrf.mxu0
        %859 = vmatprep.mubr.f32.mxu0 0.0
        %860 = vmatmul.mubr.f32.gmra.mxu0 %v631
        %v861 = vpop.f32.mrf.mxu0
        %v862 = vadd.f32 %v718, %v861
        %v863 = vpop.f32.mrf.mxu0
        %864 = vmatprep.mubr.f32.mxu0 0.0
        %865 = vmatmul.mubr.f32.gmra.mxu0 %v632
        %v866 = vpop.f32.mrf.mxu0
        %v867 = vadd.f32 %v723, %v866
        %v868 = vpop.f32.mrf.mxu0
        %869 = vmatprep.mubr.f32.mxu0 0.0
        %870 = vmatmul.mubr.f32.gmra.mxu0 %v633
        %v871 = vpop.f32.mrf.mxu0
        %v872 = vadd.f32 %v728, %v871
        %v873 = vpop.f32.mrf.mxu0
        %874 = vdwg.mxu0
        %v875 = vmax.f32 %v797, 0.0
        %v876 = vmax.f32 %v802, 0.0
        %v877 = vmax.f32 %v807, 0.0
        %v878 = vmax.f32 %v812, 0.0
        %v879 = vmax.f32 %v817, 0.0
        %v880 = vmax.f32 %v822, 0.0
        %v881 = vmax.f32 %v827, 0.0
        %v882 = vmax.f32 %v832, 0.0
        %v883 = vmax.f32 %v837, 0.0
        %v884 = vmax.f32 %v842, 0.0
        %v885 = vmax.f32 %v847, 0.0
        %v886 = vmax.f32 %v852, 0.0
        %v887 = vmax.f32 %v857, 0.0
        %v888 = vmax.f32 %v862, 0.0
        %v889 = vmax.f32 %v867, 0.0
        %v890 = vmax.f32 %v872, 0.0
        %v891 = vld [vmem:[#allocation15] sm:$0xff]
        %v892 = vld [vmem:[#allocation15 + $0x8] sm:$0xff]
        %v893 = vld [vmem:[#allocation15 + $0x10] sm:$0xff]
        %v894 = vld [vmem:[#allocation15 + $0x18] sm:$0xff]
        %v895 = vld [vmem:[#allocation15 + $0x20] sm:$0xff]
        %v896 = vld [vmem:[#allocation15 + $0x28] sm:$0xff]
        %v897 = vld [vmem:[#allocation15 + $0x30] sm:$0xff]
        %v898 = vld [vmem:[#allocation15 + $0x38] sm:$0xff]
        %v899 = vld [vmem:[#allocation15 + $0x40] sm:$0xff]
        %v900 = vld [vmem:[#allocation15 + $0x48] sm:$0xff]
        %v901 = vld [vmem:[#allocation15 + $0x50] sm:$0xff]
        %v902 = vld [vmem:[#allocation15 + $0x58] sm:$0xff]
        %v903 = vld [vmem:[#allocation15 + $0x60] sm:$0xff]
        %v904 = vld [vmem:[#allocation15 + $0x68] sm:$0xff]
        %v905 = vld [vmem:[#allocation15 + $0x70] sm:$0xff]
        %v906 = vld [vmem:[#allocation15 + $0x78] sm:$0x7]
        %s907 = scalar_lea.vmem [#allocation15], 128
        %v908 = vld [vmem:[%s907] sm:$0xff]
        %v909 = vld [vmem:[%s907 + $0x8] sm:$0xff]
        %v910 = vld [vmem:[%s907 + $0x10] sm:$0xff]
        %v911 = vld [vmem:[%s907 + $0x18] sm:$0xff]
        %v912 = vld [vmem:[%s907 + $0x20] sm:$0xff]
        %v913 = vld [vmem:[%s907 + $0x28] sm:$0xff]
        %v914 = vld [vmem:[%s907 + $0x30] sm:$0xff]
        %v915 = vld [vmem:[%s907 + $0x38] sm:$0xff]
        %v916 = vld [vmem:[%s907 + $0x40] sm:$0xff]
        %v917 = vld [vmem:[%s907 + $0x48] sm:$0xff]
        %v918 = vld [vmem:[%s907 + $0x50] sm:$0xff]
        %v919 = vld [vmem:[%s907 + $0x58] sm:$0xff]
        %v920 = vld [vmem:[%s907 + $0x60] sm:$0xff]
        %v921 = vld [vmem:[%s907 + $0x68] sm:$0xff]
        %v922 = vld [vmem:[%s907 + $0x70] sm:$0xff]
        %v923 = vld [vmem:[%s907 + $0x78] sm:$0x7]
        %vm924 = vcmask 1006592
        %v926 = vsel %vm924, %v879, 0
        %v929 = vsel %vm924, %v880, 0
        %v932 = vsel %vm924, %v881, 0
        %v935 = vsel %vm924, %v882, 0
        %vm937 = vcmask 1042432
        %v939 = vsel %vm937, %v923, 0
        %941 = vmatprep.subr.mxu0 0.0
        %942 = vmatpush1.msra.mxu0 %v939
        %943 = vmatprep.subr.mxu0 0.0
        %944 = vmatpush1.msra.mxu0 %v922
        %945 = vmatprep.subr.mxu0 0.0
        %946 = vmatpush1.msra.mxu0 %v921
        %947 = vmatprep.subr.mxu0 0.0
        %948 = vmatpush1.msra.mxu0 %v920
        %949 = vmatprep.subr.mxu0 0.0
        %950 = vmatpush1.msra.mxu0 %v919
        %951 = vmatprep.subr.mxu0 0.0
        %952 = vmatpush1.msra.mxu0 %v918
        %953 = vmatprep.subr.mxu0 0.0
        %954 = vmatpush1.msra.mxu0 %v917
        %955 = vmatprep.subr.mxu0 0.0
        %956 = vmatpush1.msra.mxu0 %v916
        %957 = vmatprep.subr.mxu0 0.0
        %958 = vmatpush1.msra.mxu0 %v915
        %959 = vmatprep.subr.mxu0 0.0
        %960 = vmatpush1.msra.mxu0 %v914
        %961 = vmatprep.subr.mxu0 0.0
        %962 = vmatpush1.msra.mxu0 %v913
        %963 = vmatprep.subr.mxu0 0.0
        %964 = vmatpush1.msra.mxu0 %v912
        %965 = vmatprep.subr.mxu0 0.0
        %966 = vmatpush1.msra.mxu0 %v911
        %967 = vmatprep.subr.mxu0 0.0
        %968 = vmatpush1.msra.mxu0 %v910
        %969 = vmatprep.subr.mxu0 0.0
        %970 = vmatpush1.msra.mxu0 %v909
        %971 = vmatprep.subr.mxu0 0.0
        %972 = vmatpush1.msra.mxu0 %v908
        %973 = vmatprep.subr.mxu0 0.0
        %974 = vmatpush2.msra.mxu0 0.0
        %975 = vmatprep.subr.mxu0 0.0
        %976 = vmatpush2.msra.mxu0 0.0
        %977 = vmatprep.subr.mxu0 0.0
        %978 = vmatpush2.msra.mxu0 0.0
        %979 = vmatprep.subr.mxu0 0.0
        %980 = vmatpush2.msra.mxu0 0.0
        %981 = vmatprep.subr.mxu0 0.0
        %982 = vmatpush2.msra.mxu0 0.0
        %983 = vmatprep.subr.mxu0 0.0
        %984 = vmatpush2.msra.mxu0 0.0
        %985 = vmatprep.subr.mxu0 0.0
        %986 = vmatpush2.msra.mxu0 0.0
        %987 = vmatprep.subr.mxu0 0.0
        %988 = vmatpush2.msra.mxu0 0.0
        %989 = vmatprep.subr.mxu0 0.0
        %990 = vmatpush2.msra.mxu0 0.0
        %991 = vmatprep.subr.mxu0 0.0
        %992 = vmatpush2.msra.mxu0 0.0
        %993 = vmatprep.subr.mxu0 0.0
        %994 = vmatpush2.msra.mxu0 0.0
        %995 = vmatprep.subr.mxu0 0.0
        %996 = vmatpush2.msra.mxu0 0.0
        %997 = vmatprep.subr.mxu0 0.0
        %998 = vmatpush2.msra.mxu0 0.0
        %999 = vmatprep.subr.mxu0 0.0
        %1000 = vmatpush2.msra.mxu0 0.0
        %1001 = vmatprep.subr.mxu0 0.0
        %1002 = vmatpush2.msra.mxu0 0.0
        %1003 = vmatprep.subr.mxu0 0.0
        %1004 = vmatpush2.msra.mxu0 0.0
        %1005 = vmatprep.mubr.f32.mxu0 0.0
        %1006 = vmatmul.mubr.f32.gmra.mxu0 %v926
        %v1007 = vpop.f32.mrf.mxu0
        %v1008 = vadd.f32 0.0, %v1007
        %v1009 = vpop.f32.mrf.mxu0
        %1010 = vmatprep.mubr.f32.mxu0 0.0
        %1011 = vmatmul.mubr.f32.gmra.mxu0 %v929
        %v1012 = vpop.f32.mrf.mxu0
        %v1013 = vadd.f32 0.0, %v1012
        %v1014 = vpop.f32.mrf.mxu0
        %1015 = vmatprep.mubr.f32.mxu0 0.0
        %1016 = vmatmul.mubr.f32.gmra.mxu0 %v932
        %v1017 = vpop.f32.mrf.mxu0
        %v1018 = vadd.f32 0.0, %v1017
        %v1019 = vpop.f32.mrf.mxu0
        %1020 = vmatprep.mubr.f32.mxu0 0.0
        %1021 = vmatmul.mubr.f32.gmra.mxu0 %v935
        %v1022 = vpop.f32.mrf.mxu0
        %v1023 = vadd.f32 0.0, %v1022
        %v1024 = vpop.f32.mrf.mxu0
        %1025 = vdwg.mxu0
        %v1027 = vsel %vm924, %v875, 0
        %v1030 = vsel %vm924, %v876, 0
        %v1033 = vsel %vm924, %v877, 0
        %v1036 = vsel %vm924, %v878, 0
        %v1039 = vsel %vm937, %v906, 0
        %1041 = vmatprep.subr.mxu0 0.0
        %1042 = vmatpush1.msra.mxu0 %v1039
        %1043 = vmatprep.subr.mxu0 0.0
        %1044 = vmatpush1.msra.mxu0 %v905
        %1045 = vmatprep.subr.mxu0 0.0
        %1046 = vmatpush1.msra.mxu0 %v904
        %1047 = vmatprep.subr.mxu0 0.0
        %1048 = vmatpush1.msra.mxu0 %v903
        %1049 = vmatprep.subr.mxu0 0.0
        %1050 = vmatpush1.msra.mxu0 %v902
        %1051 = vmatprep.subr.mxu0 0.0
        %1052 = vmatpush1.msra.mxu0 %v901
        %1053 = vmatprep.subr.mxu0 0.0
        %1054 = vmatpush1.msra.mxu0 %v900
        %1055 = vmatprep.subr.mxu0 0.0
        %1056 = vmatpush1.msra.mxu0 %v899
        %1057 = vmatprep.subr.mxu0 0.0
        %1058 = vmatpush1.msra.mxu0 %v898
        %1059 = vmatprep.subr.mxu0 0.0
        %1060 = vmatpush1.msra.mxu0 %v897
        %1061 = vmatprep.subr.mxu0 0.0
        %1062 = vmatpush1.msra.mxu0 %v896
        %1063 = vmatprep.subr.mxu0 0.0
        %1064 = vmatpush1.msra.mxu0 %v895
        %1065 = vmatprep.subr.mxu0 0.0
        %1066 = vmatpush1.msra.mxu0 %v894
        %1067 = vmatprep.subr.mxu0 0.0
        %1068 = vmatpush1.msra.mxu0 %v893
        %1069 = vmatprep.subr.mxu0 0.0
        %1070 = vmatpush1.msra.mxu0 %v892
        %1071 = vmatprep.subr.mxu0 0.0
        %1072 = vmatpush1.msra.mxu0 %v891
        %1073 = vmatprep.subr.mxu0 0.0
        %1074 = vmatpush2.msra.mxu0 0.0
        %1075 = vmatprep.subr.mxu0 0.0
        %1076 = vmatpush2.msra.mxu0 0.0
        %1077 = vmatprep.subr.mxu0 0.0
        %1078 = vmatpush2.msra.mxu0 0.0
        %1079 = vmatprep.subr.mxu0 0.0
        %1080 = vmatpush2.msra.mxu0 0.0
        %1081 = vmatprep.subr.mxu0 0.0
        %1082 = vmatpush2.msra.mxu0 0.0
        %1083 = vmatprep.subr.mxu0 0.0
        %1084 = vmatpush2.msra.mxu0 0.0
        %1085 = vmatprep.subr.mxu0 0.0
        %1086 = vmatpush2.msra.mxu0 0.0
        %1087 = vmatprep.subr.mxu0 0.0
        %1088 = vmatpush2.msra.mxu0 0.0
        %1089 = vmatprep.subr.mxu0 0.0
        %1090 = vmatpush2.msra.mxu0 0.0
        %1091 = vmatprep.subr.mxu0 0.0
        %1092 = vmatpush2.msra.mxu0 0.0
        %1093 = vmatprep.subr.mxu0 0.0
        %1094 = vmatpush2.msra.mxu0 0.0
        %1095 = vmatprep.subr.mxu0 0.0
        %1096 = vmatpush2.msra.mxu0 0.0
        %1097 = vmatprep.subr.mxu0 0.0
        %1098 = vmatpush2.msra.mxu0 0.0
        %1099 = vmatprep.subr.mxu0 0.0
        %1100 = vmatpush2.msra.mxu0 0.0
        %1101 = vmatprep.subr.mxu0 0.0
        %1102 = vmatpush2.msra.mxu0 0.0
        %1103 = vmatprep.subr.mxu0 0.0
        %1104 = vmatpush2.msra.mxu0 0.0
        %1105 = vmatprep.mubr.f32.mxu0 0.0
        %1106 = vmatmul.mubr.f32.gmra.mxu0 %v1027
        %v1107 = vpop.f32.mrf.mxu0
        %v1108 = vadd.f32 %v1008, %v1107
        %v1109 = vpop.f32.mrf.mxu0
        %1110 = vmatprep.mubr.f32.mxu0 0.0
        %1111 = vmatmul.mubr.f32.gmra.mxu0 %v1030
        %v1112 = vpop.f32.mrf.mxu0
        %v1113 = vadd.f32 %v1013, %v1112
        %v1114 = vpop.f32.mrf.mxu0
        %1115 = vmatprep.mubr.f32.mxu0 0.0
        %1116 = vmatmul.mubr.f32.gmra.mxu0 %v1033
        %v1117 = vpop.f32.mrf.mxu0
        %v1118 = vadd.f32 %v1018, %v1117
        %v1119 = vpop.f32.mrf.mxu0
        %1120 = vmatprep.mubr.f32.mxu0 0.0
        %1121 = vmatmul.mubr.f32.gmra.mxu0 %v1036
        %v1122 = vpop.f32.mrf.mxu0
        %v1123 = vadd.f32 %v1023, %v1122
        %v1124 = vpop.f32.mrf.mxu0
        %1125 = vdwg.mxu0
        %s1126 = scalar_lea.vmem [#allocation15], 256
        %v1127 = vld [vmem:[%s1126] sm:$0xff]
        %v1128 = vld [vmem:[%s1126 + $0x8] sm:$0xff]
        %v1129 = vld [vmem:[%s1126 + $0x10] sm:$0xff]
        %v1130 = vld [vmem:[%s1126 + $0x18] sm:$0xff]
        %v1131 = vld [vmem:[%s1126 + $0x20] sm:$0xff]
        %v1132 = vld [vmem:[%s1126 + $0x28] sm:$0xff]
        %v1133 = vld [vmem:[%s1126 + $0x30] sm:$0xff]
        %v1134 = vld [vmem:[%s1126 + $0x38] sm:$0xff]
        %v1135 = vld [vmem:[%s1126 + $0x40] sm:$0xff]
        %v1136 = vld [vmem:[%s1126 + $0x48] sm:$0xff]
        %v1137 = vld [vmem:[%s1126 + $0x50] sm:$0xff]
        %v1138 = vld [vmem:[%s1126 + $0x58] sm:$0xff]
        %v1139 = vld [vmem:[%s1126 + $0x60] sm:$0xff]
        %v1140 = vld [vmem:[%s1126 + $0x68] sm:$0xff]
        %v1141 = vld [vmem:[%s1126 + $0x70] sm:$0xff]
        %v1142 = vld [vmem:[%s1126 + $0x78] sm:$0x7]
        %v1144 = vsel %vm924, %v883, 0
        %v1147 = vsel %vm924, %v884, 0
        %v1150 = vsel %vm924, %v885, 0
        %v1153 = vsel %vm924, %v886, 0
        %v1156 = vsel %vm937, %v1142, 0
        %1158 = vmatprep.subr.mxu0 0.0
        %1159 = vmatpush1.msra.mxu0 %v1156
        %1160 = vmatprep.subr.mxu0 0.0
        %1161 = vmatpush1.msra.mxu0 %v1141
        %1162 = vmatprep.subr.mxu0 0.0
        %1163 = vmatpush1.msra.mxu0 %v1140
        %1164 = vmatprep.subr.mxu0 0.0
        %1165 = vmatpush1.msra.mxu0 %v1139
        %1166 = vmatprep.subr.mxu0 0.0
        %1167 = vmatpush1.msra.mxu0 %v1138
        %1168 = vmatprep.subr.mxu0 0.0
        %1169 = vmatpush1.msra.mxu0 %v1137
        %1170 = vmatprep.subr.mxu0 0.0
        %1171 = vmatpush1.msra.mxu0 %v1136
        %1172 = vmatprep.subr.mxu0 0.0
        %1173 = vmatpush1.msra.mxu0 %v1135
        %1174 = vmatprep.subr.mxu0 0.0
        %1175 = vmatpush1.msra.mxu0 %v1134
        %1176 = vmatprep.subr.mxu0 0.0
        %1177 = vmatpush1.msra.mxu0 %v1133
        %1178 = vmatprep.subr.mxu0 0.0
        %1179 = vmatpush1.msra.mxu0 %v1132
        %1180 = vmatprep.subr.mxu0 0.0
        %1181 = vmatpush1.msra.mxu0 %v1131
        %1182 = vmatprep.subr.mxu0 0.0
        %1183 = vmatpush1.msra.mxu0 %v1130
        %1184 = vmatprep.subr.mxu0 0.0
        %1185 = vmatpush1.msra.mxu0 %v1129
        %1186 = vmatprep.subr.mxu0 0.0
        %1187 = vmatpush1.msra.mxu0 %v1128
        %1188 = vmatprep.subr.mxu0 0.0
        %1189 = vmatpush1.msra.mxu0 %v1127
        %1190 = vmatprep.subr.mxu0 0.0
        %1191 = vmatpush2.msra.mxu0 0.0
        %1192 = vmatprep.subr.mxu0 0.0
        %1193 = vmatpush2.msra.mxu0 0.0
        %1194 = vmatprep.subr.mxu0 0.0
        %1195 = vmatpush2.msra.mxu0 0.0
        %1196 = vmatprep.subr.mxu0 0.0
        %1197 = vmatpush2.msra.mxu0 0.0
        %1198 = vmatprep.subr.mxu0 0.0
        %1199 = vmatpush2.msra.mxu0 0.0
        %1200 = vmatprep.subr.mxu0 0.0
        %1201 = vmatpush2.msra.mxu0 0.0
        %1202 = vmatprep.subr.mxu0 0.0
        %1203 = vmatpush2.msra.mxu0 0.0
        %1204 = vmatprep.subr.mxu0 0.0
        %1205 = vmatpush2.msra.mxu0 0.0
        %1206 = vmatprep.subr.mxu0 0.0
        %1207 = vmatpush2.msra.mxu0 0.0
        %1208 = vmatprep.subr.mxu0 0.0
        %1209 = vmatpush2.msra.mxu0 0.0
        %1210 = vmatprep.subr.mxu0 0.0
        %1211 = vmatpush2.msra.mxu0 0.0
        %1212 = vmatprep.subr.mxu0 0.0
        %1213 = vmatpush2.msra.mxu0 0.0
        %1214 = vmatprep.subr.mxu0 0.0
        %1215 = vmatpush2.msra.mxu0 0.0
        %1216 = vmatprep.subr.mxu0 0.0
        %1217 = vmatpush2.msra.mxu0 0.0
        %1218 = vmatprep.subr.mxu0 0.0
        %1219 = vmatpush2.msra.mxu0 0.0
        %1220 = vmatprep.subr.mxu0 0.0
        %1221 = vmatpush2.msra.mxu0 0.0
        %1222 = vmatprep.mubr.f32.mxu0 0.0
        %1223 = vmatmul.mubr.f32.gmra.mxu0 %v1144
        %v1224 = vpop.f32.mrf.mxu0
        %v1225 = vadd.f32 0.0, %v1224
        %v1226 = vpop.f32.mrf.mxu0
        %1227 = vmatprep.mubr.f32.mxu0 0.0
        %1228 = vmatmul.mubr.f32.gmra.mxu0 %v1147
        %v1229 = vpop.f32.mrf.mxu0
        %v1230 = vadd.f32 0.0, %v1229
        %v1231 = vpop.f32.mrf.mxu0
        %1232 = vmatprep.mubr.f32.mxu0 0.0
        %1233 = vmatmul.mubr.f32.gmra.mxu0 %v1150
        %v1234 = vpop.f32.mrf.mxu0
        %v1235 = vadd.f32 0.0, %v1234
        %v1236 = vpop.f32.mrf.mxu0
        %1237 = vmatprep.mubr.f32.mxu0 0.0
        %1238 = vmatmul.mubr.f32.gmra.mxu0 %v1153
        %v1239 = vpop.f32.mrf.mxu0
        %v1240 = vadd.f32 0.0, %v1239
        %v1241 = vpop.f32.mrf.mxu0
        %1242 = vdwg.mxu0
        %v1243 = vadd.f32 %v1108, %v1225
        %v1244 = vadd.f32 %v1113, %v1230
        %v1245 = vadd.f32 %v1118, %v1235
        %v1246 = vadd.f32 %v1123, %v1240
        %s1247 = scalar_lea.vmem [#allocation15], 384
        %v1248 = vld [vmem:[%s1247] sm:$0xff]
        %v1249 = vld [vmem:[%s1247 + $0x8] sm:$0xff]
        %v1250 = vld [vmem:[%s1247 + $0x10] sm:$0xff]
        %v1251 = vld [vmem:[%s1247 + $0x18] sm:$0xff]
        %v1252 = vld [vmem:[%s1247 + $0x20] sm:$0xff]
        %v1253 = vld [vmem:[%s1247 + $0x28] sm:$0xff]
        %v1254 = vld [vmem:[%s1247 + $0x30] sm:$0xff]
        %v1255 = vld [vmem:[%s1247 + $0x38] sm:$0xff]
        %v1256 = vld [vmem:[%s1247 + $0x40] sm:$0xff]
        %v1257 = vld [vmem:[%s1247 + $0x48] sm:$0xff]
        %v1258 = vld [vmem:[%s1247 + $0x50] sm:$0xff]
        %v1259 = vld [vmem:[%s1247 + $0x58] sm:$0xff]
        %v1260 = vld [vmem:[%s1247 + $0x60] sm:$0xff]
        %v1261 = vld [vmem:[%s1247 + $0x68] sm:$0xff]
        %v1262 = vld [vmem:[%s1247 + $0x70] sm:$0xff]
        %v1263 = vld [vmem:[%s1247 + $0x78] sm:$0x7]
        %v1265 = vsel %vm924, %v887, 0
        %v1268 = vsel %vm924, %v888, 0
        %v1271 = vsel %vm924, %v889, 0
        %v1274 = vsel %vm924, %v890, 0
        %v1277 = vsel %vm937, %v1263, 0
        %1279 = vmatprep.subr.mxu0 0.0
        %1280 = vmatpush1.msra.mxu0 %v1277
        %1281 = vmatprep.subr.mxu0 0.0
        %1282 = vmatpush1.msra.mxu0 %v1262
        %1283 = vmatprep.subr.mxu0 0.0
        %1284 = vmatpush1.msra.mxu0 %v1261
        %1285 = vmatprep.subr.mxu0 0.0
        %1286 = vmatpush1.msra.mxu0 %v1260
        %1287 = vmatprep.subr.mxu0 0.0
        %1288 = vmatpush1.msra.mxu0 %v1259
        %1289 = vmatprep.subr.mxu0 0.0
        %1290 = vmatpush1.msra.mxu0 %v1258
        %1291 = vmatprep.subr.mxu0 0.0
        %1292 = vmatpush1.msra.mxu0 %v1257
        %1293 = vmatprep.subr.mxu0 0.0
        %1294 = vmatpush1.msra.mxu0 %v1256
        %1295 = vmatprep.subr.mxu0 0.0
        %1296 = vmatpush1.msra.mxu0 %v1255
        %1297 = vmatprep.subr.mxu0 0.0
        %1298 = vmatpush1.msra.mxu0 %v1254
        %1299 = vmatprep.subr.mxu0 0.0
        %1300 = vmatpush1.msra.mxu0 %v1253
        %1301 = vmatprep.subr.mxu0 0.0
        %1302 = vmatpush1.msra.mxu0 %v1252
        %1303 = vmatprep.subr.mxu0 0.0
        %1304 = vmatpush1.msra.mxu0 %v1251
        %1305 = vmatprep.subr.mxu0 0.0
        %1306 = vmatpush1.msra.mxu0 %v1250
        %1307 = vmatprep.subr.mxu0 0.0
        %1308 = vmatpush1.msra.mxu0 %v1249
        %1309 = vmatprep.subr.mxu0 0.0
        %1310 = vmatpush1.msra.mxu0 %v1248
        %1311 = vmatprep.subr.mxu0 0.0
        %1312 = vmatpush2.msra.mxu0 0.0
        %1313 = vmatprep.subr.mxu0 0.0
        %1314 = vmatpush2.msra.mxu0 0.0
        %1315 = vmatprep.subr.mxu0 0.0
        %1316 = vmatpush2.msra.mxu0 0.0
        %1317 = vmatprep.subr.mxu0 0.0
        %1318 = vmatpush2.msra.mxu0 0.0
        %1319 = vmatprep.subr.mxu0 0.0
        %1320 = vmatpush2.msra.mxu0 0.0
        %1321 = vmatprep.subr.mxu0 0.0
        %1322 = vmatpush2.msra.mxu0 0.0
        %1323 = vmatprep.subr.mxu0 0.0
        %1324 = vmatpush2.msra.mxu0 0.0
        %1325 = vmatprep.subr.mxu0 0.0
        %1326 = vmatpush2.msra.mxu0 0.0
        %1327 = vmatprep.subr.mxu0 0.0
        %1328 = vmatpush2.msra.mxu0 0.0
        %1329 = vmatprep.subr.mxu0 0.0
        %1330 = vmatpush2.msra.mxu0 0.0
        %1331 = vmatprep.subr.mxu0 0.0
        %1332 = vmatpush2.msra.mxu0 0.0
        %1333 = vmatprep.subr.mxu0 0.0
        %1334 = vmatpush2.msra.mxu0 0.0
        %1335 = vmatprep.subr.mxu0 0.0
        %1336 = vmatpush2.msra.mxu0 0.0
        %1337 = vmatprep.subr.mxu0 0.0
        %1338 = vmatpush2.msra.mxu0 0.0
        %1339 = vmatprep.subr.mxu0 0.0
        %1340 = vmatpush2.msra.mxu0 0.0
        %1341 = vmatprep.subr.mxu0 0.0
        %1342 = vmatpush2.msra.mxu0 0.0
        %1343 = vmatprep.mubr.f32.mxu0 0.0
        %1344 = vmatmul.mubr.f32.gmra.mxu0 %v1265
        %v1345 = vpop.f32.mrf.mxu0
        %v1346 = vadd.f32 0.0, %v1345
        %v1347 = vpop.f32.mrf.mxu0
        %1348 = vmatprep.mubr.f32.mxu0 0.0
        %1349 = vmatmul.mubr.f32.gmra.mxu0 %v1268
        %v1350 = vpop.f32.mrf.mxu0
        %v1351 = vadd.f32 0.0, %v1350
        %v1352 = vpop.f32.mrf.mxu0
        %1353 = vmatprep.mubr.f32.mxu0 0.0
        %1354 = vmatmul.mubr.f32.gmra.mxu0 %v1271
        %v1355 = vpop.f32.mrf.mxu0
        %v1356 = vadd.f32 0.0, %v1355
        %v1357 = vpop.f32.mrf.mxu0
        %1358 = vmatprep.mubr.f32.mxu0 0.0
        %1359 = vmatmul.mubr.f32.gmra.mxu0 %v1274
        %v1360 = vpop.f32.mrf.mxu0
        %v1361 = vadd.f32 0.0, %v1360
        %v1362 = vpop.f32.mrf.mxu0
        %1363 = vdwg.mxu0
        %v1364 = vadd.f32 %v1243, %v1346
        %v1365 = vadd.f32 %v1244, %v1351
        %v1366 = vadd.f32 %v1245, %v1356
        %v1367 = vadd.f32 %v1246, %v1361
        %1372 = vrot.lane.b32.xlu0 %v1364, 127
        %v1373 = vpop.permute.xlu0 %1372
        %1374 = vrot.lane.b32.xlu0 %v1365, 127
        %v1375 = vpop.permute.xlu0 %1374
        %1376 = vrot.lane.b32.xlu0 %v1366, 127
        %v1377 = vpop.permute.xlu0 %1376
        %1378 = vrot.lane.b32.xlu0 %v1367, 127
        %v1379 = vpop.permute.xlu0 %1378
        %1384 = vrot.lane.b32.xlu0 %v1364, 122
        %v1385 = vpop.permute.xlu0 %1384
        %1386 = vrot.lane.b32.xlu0 %v1365, 122
        %v1387 = vpop.permute.xlu0 %1386
        %1388 = vrot.lane.b32.xlu0 %v1366, 122
        %v1389 = vpop.permute.xlu0 %1388
        %1390 = vrot.lane.b32.xlu0 %v1367, 122
        %v1391 = vpop.permute.xlu0 %1390
        %1396 = vrot.lane.b32.xlu0 %v1364, 121
        %v1397 = vpop.permute.xlu0 %1396
        %1398 = vrot.lane.b32.xlu0 %v1365, 121
        %v1399 = vpop.permute.xlu0 %1398
        %1400 = vrot.lane.b32.xlu0 %v1366, 121
        %v1401 = vpop.permute.xlu0 %1400
        %1402 = vrot.lane.b32.xlu0 %v1367, 121
        %v1403 = vpop.permute.xlu0 %1402
        %v1408 = vld [vmem:[#allocation6] sm:$0xff]
        %v1409 = vld [vmem:[#allocation6 + $0x8] sm:$0xff]
        %v1410 = vld [vmem:[#allocation6 + $0x10] sm:$0xff]
        %v1411 = vld [vmem:[#allocation6 + $0x18] sm:$0xff]
        %v1412 = vld [vmem:[#allocation6 + $0x20] sm:$0xff]
        %v1413 = vld [vmem:[#allocation6 + $0x28] sm:$0xff]
        %v1414 = vld [vmem:[#allocation6 + $0x30] sm:$0xff]
        %v1415 = vld [vmem:[#allocation6 + $0x38] sm:$0xff]
        %v1416 = vld [vmem:[#allocation7] sm:$0xff]
        %v1417 = vld [vmem:[#allocation7 + $0x8] sm:$0xff]
        %v1418 = vld [vmem:[#allocation7 + $0x10] sm:$0xff]
        %v1419 = vld [vmem:[#allocation7 + $0x18] sm:$0xff]
        %v1420 = vld [vmem:[#allocation7 + $0x20] sm:$0xff]
        %v1421 = vld [vmem:[#allocation7 + $0x28] sm:$0xff]
        %v1422 = vld [vmem:[#allocation7 + $0x30] sm:$0xff]
        %v1423 = vld [vmem:[#allocation7 + $0x38] sm:$0xff]
        %1425 = vset.pattern.permute.xlu0 0
        %1426 = vperm.xlu0 %1425, %v1416
        %v1427 = vpop.permute.xlu0 %1426
        %1430 = vset.pattern.permute.xlu0 0
        %1431 = vperm.xlu0 %1430, %v1417
        %v1432 = vpop.permute.xlu0 %1431
        %1435 = vset.pattern.permute.xlu0 0
        %1436 = vperm.xlu0 %1435, %v1418
        %v1437 = vpop.permute.xlu0 %1436
        %1440 = vset.pattern.permute.xlu0 0
        %1441 = vperm.xlu0 %1440, %v1419
        %v1442 = vpop.permute.xlu0 %1441
        %1445 = vset.pattern.permute.xlu0 0
        %1446 = vperm.xlu0 %1445, %v1420
        %v1447 = vpop.permute.xlu0 %1446
        %1450 = vset.pattern.permute.xlu0 0
        %1451 = vperm.xlu0 %1450, %v1421
        %v1452 = vpop.permute.xlu0 %1451
        %1455 = vset.pattern.permute.xlu0 0
        %1456 = vperm.xlu0 %1455, %v1422
        %v1457 = vpop.permute.xlu0 %1456
        %1460 = vset.pattern.permute.xlu0 0
        %1461 = vperm.xlu0 %1460, %v1423
        %v1462 = vpop.permute.xlu0 %1461
        %1464 = vmatprep.subr.mxu0 0.0
        %1465 = vmatpush1.msra.mxu0 %v1403
        %1466 = vmatprep.subr.mxu0 0.0
        %1467 = vmatpush1.msra.mxu0 %v1401
        %1468 = vmatprep.subr.mxu0 0.0
        %1469 = vmatpush1.msra.mxu0 %v1399
        %1470 = vmatprep.subr.mxu0 0.0
        %1471 = vmatpush1.msra.mxu0 %v1397
        %1472 = vmatprep.subr.mxu0 0.0
        %1473 = vmatpush1.msra.mxu0 %v1391
        %1474 = vmatprep.subr.mxu0 0.0
        %1475 = vmatpush1.msra.mxu0 %v1389
        %1476 = vmatprep.subr.mxu0 0.0
        %1477 = vmatpush1.msra.mxu0 %v1387
        %1478 = vmatprep.subr.mxu0 0.0
        %1479 = vmatpush1.msra.mxu0 %v1385
        %1480 = vmatprep.subr.mxu0 0.0
        %1481 = vmatpush1.msra.mxu0 %v1379
        %1482 = vmatprep.subr.mxu0 0.0
        %1483 = vmatpush1.msra.mxu0 %v1377
        %1484 = vmatprep.subr.mxu0 0.0
        %1485 = vmatpush1.msra.mxu0 %v1375
        %1486 = vmatprep.subr.mxu0 0.0
        %1487 = vmatpush1.msra.mxu0 %v1373
        %1488 = vmatprep.subr.mxu0 0.0
        %1489 = vmatpush1.msra.mxu0 %v1367
        %1490 = vmatprep.subr.mxu0 0.0
        %1491 = vmatpush1.msra.mxu0 %v1366
        %1492 = vmatprep.subr.mxu0 0.0
        %1493 = vmatpush1.msra.mxu0 %v1365
        %1494 = vmatprep.subr.mxu0 0.0
        %1495 = vmatpush1.msra.mxu0 %v1364
        %1496 = vmatprep.subr.mxu0 0.0
        %1497 = vmatpush2.msra.mxu0 0.0
        %1498 = vmatprep.subr.mxu0 0.0
        %1499 = vmatpush2.msra.mxu0 0.0
        %1500 = vmatprep.subr.mxu0 0.0
        %1501 = vmatpush2.msra.mxu0 0.0
        %1502 = vmatprep.subr.mxu0 0.0
        %1503 = vmatpush2.msra.mxu0 0.0
        %1504 = vmatprep.subr.mxu0 0.0
        %1505 = vmatpush2.msra.mxu0 0.0
        %1506 = vmatprep.subr.mxu0 0.0
        %1507 = vmatpush2.msra.mxu0 0.0
        %1508 = vmatprep.subr.mxu0 0.0
        %1509 = vmatpush2.msra.mxu0 0.0
        %1510 = vmatprep.subr.mxu0 0.0
        %1511 = vmatpush2.msra.mxu0 0.0
        %1512 = vmatprep.subr.mxu0 0.0
        %1513 = vmatpush2.msra.mxu0 0.0
        %1514 = vmatprep.subr.mxu0 0.0
        %1515 = vmatpush2.msra.mxu0 0.0
        %1516 = vmatprep.subr.mxu0 0.0
        %1517 = vmatpush2.msra.mxu0 0.0
        %1518 = vmatprep.subr.mxu0 0.0
        %1519 = vmatpush2.msra.mxu0 0.0
        %1520 = vmatprep.subr.mxu0 0.0
        %1521 = vmatpush2.msra.mxu0 0.0
        %1522 = vmatprep.subr.mxu0 0.0
        %1523 = vmatpush2.msra.mxu0 0.0
        %1524 = vmatprep.subr.mxu0 0.0
        %1525 = vmatpush2.msra.mxu0 0.0
        %1526 = vmatprep.subr.mxu0 0.0
        %1527 = vmatpush2.msra.mxu0 0.0
        %1528 = vmatprep.mubr.f32.mxu0 0.0
        %1529 = vmatmul.mubr.f32.gmra.mxu0 %v1408
        %v1530 = vpop.f32.mrf.mxu0
        %v1531 = vadd.f32 %v1427, %v1530
        %v1532 = vpop.f32.mrf.mxu0
        %1533 = vmatprep.mubr.f32.mxu0 0.0
        %1534 = vmatmul.mubr.f32.gmra.mxu0 %v1409
        %v1535 = vpop.f32.mrf.mxu0
        %v1536 = vadd.f32 %v1432, %v1535
        %v1537 = vpop.f32.mrf.mxu0
        %1538 = vmatprep.mubr.f32.mxu0 0.0
        %1539 = vmatmul.mubr.f32.gmra.mxu0 %v1410
        %v1540 = vpop.f32.mrf.mxu0
        %v1541 = vadd.f32 %v1437, %v1540
        %v1542 = vpop.f32.mrf.mxu0
        %1543 = vmatprep.mubr.f32.mxu0 0.0
        %1544 = vmatmul.mubr.f32.gmra.mxu0 %v1411
        %v1545 = vpop.f32.mrf.mxu0
        %v1546 = vadd.f32 %v1442, %v1545
        %v1547 = vpop.f32.mrf.mxu0
        %1548 = vmatprep.mubr.f32.mxu0 0.0
        %1549 = vmatmul.mubr.f32.gmra.mxu0 %v1412
        %v1550 = vpop.f32.mrf.mxu0
        %v1551 = vadd.f32 %v1447, %v1550
        %v1552 = vpop.f32.mrf.mxu0
        %1553 = vmatprep.mubr.f32.mxu0 0.0
        %1554 = vmatmul.mubr.f32.gmra.mxu0 %v1413
        %v1555 = vpop.f32.mrf.mxu0
        %v1556 = vadd.f32 %v1452, %v1555
        %v1557 = vpop.f32.mrf.mxu0
        %1558 = vmatprep.mubr.f32.mxu0 0.0
        %1559 = vmatmul.mubr.f32.gmra.mxu0 %v1414
        %v1560 = vpop.f32.mrf.mxu0
        %v1561 = vadd.f32 %v1457, %v1560
        %v1562 = vpop.f32.mrf.mxu0
        %1563 = vmatprep.mubr.f32.mxu0 0.0
        %1564 = vmatmul.mubr.f32.gmra.mxu0 %v1415
        %v1565 = vpop.f32.mrf.mxu0
        %v1566 = vadd.f32 %v1462, %v1565
        %v1567 = vpop.f32.mrf.mxu0
        %1568 = vdwg.mxu0
        %v1569 = vmax.f32 %v1531, 0.0
        %v1570 = vmax.f32 %v1536, 0.0
        %v1571 = vmax.f32 %v1541, 0.0
        %v1572 = vmax.f32 %v1546, 0.0
        %v1573 = vmax.f32 %v1551, 0.0
        %v1574 = vmax.f32 %v1556, 0.0
        %v1575 = vmax.f32 %v1561, 0.0
        %v1576 = vmax.f32 %v1566, 0.0
        %v1577 = vld [vmem:[#allocation16] sm:$0xff]
        %v1578 = vld [vmem:[#allocation16 + $0x8] sm:$0xff]
        %v1579 = vld [vmem:[#allocation16 + $0x10] sm:$0xff]
        %v1580 = vld [vmem:[#allocation16 + $0x18] sm:$0xff]
        %v1581 = vld [vmem:[#allocation16 + $0x20] sm:$0xff]
        %v1582 = vld [vmem:[#allocation16 + $0x28] sm:$0xff]
        %v1583 = vld [vmem:[#allocation16 + $0x30] sm:$0xff]
        %v1584 = vld [vmem:[#allocation16 + $0x38] sm:$0xff]
        %v1585 = vld [vmem:[#allocation16 + $0x40] sm:$0xff]
        %v1586 = vld [vmem:[#allocation16 + $0x48] sm:$0xff]
        %v1587 = vld [vmem:[#allocation16 + $0x50] sm:$0xff]
        %v1588 = vld [vmem:[#allocation16 + $0x58] sm:$0xff]
        %v1589 = vld [vmem:[#allocation16 + $0x60] sm:$0xff]
        %v1590 = vld [vmem:[#allocation16 + $0x68] sm:$0xff]
        %v1591 = vld [vmem:[#allocation16 + $0x70] sm:$0xff]
        %v1592 = vld [vmem:[#allocation16 + $0x78] sm:$0x1]
        %s1593 = scalar_lea.vmem [#allocation16], 128
        %v1594 = vld [vmem:[%s1593] sm:$0xff]
        %v1595 = vld [vmem:[%s1593 + $0x8] sm:$0xff]
        %v1596 = vld [vmem:[%s1593 + $0x10] sm:$0xff]
        %v1597 = vld [vmem:[%s1593 + $0x18] sm:$0xff]
        %v1598 = vld [vmem:[%s1593 + $0x20] sm:$0xff]
        %v1599 = vld [vmem:[%s1593 + $0x28] sm:$0xff]
        %v1600 = vld [vmem:[%s1593 + $0x30] sm:$0xff]
        %v1601 = vld [vmem:[%s1593 + $0x38] sm:$0xff]
        %v1602 = vld [vmem:[%s1593 + $0x40] sm:$0xff]
        %v1603 = vld [vmem:[%s1593 + $0x48] sm:$0xff]
        %v1604 = vld [vmem:[%s1593 + $0x50] sm:$0xff]
        %v1605 = vld [vmem:[%s1593 + $0x58] sm:$0xff]
        %v1606 = vld [vmem:[%s1593 + $0x60] sm:$0xff]
        %v1607 = vld [vmem:[%s1593 + $0x68] sm:$0xff]
        %v1608 = vld [vmem:[%s1593 + $0x70] sm:$0xff]
        %v1609 = vld [vmem:[%s1593 + $0x78] sm:$0x1]
        %vm1610 = vcmask 990208
        %v1612 = vsel %vm1610, %v1571, 0
        %v1615 = vsel %vm1610, %v1572, 0
        %vm1617 = vcmask 1040384
        %v1619 = vsel %vm1617, %v1609, 0
        %1621 = vmatprep.subr.mxu0 0.0
        %1622 = vmatpush1.msra.mxu0 %v1619
        %1623 = vmatprep.subr.mxu0 0.0
        %1624 = vmatpush1.msra.mxu0 %v1608
        %1625 = vmatprep.subr.mxu0 0.0
        %1626 = vmatpush1.msra.mxu0 %v1607
        %1627 = vmatprep.subr.mxu0 0.0
        %1628 = vmatpush1.msra.mxu0 %v1606
        %1629 = vmatprep.subr.mxu0 0.0
        %1630 = vmatpush1.msra.mxu0 %v1605
        %1631 = vmatprep.subr.mxu0 0.0
        %1632 = vmatpush1.msra.mxu0 %v1604
        %1633 = vmatprep.subr.mxu0 0.0
        %1634 = vmatpush1.msra.mxu0 %v1603
        %1635 = vmatprep.subr.mxu0 0.0
        %1636 = vmatpush1.msra.mxu0 %v1602
        %1637 = vmatprep.subr.mxu0 0.0
        %1638 = vmatpush1.msra.mxu0 %v1601
        %1639 = vmatprep.subr.mxu0 0.0
        %1640 = vmatpush1.msra.mxu0 %v1600
        %1641 = vmatprep.subr.mxu0 0.0
        %1642 = vmatpush1.msra.mxu0 %v1599
        %1643 = vmatprep.subr.mxu0 0.0
        %1644 = vmatpush1.msra.mxu0 %v1598
        %1645 = vmatprep.subr.mxu0 0.0
        %1646 = vmatpush1.msra.mxu0 %v1597
        %1647 = vmatprep.subr.mxu0 0.0
        %1648 = vmatpush1.msra.mxu0 %v1596
        %1649 = vmatprep.subr.mxu0 0.0
        %1650 = vmatpush1.msra.mxu0 %v1595
        %1651 = vmatprep.subr.mxu0 0.0
        %1652 = vmatpush1.msra.mxu0 %v1594
        %1653 = vmatprep.subr.mxu0 0.0
        %1654 = vmatpush2.msra.mxu0 0.0
        %1655 = vmatprep.subr.mxu0 0.0
        %1656 = vmatpush2.msra.mxu0 0.0
        %1657 = vmatprep.subr.mxu0 0.0
        %1658 = vmatpush2.msra.mxu0 0.0
        %1659 = vmatprep.subr.mxu0 0.0
        %1660 = vmatpush2.msra.mxu0 0.0
        %1661 = vmatprep.subr.mxu0 0.0
        %1662 = vmatpush2.msra.mxu0 0.0
        %1663 = vmatprep.subr.mxu0 0.0
        %1664 = vmatpush2.msra.mxu0 0.0
        %1665 = vmatprep.subr.mxu0 0.0
        %1666 = vmatpush2.msra.mxu0 0.0
        %1667 = vmatprep.subr.mxu0 0.0
        %1668 = vmatpush2.msra.mxu0 0.0
        %1669 = vmatprep.subr.mxu0 0.0
        %1670 = vmatpush2.msra.mxu0 0.0
        %1671 = vmatprep.subr.mxu0 0.0
        %1672 = vmatpush2.msra.mxu0 0.0
        %1673 = vmatprep.subr.mxu0 0.0
        %1674 = vmatpush2.msra.mxu0 0.0
        %1675 = vmatprep.subr.mxu0 0.0
        %1676 = vmatpush2.msra.mxu0 0.0
        %1677 = vmatprep.subr.mxu0 0.0
        %1678 = vmatpush2.msra.mxu0 0.0
        %1679 = vmatprep.subr.mxu0 0.0
        %1680 = vmatpush2.msra.mxu0 0.0
        %1681 = vmatprep.subr.mxu0 0.0
        %1682 = vmatpush2.msra.mxu0 0.0
        %1683 = vmatprep.subr.mxu0 0.0
        %1684 = vmatpush2.msra.mxu0 0.0
        %1685 = vmatprep.mubr.f32.mxu0 0.0
        %1686 = vmatmul.mubr.f32.gmra.mxu0 %v1612
        %v1687 = vpop.f32.mrf.mxu0
        %v1688 = vadd.f32 0.0, %v1687
        %v1689 = vpop.f32.mrf.mxu0
        %1690 = vmatprep.mubr.f32.mxu0 0.0
        %1691 = vmatmul.mubr.f32.gmra.mxu0 %v1615
        %v1692 = vpop.f32.mrf.mxu0
        %v1693 = vadd.f32 0.0, %v1692
        %v1694 = vpop.f32.mrf.mxu0
        %1695 = vdwg.mxu0
        %v1697 = vsel %vm1610, %v1569, 0
        %v1700 = vsel %vm1610, %v1570, 0
        %v1703 = vsel %vm1617, %v1592, 0
        %1705 = vmatprep.subr.mxu0 0.0
        %1706 = vmatpush1.msra.mxu0 %v1703
        %1707 = vmatprep.subr.mxu0 0.0
        %1708 = vmatpush1.msra.mxu0 %v1591
        %1709 = vmatprep.subr.mxu0 0.0
        %1710 = vmatpush1.msra.mxu0 %v1590
        %1711 = vmatprep.subr.mxu0 0.0
        %1712 = vmatpush1.msra.mxu0 %v1589
        %1713 = vmatprep.subr.mxu0 0.0
        %1714 = vmatpush1.msra.mxu0 %v1588
        %1715 = vmatprep.subr.mxu0 0.0
        %1716 = vmatpush1.msra.mxu0 %v1587
        %1717 = vmatprep.subr.mxu0 0.0
        %1718 = vmatpush1.msra.mxu0 %v1586
        %1719 = vmatprep.subr.mxu0 0.0
        %1720 = vmatpush1.msra.mxu0 %v1585
        %1721 = vmatprep.subr.mxu0 0.0
        %1722 = vmatpush1.msra.mxu0 %v1584
        %1723 = vmatprep.subr.mxu0 0.0
        %1724 = vmatpush1.msra.mxu0 %v1583
        %1725 = vmatprep.subr.mxu0 0.0
        %1726 = vmatpush1.msra.mxu0 %v1582
        %1727 = vmatprep.subr.mxu0 0.0
        %1728 = vmatpush1.msra.mxu0 %v1581
        %1729 = vmatprep.subr.mxu0 0.0
        %1730 = vmatpush1.msra.mxu0 %v1580
        %1731 = vmatprep.subr.mxu0 0.0
        %1732 = vmatpush1.msra.mxu0 %v1579
        %1733 = vmatprep.subr.mxu0 0.0
        %1734 = vmatpush1.msra.mxu0 %v1578
        %1735 = vmatprep.subr.mxu0 0.0
        %1736 = vmatpush1.msra.mxu0 %v1577
        %1737 = vmatprep.subr.mxu0 0.0
        %1738 = vmatpush2.msra.mxu0 0.0
        %1739 = vmatprep.subr.mxu0 0.0
        %1740 = vmatpush2.msra.mxu0 0.0
        %1741 = vmatprep.subr.mxu0 0.0
        %1742 = vmatpush2.msra.mxu0 0.0
        %1743 = vmatprep.subr.mxu0 0.0
        %1744 = vmatpush2.msra.mxu0 0.0
        %1745 = vmatprep.subr.mxu0 0.0
        %1746 = vmatpush2.msra.mxu0 0.0
        %1747 = vmatprep.subr.mxu0 0.0
        %1748 = vmatpush2.msra.mxu0 0.0
        %1749 = vmatprep.subr.mxu0 0.0
        %1750 = vmatpush2.msra.mxu0 0.0
        %1751 = vmatprep.subr.mxu0 0.0
        %1752 = vmatpush2.msra.mxu0 0.0
        %1753 = vmatprep.subr.mxu0 0.0
        %1754 = vmatpush2.msra.mxu0 0.0
        %1755 = vmatprep.subr.mxu0 0.0
        %1756 = vmatpush2.msra.mxu0 0.0
        %1757 = vmatprep.subr.mxu0 0.0
        %1758 = vmatpush2.msra.mxu0 0.0
        %1759 = vmatprep.subr.mxu0 0.0
        %1760 = vmatpush2.msra.mxu0 0.0
        %1761 = vmatprep.subr.mxu0 0.0
        %1762 = vmatpush2.msra.mxu0 0.0
        %1763 = vmatprep.subr.mxu0 0.0
        %1764 = vmatpush2.msra.mxu0 0.0
        %1765 = vmatprep.subr.mxu0 0.0
        %1766 = vmatpush2.msra.mxu0 0.0
        %1767 = vmatprep.subr.mxu0 0.0
        %1768 = vmatpush2.msra.mxu0 0.0
        %1769 = vmatprep.mubr.f32.mxu0 0.0
        %1770 = vmatmul.mubr.f32.gmra.mxu0 %v1697
        %v1771 = vpop.f32.mrf.mxu0
        %v1772 = vadd.f32 %v1688, %v1771
        %v1773 = vpop.f32.mrf.mxu0
        %1774 = vmatprep.mubr.f32.mxu0 0.0
        %1775 = vmatmul.mubr.f32.gmra.mxu0 %v1700
        %v1776 = vpop.f32.mrf.mxu0
        %v1777 = vadd.f32 %v1693, %v1776
        %v1778 = vpop.f32.mrf.mxu0
        %1779 = vdwg.mxu0
        %s1780 = scalar_lea.vmem [#allocation16], 256
        %v1781 = vld [vmem:[%s1780] sm:$0xff]
        %v1782 = vld [vmem:[%s1780 + $0x8] sm:$0xff]
        %v1783 = vld [vmem:[%s1780 + $0x10] sm:$0xff]
        %v1784 = vld [vmem:[%s1780 + $0x18] sm:$0xff]
        %v1785 = vld [vmem:[%s1780 + $0x20] sm:$0xff]
        %v1786 = vld [vmem:[%s1780 + $0x28] sm:$0xff]
        %v1787 = vld [vmem:[%s1780 + $0x30] sm:$0xff]
        %v1788 = vld [vmem:[%s1780 + $0x38] sm:$0xff]
        %v1789 = vld [vmem:[%s1780 + $0x40] sm:$0xff]
        %v1790 = vld [vmem:[%s1780 + $0x48] sm:$0xff]
        %v1791 = vld [vmem:[%s1780 + $0x50] sm:$0xff]
        %v1792 = vld [vmem:[%s1780 + $0x58] sm:$0xff]
        %v1793 = vld [vmem:[%s1780 + $0x60] sm:$0xff]
        %v1794 = vld [vmem:[%s1780 + $0x68] sm:$0xff]
        %v1795 = vld [vmem:[%s1780 + $0x70] sm:$0xff]
        %v1796 = vld [vmem:[%s1780 + $0x78] sm:$0x1]
        %v1798 = vsel %vm1610, %v1573, 0
        %v1801 = vsel %vm1610, %v1574, 0
        %v1804 = vsel %vm1617, %v1796, 0
        %1806 = vmatprep.subr.mxu0 0.0
        %1807 = vmatpush1.msra.mxu0 %v1804
        %1808 = vmatprep.subr.mxu0 0.0
        %1809 = vmatpush1.msra.mxu0 %v1795
        %1810 = vmatprep.subr.mxu0 0.0
        %1811 = vmatpush1.msra.mxu0 %v1794
        %1812 = vmatprep.subr.mxu0 0.0
        %1813 = vmatpush1.msra.mxu0 %v1793
        %1814 = vmatprep.subr.mxu0 0.0
        %1815 = vmatpush1.msra.mxu0 %v1792
        %1816 = vmatprep.subr.mxu0 0.0
        %1817 = vmatpush1.msra.mxu0 %v1791
        %1818 = vmatprep.subr.mxu0 0.0
        %1819 = vmatpush1.msra.mxu0 %v1790
        %1820 = vmatprep.subr.mxu0 0.0
        %1821 = vmatpush1.msra.mxu0 %v1789
        %1822 = vmatprep.subr.mxu0 0.0
        %1823 = vmatpush1.msra.mxu0 %v1788
        %1824 = vmatprep.subr.mxu0 0.0
        %1825 = vmatpush1.msra.mxu0 %v1787
        %1826 = vmatprep.subr.mxu0 0.0
        %1827 = vmatpush1.msra.mxu0 %v1786
        %1828 = vmatprep.subr.mxu0 0.0
        %1829 = vmatpush1.msra.mxu0 %v1785
        %1830 = vmatprep.subr.mxu0 0.0
        %1831 = vmatpush1.msra.mxu0 %v1784
        %1832 = vmatprep.subr.mxu0 0.0
        %1833 = vmatpush1.msra.mxu0 %v1783
        %1834 = vmatprep.subr.mxu0 0.0
        %1835 = vmatpush1.msra.mxu0 %v1782
        %1836 = vmatprep.subr.mxu0 0.0
        %1837 = vmatpush1.msra.mxu0 %v1781
        %1838 = vmatprep.subr.mxu0 0.0
        %1839 = vmatpush2.msra.mxu0 0.0
        %1840 = vmatprep.subr.mxu0 0.0
        %1841 = vmatpush2.msra.mxu0 0.0
        %1842 = vmatprep.subr.mxu0 0.0
        %1843 = vmatpush2.msra.mxu0 0.0
        %1844 = vmatprep.subr.mxu0 0.0
        %1845 = vmatpush2.msra.mxu0 0.0
        %1846 = vmatprep.subr.mxu0 0.0
        %1847 = vmatpush2.msra.mxu0 0.0
        %1848 = vmatprep.subr.mxu0 0.0
        %1849 = vmatpush2.msra.mxu0 0.0
        %1850 = vmatprep.subr.mxu0 0.0
        %1851 = vmatpush2.msra.mxu0 0.0
        %1852 = vmatprep.subr.mxu0 0.0
        %1853 = vmatpush2.msra.mxu0 0.0
        %1854 = vmatprep.subr.mxu0 0.0
        %1855 = vmatpush2.msra.mxu0 0.0
        %1856 = vmatprep.subr.mxu0 0.0
        %1857 = vmatpush2.msra.mxu0 0.0
        %1858 = vmatprep.subr.mxu0 0.0
        %1859 = vmatpush2.msra.mxu0 0.0
        %1860 = vmatprep.subr.mxu0 0.0
        %1861 = vmatpush2.msra.mxu0 0.0
        %1862 = vmatprep.subr.mxu0 0.0
        %1863 = vmatpush2.msra.mxu0 0.0
        %1864 = vmatprep.subr.mxu0 0.0
        %1865 = vmatpush2.msra.mxu0 0.0
        %1866 = vmatprep.subr.mxu0 0.0
        %1867 = vmatpush2.msra.mxu0 0.0
        %1868 = vmatprep.subr.mxu0 0.0
        %1869 = vmatpush2.msra.mxu0 0.0
        %1870 = vmatprep.mubr.f32.mxu0 0.0
        %1871 = vmatmul.mubr.f32.gmra.mxu0 %v1798
        %v1872 = vpop.f32.mrf.mxu0
        %v1873 = vadd.f32 0.0, %v1872
        %v1874 = vpop.f32.mrf.mxu0
        %1875 = vmatprep.mubr.f32.mxu0 0.0
        %1876 = vmatmul.mubr.f32.gmra.mxu0 %v1801
        %v1877 = vpop.f32.mrf.mxu0
        %v1878 = vadd.f32 0.0, %v1877
        %v1879 = vpop.f32.mrf.mxu0
        %1880 = vdwg.mxu0
        %v1881 = vadd.f32 %v1772, %v1873
        %v1882 = vadd.f32 %v1777, %v1878
        %s1883 = scalar_lea.vmem [#allocation16], 384
        %v1884 = vld [vmem:[%s1883] sm:$0xff]
        %v1885 = vld [vmem:[%s1883 + $0x8] sm:$0xff]
        %v1886 = vld [vmem:[%s1883 + $0x10] sm:$0xff]
        %v1887 = vld [vmem:[%s1883 + $0x18] sm:$0xff]
        %v1888 = vld [vmem:[%s1883 + $0x20] sm:$0xff]
        %v1889 = vld [vmem:[%s1883 + $0x28] sm:$0xff]
        %v1890 = vld [vmem:[%s1883 + $0x30] sm:$0xff]
        %v1891 = vld [vmem:[%s1883 + $0x38] sm:$0xff]
        %v1892 = vld [vmem:[%s1883 + $0x40] sm:$0xff]
        %v1893 = vld [vmem:[%s1883 + $0x48] sm:$0xff]
        %v1894 = vld [vmem:[%s1883 + $0x50] sm:$0xff]
        %v1895 = vld [vmem:[%s1883 + $0x58] sm:$0xff]
        %v1896 = vld [vmem:[%s1883 + $0x60] sm:$0xff]
        %v1897 = vld [vmem:[%s1883 + $0x68] sm:$0xff]
        %v1898 = vld [vmem:[%s1883 + $0x70] sm:$0xff]
        %v1899 = vld [vmem:[%s1883 + $0x78] sm:$0x1]
        %v1901 = vsel %vm1610, %v1575, 0
        %v1904 = vsel %vm1610, %v1576, 0
        %v1907 = vsel %vm1617, %v1899, 0
        %1909 = vmatprep.subr.mxu0 0.0
        %1910 = vmatpush1.msra.mxu0 %v1907
        %1911 = vmatprep.subr.mxu0 0.0
        %1912 = vmatpush1.msra.mxu0 %v1898
        %1913 = vmatprep.subr.mxu0 0.0
        %1914 = vmatpush1.msra.mxu0 %v1897
        %1915 = vmatprep.subr.mxu0 0.0
        %1916 = vmatpush1.msra.mxu0 %v1896
        %1917 = vmatprep.subr.mxu0 0.0
        %1918 = vmatpush1.msra.mxu0 %v1895
        %1919 = vmatprep.subr.mxu0 0.0
        %1920 = vmatpush1.msra.mxu0 %v1894
        %1921 = vmatprep.subr.mxu0 0.0
        %1922 = vmatpush1.msra.mxu0 %v1893
        %1923 = vmatprep.subr.mxu0 0.0
        %1924 = vmatpush1.msra.mxu0 %v1892
        %1925 = vmatprep.subr.mxu0 0.0
        %1926 = vmatpush1.msra.mxu0 %v1891
        %1927 = vmatprep.subr.mxu0 0.0
        %1928 = vmatpush1.msra.mxu0 %v1890
        %1929 = vmatprep.subr.mxu0 0.0
        %1930 = vmatpush1.msra.mxu0 %v1889
        %1931 = vmatprep.subr.mxu0 0.0
        %1932 = vmatpush1.msra.mxu0 %v1888
        %1933 = vmatprep.subr.mxu0 0.0
        %1934 = vmatpush1.msra.mxu0 %v1887
        %1935 = vmatprep.subr.mxu0 0.0
        %1936 = vmatpush1.msra.mxu0 %v1886
        %1937 = vmatprep.subr.mxu0 0.0
        %1938 = vmatpush1.msra.mxu0 %v1885
        %1939 = vmatprep.subr.mxu0 0.0
        %1940 = vmatpush1.msra.mxu0 %v1884
        %1941 = vmatprep.subr.mxu0 0.0
        %1942 = vmatpush2.msra.mxu0 0.0
        %1943 = vmatprep.subr.mxu0 0.0
        %1944 = vmatpush2.msra.mxu0 0.0
        %1945 = vmatprep.subr.mxu0 0.0
        %1946 = vmatpush2.msra.mxu0 0.0
        %1947 = vmatprep.subr.mxu0 0.0
        %1948 = vmatpush2.msra.mxu0 0.0
        %1949 = vmatprep.subr.mxu0 0.0
        %1950 = vmatpush2.msra.mxu0 0.0
        %1951 = vmatprep.subr.mxu0 0.0
        %1952 = vmatpush2.msra.mxu0 0.0
        %1953 = vmatprep.subr.mxu0 0.0
        %1954 = vmatpush2.msra.mxu0 0.0
        %1955 = vmatprep.subr.mxu0 0.0
        %1956 = vmatpush2.msra.mxu0 0.0
        %1957 = vmatprep.subr.mxu0 0.0
        %1958 = vmatpush2.msra.mxu0 0.0
        %1959 = vmatprep.subr.mxu0 0.0
        %1960 = vmatpush2.msra.mxu0 0.0
        %1961 = vmatprep.subr.mxu0 0.0
        %1962 = vmatpush2.msra.mxu0 0.0
        %1963 = vmatprep.subr.mxu0 0.0
        %1964 = vmatpush2.msra.mxu0 0.0
        %1965 = vmatprep.subr.mxu0 0.0
        %1966 = vmatpush2.msra.mxu0 0.0
        %1967 = vmatprep.subr.mxu0 0.0
        %1968 = vmatpush2.msra.mxu0 0.0
        %1969 = vmatprep.subr.mxu0 0.0
        %1970 = vmatpush2.msra.mxu0 0.0
        %1971 = vmatprep.subr.mxu0 0.0
        %1972 = vmatpush2.msra.mxu0 0.0
        %1973 = vmatprep.mubr.f32.mxu0 0.0
        %1974 = vmatmul.mubr.f32.gmra.mxu0 %v1901
        %v1975 = vpop.f32.mrf.mxu0
        %v1976 = vadd.f32 0.0, %v1975
        %v1977 = vpop.f32.mrf.mxu0
        %1978 = vmatprep.mubr.f32.mxu0 0.0
        %1979 = vmatmul.mubr.f32.gmra.mxu0 %v1904
        %v1980 = vpop.f32.mrf.mxu0
        %v1981 = vadd.f32 0.0, %v1980
        %v1982 = vpop.f32.mrf.mxu0
        %1983 = vdwg.mxu0
        %v1984 = vadd.f32 %v1881, %v1976
        %v1985 = vadd.f32 %v1882, %v1981
        %1988 = vrot.lane.b32.xlu0 %v1984, 127
        %v1989 = vpop.permute.xlu0 %1988
        %1990 = vrot.lane.b32.xlu0 %v1985, 127
        %v1991 = vpop.permute.xlu0 %1990
        %1994 = vrot.lane.b32.xlu0 %v1984, 118
        %v1995 = vpop.permute.xlu0 %1994
        %1996 = vrot.lane.b32.xlu0 %v1985, 118
        %v1997 = vpop.permute.xlu0 %1996
        %2000 = vrot.lane.b32.xlu0 %v1984, 117
        %v2001 = vpop.permute.xlu0 %2000
        %2002 = vrot.lane.b32.xlu0 %v1985, 117
        %v2003 = vpop.permute.xlu0 %2002
        %v2006 = vld [vmem:[#allocation9] sm:$0xff]
        %v2007 = vld [vmem:[#allocation9 + $0x8] sm:$0xff]
        %v2008 = vld [vmem:[#allocation9 + $0x10] sm:$0xff]
        %v2009 = vld [vmem:[#allocation9 + $0x18] sm:$0xff]
        %v2010 = vld [vmem:[#allocation10] sm:$0xff]
        %v2011 = vld [vmem:[#allocation10 + $0x8] sm:$0xff]
        %v2012 = vld [vmem:[#allocation10 + $0x10] sm:$0xff]
        %v2013 = vld [vmem:[#allocation10 + $0x18] sm:$0xff]
        %2015 = vset.pattern.permute.xlu0 0
        %2016 = vperm.xlu0 %2015, %v2010
        %v2017 = vpop.permute.xlu0 %2016
        %2020 = vset.pattern.permute.xlu0 0
        %2021 = vperm.xlu0 %2020, %v2011
        %v2022 = vpop.permute.xlu0 %2021
        %2025 = vset.pattern.permute.xlu0 0
        %2026 = vperm.xlu0 %2025, %v2012
        %v2027 = vpop.permute.xlu0 %2026
        %2030 = vset.pattern.permute.xlu0 0
        %2031 = vperm.xlu0 %2030, %v2013
        %v2032 = vpop.permute.xlu0 %2031
        %vm2034 = vcmask 523264
        %v2036 = vsel %vm2034, %v2006, 0
        %v2039 = vsel %vm2034, %v2007, 0
        %v2042 = vsel %vm2034, %v2008, 0
        %v2045 = vsel %vm2034, %v2009, 0
        %2047 = vmatprep.subr.mxu0 0.0
        %2048 = vmatpush1.msra.mxu0 0.0
        %2049 = vmatprep.subr.mxu0 0.0
        %2050 = vmatpush1.msra.mxu0 0.0
        %2051 = vmatprep.subr.mxu0 0.0
        %2052 = vmatpush1.msra.mxu0 0.0
        %2053 = vmatprep.subr.mxu0 0.0
        %2054 = vmatpush1.msra.mxu0 0.0
        %2055 = vmatprep.subr.mxu0 0.0
        %2056 = vmatpush1.msra.mxu0 0.0
        %2057 = vmatprep.subr.mxu0 0.0
        %2058 = vmatpush1.msra.mxu0 0.0
        %2059 = vmatprep.subr.mxu0 0.0
        %2060 = vmatpush1.msra.mxu0 0.0
        %2061 = vmatprep.subr.mxu0 0.0
        %2062 = vmatpush1.msra.mxu0 0.0
        %2063 = vmatprep.subr.mxu0 0.0
        %2064 = vmatpush1.msra.mxu0 %v2003
        %2065 = vmatprep.subr.mxu0 0.0
        %2066 = vmatpush1.msra.mxu0 %v2001
        %2067 = vmatprep.subr.mxu0 0.0
        %2068 = vmatpush1.msra.mxu0 %v1997
        %2069 = vmatprep.subr.mxu0 0.0
        %2070 = vmatpush1.msra.mxu0 %v1995
        %2071 = vmatprep.subr.mxu0 0.0
        %2072 = vmatpush1.msra.mxu0 %v1991
        %2073 = vmatprep.subr.mxu0 0.0
        %2074 = vmatpush1.msra.mxu0 %v1989
        %2075 = vmatprep.subr.mxu0 0.0
        %2076 = vmatpush1.msra.mxu0 %v1985
        %2077 = vmatprep.subr.mxu0 0.0
        %2078 = vmatpush1.msra.mxu0 %v1984
        %2079 = vmatprep.subr.mxu0 0.0
        %2080 = vmatpush2.msra.mxu0 0.0
        %2081 = vmatprep.subr.mxu0 0.0
        %2082 = vmatpush2.msra.mxu0 0.0
        %2083 = vmatprep.subr.mxu0 0.0
        %2084 = vmatpush2.msra.mxu0 0.0
        %2085 = vmatprep.subr.mxu0 0.0
        %2086 = vmatpush2.msra.mxu0 0.0
        %2087 = vmatprep.subr.mxu0 0.0
        %2088 = vmatpush2.msra.mxu0 0.0
        %2089 = vmatprep.subr.mxu0 0.0
        %2090 = vmatpush2.msra.mxu0 0.0
        %2091 = vmatprep.subr.mxu0 0.0
        %2092 = vmatpush2.msra.mxu0 0.0
        %2093 = vmatprep.subr.mxu0 0.0
        %2094 = vmatpush2.msra.mxu0 0.0
        %2095 = vmatprep.subr.mxu0 0.0
        %2096 = vmatpush2.msra.mxu0 0.0
        %2097 = vmatprep.subr.mxu0 0.0
        %2098 = vmatpush2.msra.mxu0 0.0
        %2099 = vmatprep.subr.mxu0 0.0
        %2100 = vmatpush2.msra.mxu0 0.0
        %2101 = vmatprep.subr.mxu0 0.0
        %2102 = vmatpush2.msra.mxu0 0.0
        %2103 = vmatprep.subr.mxu0 0.0
        %2104 = vmatpush2.msra.mxu0 0.0
        %2105 = vmatprep.subr.mxu0 0.0
        %2106 = vmatpush2.msra.mxu0 0.0
        %2107 = vmatprep.subr.mxu0 0.0
        %2108 = vmatpush2.msra.mxu0 0.0
        %2109 = vmatprep.subr.mxu0 0.0
        %2110 = vmatpush2.msra.mxu0 0.0
        %2111 = vmatprep.mubr.f32.mxu0 0.0
        %2112 = vmatmul.mubr.f32.gmra.mxu0 %v2036
        %v2113 = vpop.f32.mrf.mxu0
        %v2114 = vadd.f32 %v2017, %v2113
        %v2115 = vpop.f32.mrf.mxu0
        %2116 = vmatprep.mubr.f32.mxu0 0.0
        %2117 = vmatmul.mubr.f32.gmra.mxu0 %v2039
        %v2118 = vpop.f32.mrf.mxu0
        %v2119 = vadd.f32 %v2022, %v2118
        %v2120 = vpop.f32.mrf.mxu0
        %2121 = vmatprep.mubr.f32.mxu0 0.0
        %2122 = vmatmul.mubr.f32.gmra.mxu0 %v2042
        %v2123 = vpop.f32.mrf.mxu0
        %v2124 = vadd.f32 %v2027, %v2123
        %v2125 = vpop.f32.mrf.mxu0
        %2126 = vmatprep.mubr.f32.mxu0 0.0
        %2127 = vmatmul.mubr.f32.gmra.mxu0 %v2045
        %v2128 = vpop.f32.mrf.mxu0
        %v2129 = vadd.f32 %v2032, %v2128
        %v2130 = vpop.f32.mrf.mxu0
        %2131 = vdwg.mxu0
        %v2132 = vmax.f32 %v2114, 0.0
        %v2133 = vmax.f32 %v2119, 0.0
        %v2134 = vmax.f32 %v2124, 0.0
        %v2135 = vmax.f32 %v2129, 0.0
        %v2136 = vld [vmem:[#allocation18] sm:$0xff]
        %v2137 = vld [vmem:[#allocation18 + $0x8] sm:$0xff]
        %v2138 = vld [vmem:[#allocation18 + $0x10] sm:$0xff]
        %v2139 = vld [vmem:[#allocation18 + $0x18] sm:$0xff]
        %v2140 = vld [vmem:[#allocation18 + $0x20] sm:$0xff]
        %v2141 = vld [vmem:[#allocation18 + $0x28] sm:$0xff]
        %v2142 = vld [vmem:[#allocation18 + $0x30] sm:$0xff]
        %v2143 = vld [vmem:[#allocation18 + $0x38] sm:$0xff]
        %v2144 = vld [vmem:[#allocation18 + $0x40] sm:$0xff]
        %v2145 = vld [vmem:[#allocation18 + $0x48] sm:$0xff]
        %v2146 = vld [vmem:[#allocation18 + $0x50] sm:$0xff]
        %v2147 = vld [vmem:[#allocation18 + $0x58] sm:$0xff]
        %v2148 = vld [vmem:[#allocation18 + $0x60] sm:$0xff]
        %v2149 = vld [vmem:[#allocation18 + $0x68] sm:$0xff]
        %v2150 = vld [vmem:[#allocation18 + $0x70] sm:$0xff]
        %v2151 = vld [vmem:[#allocation18 + $0x78] sm:$0xff]
        %v2152 = vld [vmem:[#allocation18 + $0x80] sm:$0xff]
        %v2153 = vld [vmem:[#allocation18 + $0x88] sm:$0xff]
        %v2154 = vld [vmem:[#allocation18 + $0x90] sm:$0xff]
        %v2155 = vld [vmem:[#allocation18 + $0x98] sm:$0xff]
        %v2156 = vld [vmem:[#allocation18 + $0xa0] sm:$0xff]
        %v2157 = vld [vmem:[#allocation18 + $0xa8] sm:$0xff]
        %v2158 = vld [vmem:[#allocation18 + $0xb0] sm:$0xff]
        %v2159 = vld [vmem:[#allocation18 + $0xb8] sm:$0xff]
        %v2160 = vld [vmem:[#allocation18 + $0xc0] sm:$0xff]
        %v2161 = vld [vmem:[#allocation18 + $0xc8] sm:$0xff]
        %v2162 = vld [vmem:[#allocation18 + $0xd0] sm:$0xff]
        %v2163 = vld [vmem:[#allocation18 + $0xd8] sm:$0xff]
        %v2164 = vld [vmem:[#allocation18 + $0xe0] sm:$0xff]
        %v2165 = vld [vmem:[#allocation18 + $0xe8] sm:$0xff]
        %v2166 = vld [vmem:[#allocation18 + $0xf0] sm:$0xff]
        %v2167 = vld [vmem:[#allocation18 + $0xf8] sm:$0xff]
        %v2168 = vld [vmem:[#allocation18 + $0x100] sm:$0xff]
        %v2169 = vld [vmem:[#allocation18 + $0x108] sm:$0xff]
        %v2170 = vld [vmem:[#allocation18 + $0x110] sm:$0xff]
        %v2171 = vld [vmem:[#allocation18 + $0x118] sm:$0xff]
        %v2172 = vld [vmem:[#allocation18 + $0x120] sm:$0xff]
        %v2173 = vld [vmem:[#allocation18 + $0x128] sm:$0xff]
        %v2174 = vld [vmem:[#allocation18 + $0x130] sm:$0xff]
        %v2175 = vld [vmem:[#allocation18 + $0x138] sm:$0xff]
        %v2176 = vld [vmem:[#allocation18 + $0x140] sm:$0xff]
        %v2177 = vld [vmem:[#allocation18 + $0x148] sm:$0xff]
        %v2178 = vld [vmem:[#allocation18 + $0x150] sm:$0x1f]
        %v2179 = vld [vmem:[#allocation18 + $0x158] sm:$0x1f]
        %v2180 = vld [vmem:[#allocation18 + $0x160] sm:$0x1f]
        %s2181 = scalar_lea.vmem [#allocation18], 360
        %v2182 = vld [vmem:[%s2181] sm:$0xff]
        %v2183 = vld [vmem:[%s2181 + $0x8] sm:$0xff]
        %v2184 = vld [vmem:[%s2181 + $0x10] sm:$0xff]
        %v2185 = vld [vmem:[%s2181 + $0x18] sm:$0xff]
        %v2186 = vld [vmem:[%s2181 + $0x20] sm:$0xff]
        %v2187 = vld [vmem:[%s2181 + $0x28] sm:$0xff]
        %v2188 = vld [vmem:[%s2181 + $0x30] sm:$0xff]
        %v2189 = vld [vmem:[%s2181 + $0x38] sm:$0xff]
        %v2190 = vld [vmem:[%s2181 + $0x40] sm:$0xff]
        %v2191 = vld [vmem:[%s2181 + $0x48] sm:$0xff]
        %v2192 = vld [vmem:[%s2181 + $0x50] sm:$0xff]
        %v2193 = vld [vmem:[%s2181 + $0x58] sm:$0xff]
        %v2194 = vld [vmem:[%s2181 + $0x60] sm:$0xff]
        %v2195 = vld [vmem:[%s2181 + $0x68] sm:$0xff]
        %v2196 = vld [vmem:[%s2181 + $0x70] sm:$0xff]
        %v2197 = vld [vmem:[%s2181 + $0x78] sm:$0xff]
        %v2198 = vld [vmem:[%s2181 + $0x80] sm:$0xff]
        %v2199 = vld [vmem:[%s2181 + $0x88] sm:$0xff]
        %v2200 = vld [vmem:[%s2181 + $0x90] sm:$0xff]
        %v2201 = vld [vmem:[%s2181 + $0x98] sm:$0xff]
        %v2202 = vld [vmem:[%s2181 + $0xa0] sm:$0xff]
        %v2203 = vld [vmem:[%s2181 + $0xa8] sm:$0xff]
        %v2204 = vld [vmem:[%s2181 + $0xb0] sm:$0xff]
        %v2205 = vld [vmem:[%s2181 + $0xb8] sm:$0xff]
        %v2206 = vld [vmem:[%s2181 + $0xc0] sm:$0xff]
        %v2207 = vld [vmem:[%s2181 + $0xc8] sm:$0xff]
        %v2208 = vld [vmem:[%s2181 + $0xd0] sm:$0xff]
        %v2209 = vld [vmem:[%s2181 + $0xd8] sm:$0xff]
        %v2210 = vld [vmem:[%s2181 + $0xe0] sm:$0xff]
        %v2211 = vld [vmem:[%s2181 + $0xe8] sm:$0xff]
        %v2212 = vld [vmem:[%s2181 + $0xf0] sm:$0xff]
        %v2213 = vld [vmem:[%s2181 + $0xf8] sm:$0xff]
        %v2214 = vld [vmem:[%s2181 + $0x100] sm:$0xff]
        %v2215 = vld [vmem:[%s2181 + $0x108] sm:$0xff]
        %v2216 = vld [vmem:[%s2181 + $0x110] sm:$0xff]
        %v2217 = vld [vmem:[%s2181 + $0x118] sm:$0xff]
        %v2218 = vld [vmem:[%s2181 + $0x120] sm:$0xff]
        %v2219 = vld [vmem:[%s2181 + $0x128] sm:$0xff]
        %v2220 = vld [vmem:[%s2181 + $0x130] sm:$0xff]
        %v2221 = vld [vmem:[%s2181 + $0x138] sm:$0xff]
        %v2222 = vld [vmem:[%s2181 + $0x140] sm:$0xff]
        %v2223 = vld [vmem:[%s2181 + $0x148] sm:$0xff]
        %v2224 = vld [vmem:[%s2181 + $0x150] sm:$0x1f]
        %v2225 = vld [vmem:[%s2181 + $0x158] sm:$0x1f]
        %v2226 = vld [vmem:[%s2181 + $0x160] sm:$0x1f]
        %vm2227 = vcmask 957440
        %v2229 = vsel %vm2227, %v2133, 0
        %vm2231 = vcmask 1044480
        %v2233 = vsel %vm2231, %v2224, 0
        %v2236 = vsel %vm2231, %v2225, 0
        %v2239 = vsel %vm2231, %v2226, 0
        %2241 = vmatprep.subr.mxu0 0.0
        %2242 = vmatpush1.msra.mxu0 0.0
        %2243 = vmatprep.subr.mxu0 %v2236
        %2244 = vmatpush1.msra.mxu0 %v2233
        %2245 = vmatprep.subr.mxu0 %v2222
        %2246 = vmatpush1.msra.mxu0 %v2221
        %2247 = vmatprep.subr.mxu0 %v2219
        %2248 = vmatpush1.msra.mxu0 %v2218
        %2249 = vmatprep.subr.mxu0 %v2216
        %2250 = vmatpush1.msra.mxu0 %v2215
        %2251 = vmatprep.subr.mxu0 %v2213
        %2252 = vmatpush1.msra.mxu0 %v2212
        %2253 = vmatprep.subr.mxu0 %v2210
        %2254 = vmatpush1.msra.mxu0 %v2209
        %2255 = vmatprep.subr.mxu0 %v2207
        %2256 = vmatpush1.msra.mxu0 %v2206
        %2257 = vmatprep.subr.mxu0 %v2204
        %2258 = vmatpush1.msra.mxu0 %v2203
        %2259 = vmatprep.subr.mxu0 %v2201
        %2260 = vmatpush1.msra.mxu0 %v2200
        %2261 = vmatprep.subr.mxu0 %v2198
        %2262 = vmatpush1.msra.mxu0 %v2197
        %2263 = vmatprep.subr.mxu0 %v2195
        %2264 = vmatpush1.msra.mxu0 %v2194
        %2265 = vmatprep.subr.mxu0 %v2192
        %2266 = vmatpush1.msra.mxu0 %v2191
        %2267 = vmatprep.subr.mxu0 %v2189
        %2268 = vmatpush1.msra.mxu0 %v2188
        %2269 = vmatprep.subr.mxu0 %v2186
        %2270 = vmatpush1.msra.mxu0 %v2185
        %2271 = vmatprep.subr.mxu0 %v2183
        %2272 = vmatpush1.msra.mxu0 %v2182
        %2273 = vmatprep.subr.mxu0 0.0
        %2274 = vmatpush2.msra.mxu0 0.0
        %2275 = vmatprep.subr.mxu0 0.0
        %2276 = vmatpush2.msra.mxu0 0.0
        %2277 = vmatprep.subr.mxu0 0.0
        %2278 = vmatpush2.msra.mxu0 0.0
        %2279 = vmatprep.subr.mxu0 0.0
        %2280 = vmatpush2.msra.mxu0 0.0
        %2281 = vmatprep.subr.mxu0 0.0
        %2282 = vmatpush2.msra.mxu0 0.0
        %2283 = vmatprep.subr.mxu0 0.0
        %2284 = vmatpush2.msra.mxu0 0.0
        %2285 = vmatprep.subr.mxu0 0.0
        %2286 = vmatpush2.msra.mxu0 0.0
        %2287 = vmatprep.subr.mxu0 0.0
        %2288 = vmatpush2.msra.mxu0 0.0
        %2289 = vmatprep.subr.mxu0 0.0
        %2290 = vmatpush2.msra.mxu0 0.0
        %2291 = vmatprep.subr.mxu0 0.0
        %2292 = vmatpush2.msra.mxu0 0.0
        %2293 = vmatprep.subr.mxu0 0.0
        %2294 = vmatpush2.msra.mxu0 0.0
        %2295 = vmatprep.subr.mxu0 0.0
        %2296 = vmatpush2.msra.mxu0 0.0
        %2297 = vmatprep.subr.mxu0 0.0
        %2298 = vmatpush2.msra.mxu0 0.0
        %2299 = vmatprep.subr.mxu0 0.0
        %2300 = vmatpush2.msra.mxu0 0.0
        %2301 = vmatprep.subr.mxu0 0.0
        %2302 = vmatpush2.msra.mxu0 0.0
        %2303 = vmatprep.subr.mxu0 0.0
        %2304 = vmatpush2.msra.mxu0 0.0
        %2305 = vmatprep.mubr.f32.mxu0 0.0
        %2306 = vmatmul.mubr.f32.gmra.mxu0 %v2229
        %v2307 = vpop.f32.mrf.mxu0
        %v2308 = vadd.f32 0.0, %v2307
        %v2309 = vpop.f32.mrf.mxu0
        %v2310 = vadd.f32 0.0, %v2309
        %2311 = vdwg.mxu0
        %2312 = vmatprep.subr.mxu0 0.0
        %2313 = vmatpush1.msra.mxu0 0.0
        %2314 = vmatprep.subr.mxu0 0.0
        %2315 = vmatpush1.msra.mxu0 %v2239
        %2316 = vmatprep.subr.mxu0 0.0
        %2317 = vmatpush1.msra.mxu0 %v2223
        %2318 = vmatprep.subr.mxu0 0.0
        %2319 = vmatpush1.msra.mxu0 %v2220
        %2320 = vmatprep.subr.mxu0 0.0
        %2321 = vmatpush1.msra.mxu0 %v2217
        %2322 = vmatprep.subr.mxu0 0.0
        %2323 = vmatpush1.msra.mxu0 %v2214
        %2324 = vmatprep.subr.mxu0 0.0
        %2325 = vmatpush1.msra.mxu0 %v2211
        %2326 = vmatprep.subr.mxu0 0.0
        %2327 = vmatpush1.msra.mxu0 %v2208
        %2328 = vmatprep.subr.mxu0 0.0
        %2329 = vmatpush1.msra.mxu0 %v2205
        %2330 = vmatprep.subr.mxu0 0.0
        %2331 = vmatpush1.msra.mxu0 %v2202
        %2332 = vmatprep.subr.mxu0 0.0
        %2333 = vmatpush1.msra.mxu0 %v2199
        %2334 = vmatprep.subr.mxu0 0.0
        %2335 = vmatpush1.msra.mxu0 %v2196
        %2336 = vmatprep.subr.mxu0 0.0
        %2337 = vmatpush1.msra.mxu0 %v2193
        %2338 = vmatprep.subr.mxu0 0.0
        %2339 = vmatpush1.msra.mxu0 %v2190
        %2340 = vmatprep.subr.mxu0 0.0
        %2341 = vmatpush1.msra.mxu0 %v2187
        %2342 = vmatprep.subr.mxu0 0.0
        %2343 = vmatpush1.msra.mxu0 %v2184
        %2344 = vmatprep.subr.mxu0 0.0
        %2345 = vmatpush2.msra.mxu0 0.0
        %2346 = vmatprep.subr.mxu0 0.0
        %2347 = vmatpush2.msra.mxu0 0.0
        %2348 = vmatprep.subr.mxu0 0.0
        %2349 = vmatpush2.msra.mxu0 0.0
        %2350 = vmatprep.subr.mxu0 0.0
        %2351 = vmatpush2.msra.mxu0 0.0
        %2352 = vmatprep.subr.mxu0 0.0
        %2353 = vmatpush2.msra.mxu0 0.0
        %2354 = vmatprep.subr.mxu0 0.0
        %2355 = vmatpush2.msra.mxu0 0.0
        %2356 = vmatprep.subr.mxu0 0.0
        %2357 = vmatpush2.msra.mxu0 0.0
        %2358 = vmatprep.subr.mxu0 0.0
        %2359 = vmatpush2.msra.mxu0 0.0
        %2360 = vmatprep.subr.mxu0 0.0
        %2361 = vmatpush2.msra.mxu0 0.0
        %2362 = vmatprep.subr.mxu0 0.0
        %2363 = vmatpush2.msra.mxu0 0.0
        %2364 = vmatprep.subr.mxu0 0.0
        %2365 = vmatpush2.msra.mxu0 0.0
        %2366 = vmatprep.subr.mxu0 0.0
        %2367 = vmatpush2.msra.mxu0 0.0
        %2368 = vmatprep.subr.mxu0 0.0
        %2369 = vmatpush2.msra.mxu0 0.0
        %2370 = vmatprep.subr.mxu0 0.0
        %2371 = vmatpush2.msra.mxu0 0.0
        %2372 = vmatprep.subr.mxu0 0.0
        %2373 = vmatpush2.msra.mxu0 0.0
        %2374 = vmatprep.subr.mxu0 0.0
        %2375 = vmatpush2.msra.mxu0 0.0
        %2376 = vmatprep.mubr.f32.mxu0 0.0
        %2377 = vmatmul.mubr.f32.gmra.mxu0 %v2229
        %v2378 = vpop.f32.mrf.mxu0
        %v2379 = vadd.f32 0.0, %v2378
        %v2380 = vpop.f32.mrf.mxu0
        %2381 = vdwg.mxu0
        %v2383 = vsel %vm2227, %v2132, 0
        %v2386 = vsel %vm2231, %v2178, 0
        %v2389 = vsel %vm2231, %v2179, 0
        %v2392 = vsel %vm2231, %v2180, 0
        %2394 = vmatprep.subr.mxu0 0.0
        %2395 = vmatpush1.msra.mxu0 0.0
        %2396 = vmatprep.subr.mxu0 %v2389
        %2397 = vmatpush1.msra.mxu0 %v2386
        %2398 = vmatprep.subr.mxu0 %v2176
        %2399 = vmatpush1.msra.mxu0 %v2175
        %2400 = vmatprep.subr.mxu0 %v2173
        %2401 = vmatpush1.msra.mxu0 %v2172
        %2402 = vmatprep.subr.mxu0 %v2170
        %2403 = vmatpush1.msra.mxu0 %v2169
        %2404 = vmatprep.subr.mxu0 %v2167
        %2405 = vmatpush1.msra.mxu0 %v2166
        %2406 = vmatprep.subr.mxu0 %v2164
        %2407 = vmatpush1.msra.mxu0 %v2163
        %2408 = vmatprep.subr.mxu0 %v2161
        %2409 = vmatpush1.msra.mxu0 %v2160
        %2410 = vmatprep.subr.mxu0 %v2158
        %2411 = vmatpush1.msra.mxu0 %v2157
        %2412 = vmatprep.subr.mxu0 %v2155
        %2413 = vmatpush1.msra.mxu0 %v2154
        %2414 = vmatprep.subr.mxu0 %v2152
        %2415 = vmatpush1.msra.mxu0 %v2151
        %2416 = vmatprep.subr.mxu0 %v2149
        %2417 = vmatpush1.msra.mxu0 %v2148
        %2418 = vmatprep.subr.mxu0 %v2146
        %2419 = vmatpush1.msra.mxu0 %v2145
        %2420 = vmatprep.subr.mxu0 %v2143
        %2421 = vmatpush1.msra.mxu0 %v2142
        %2422 = vmatprep.subr.mxu0 %v2140
        %2423 = vmatpush1.msra.mxu0 %v2139
        %2424 = vmatprep.subr.mxu0 %v2137
        %2425 = vmatpush1.msra.mxu0 %v2136
        %2426 = vmatprep.subr.mxu0 0.0
        %2427 = vmatpush2.msra.mxu0 0.0
        %2428 = vmatprep.subr.mxu0 0.0
        %2429 = vmatpush2.msra.mxu0 0.0
        %2430 = vmatprep.subr.mxu0 0.0
        %2431 = vmatpush2.msra.mxu0 0.0
        %2432 = vmatprep.subr.mxu0 0.0
        %2433 = vmatpush2.msra.mxu0 0.0
        %2434 = vmatprep.subr.mxu0 0.0
        %2435 = vmatpush2.msra.mxu0 0.0
        %2436 = vmatprep.subr.mxu0 0.0
        %2437 = vmatpush2.msra.mxu0 0.0
        %2438 = vmatprep.subr.mxu0 0.0
        %2439 = vmatpush2.msra.mxu0 0.0
        %2440 = vmatprep.subr.mxu0 0.0
        %2441 = vmatpush2.msra.mxu0 0.0
        %2442 = vmatprep.subr.mxu0 0.0
        %2443 = vmatpush2.msra.mxu0 0.0
        %2444 = vmatprep.subr.mxu0 0.0
        %2445 = vmatpush2.msra.mxu0 0.0
        %2446 = vmatprep.subr.mxu0 0.0
        %2447 = vmatpush2.msra.mxu0 0.0
        %2448 = vmatprep.subr.mxu0 0.0
        %2449 = vmatpush2.msra.mxu0 0.0
        %2450 = vmatprep.subr.mxu0 0.0
        %2451 = vmatpush2.msra.mxu0 0.0
        %2452 = vmatprep.subr.mxu0 0.0
        %2453 = vmatpush2.msra.mxu0 0.0
        %2454 = vmatprep.subr.mxu0 0.0
        %2455 = vmatpush2.msra.mxu0 0.0
        %2456 = vmatprep.subr.mxu0 0.0
        %2457 = vmatpush2.msra.mxu0 0.0
        %2458 = vmatprep.mubr.f32.mxu0 0.0
        %2459 = vmatmul.mubr.f32.gmra.mxu0 %v2383
        %v2460 = vpop.f32.mrf.mxu0
        %v2461 = vadd.f32 %v2308, %v2460
        %v2462 = vpop.f32.mrf.mxu0
        %v2463 = vadd.f32 %v2310, %v2462
        %2464 = vdwg.mxu0
        %2465 = vmatprep.subr.mxu0 0.0
        %2466 = vmatpush1.msra.mxu0 0.0
        %2467 = vmatprep.subr.mxu0 0.0
        %2468 = vmatpush1.msra.mxu0 %v2392
        %2469 = vmatprep.subr.mxu0 0.0
        %2470 = vmatpush1.msra.mxu0 %v2177
        %2471 = vmatprep.subr.mxu0 0.0
        %2472 = vmatpush1.msra.mxu0 %v2174
        %2473 = vmatprep.subr.mxu0 0.0
        %2474 = vmatpush1.msra.mxu0 %v2171
        %2475 = vmatprep.subr.mxu0 0.0
        %2476 = vmatpush1.msra.mxu0 %v2168
        %2477 = vmatprep.subr.mxu0 0.0
        %2478 = vmatpush1.msra.mxu0 %v2165
        %2479 = vmatprep.subr.mxu0 0.0
        %2480 = vmatpush1.msra.mxu0 %v2162
        %2481 = vmatprep.subr.mxu0 0.0
        %2482 = vmatpush1.msra.mxu0 %v2159
        %2483 = vmatprep.subr.mxu0 0.0
        %2484 = vmatpush1.msra.mxu0 %v2156
        %2485 = vmatprep.subr.mxu0 0.0
        %2486 = vmatpush1.msra.mxu0 %v2153
        %2487 = vmatprep.subr.mxu0 0.0
        %2488 = vmatpush1.msra.mxu0 %v2150
        %2489 = vmatprep.subr.mxu0 0.0
        %2490 = vmatpush1.msra.mxu0 %v2147
        %2491 = vmatprep.subr.mxu0 0.0
        %2492 = vmatpush1.msra.mxu0 %v2144
        %2493 = vmatprep.subr.mxu0 0.0
        %2494 = vmatpush1.msra.mxu0 %v2141
        %2495 = vmatprep.subr.mxu0 0.0
        %2496 = vmatpush1.msra.mxu0 %v2138
        %2497 = vmatprep.subr.mxu0 0.0
        %2498 = vmatpush2.msra.mxu0 0.0
        %2499 = vmatprep.subr.mxu0 0.0
        %2500 = vmatpush2.msra.mxu0 0.0
        %2501 = vmatprep.subr.mxu0 0.0
        %2502 = vmatpush2.msra.mxu0 0.0
        %2503 = vmatprep.subr.mxu0 0.0
        %2504 = vmatpush2.msra.mxu0 0.0
        %2505 = vmatprep.subr.mxu0 0.0
        %2506 = vmatpush2.msra.mxu0 0.0
        %2507 = vmatprep.subr.mxu0 0.0
        %2508 = vmatpush2.msra.mxu0 0.0
        %2509 = vmatprep.subr.mxu0 0.0
        %2510 = vmatpush2.msra.mxu0 0.0
        %2511 = vmatprep.subr.mxu0 0.0
        %2512 = vmatpush2.msra.mxu0 0.0
        %2513 = vmatprep.subr.mxu0 0.0
        %2514 = vmatpush2.msra.mxu0 0.0
        %2515 = vmatprep.subr.mxu0 0.0
        %2516 = vmatpush2.msra.mxu0 0.0
        %2517 = vmatprep.subr.mxu0 0.0
        %2518 = vmatpush2.msra.mxu0 0.0
        %2519 = vmatprep.subr.mxu0 0.0
        %2520 = vmatpush2.msra.mxu0 0.0
        %2521 = vmatprep.subr.mxu0 0.0
        %2522 = vmatpush2.msra.mxu0 0.0
        %2523 = vmatprep.subr.mxu0 0.0
        %2524 = vmatpush2.msra.mxu0 0.0
        %2525 = vmatprep.subr.mxu0 0.0
        %2526 = vmatpush2.msra.mxu0 0.0
        %2527 = vmatprep.subr.mxu0 0.0
        %2528 = vmatpush2.msra.mxu0 0.0
        %2529 = vmatprep.mubr.f32.mxu0 0.0
        %2530 = vmatmul.mubr.f32.gmra.mxu0 %v2383
        %v2531 = vpop.f32.mrf.mxu0
        %v2532 = vadd.f32 %v2379, %v2531
        %v2533 = vpop.f32.mrf.mxu0
        %2534 = vdwg.mxu0
        %s2535 = scalar_lea.vmem [#allocation18], 720
        %v2536 = vld [vmem:[%s2535] sm:$0xff]
        %v2537 = vld [vmem:[%s2535 + $0x8] sm:$0xff]
        %v2538 = vld [vmem:[%s2535 + $0x10] sm:$0xff]
        %v2539 = vld [vmem:[%s2535 + $0x18] sm:$0xff]
        %v2540 = vld [vmem:[%s2535 + $0x20] sm:$0xff]
        %v2541 = vld [vmem:[%s2535 + $0x28] sm:$0xff]
        %v2542 = vld [vmem:[%s2535 + $0x30] sm:$0xff]
        %v2543 = vld [vmem:[%s2535 + $0x38] sm:$0xff]
        %v2544 = vld [vmem:[%s2535 + $0x40] sm:$0xff]
        %v2545 = vld [vmem:[%s2535 + $0x48] sm:$0xff]
        %v2546 = vld [vmem:[%s2535 + $0x50] sm:$0xff]
        %v2547 = vld [vmem:[%s2535 + $0x58] sm:$0xff]
        %v2548 = vld [vmem:[%s2535 + $0x60] sm:$0xff]
        %v2549 = vld [vmem:[%s2535 + $0x68] sm:$0xff]
        %v2550 = vld [vmem:[%s2535 + $0x70] sm:$0xff]
        %v2551 = vld [vmem:[%s2535 + $0x78] sm:$0xff]
        %v2552 = vld [vmem:[%s2535 + $0x80] sm:$0xff]
        %v2553 = vld [vmem:[%s2535 + $0x88] sm:$0xff]
        %v2554 = vld [vmem:[%s2535 + $0x90] sm:$0xff]
        %v2555 = vld [vmem:[%s2535 + $0x98] sm:$0xff]
        %v2556 = vld [vmem:[%s2535 + $0xa0] sm:$0xff]
        %v2557 = vld [vmem:[%s2535 + $0xa8] sm:$0xff]
        %v2558 = vld [vmem:[%s2535 + $0xb0] sm:$0xff]
        %v2559 = vld [vmem:[%s2535 + $0xb8] sm:$0xff]
        %v2560 = vld [vmem:[%s2535 + $0xc0] sm:$0xff]
        %v2561 = vld [vmem:[%s2535 + $0xc8] sm:$0xff]
        %v2562 = vld [vmem:[%s2535 + $0xd0] sm:$0xff]
        %v2563 = vld [vmem:[%s2535 + $0xd8] sm:$0xff]
        %v2564 = vld [vmem:[%s2535 + $0xe0] sm:$0xff]
        %v2565 = vld [vmem:[%s2535 + $0xe8] sm:$0xff]
        %v2566 = vld [vmem:[%s2535 + $0xf0] sm:$0xff]
        %v2567 = vld [vmem:[%s2535 + $0xf8] sm:$0xff]
        %v2568 = vld [vmem:[%s2535 + $0x100] sm:$0xff]
        %v2569 = vld [vmem:[%s2535 + $0x108] sm:$0xff]
        %v2570 = vld [vmem:[%s2535 + $0x110] sm:$0xff]
        %v2571 = vld [vmem:[%s2535 + $0x118] sm:$0xff]
        %v2572 = vld [vmem:[%s2535 + $0x120] sm:$0xff]
        %v2573 = vld [vmem:[%s2535 + $0x128] sm:$0xff]
        %v2574 = vld [vmem:[%s2535 + $0x130] sm:$0xff]
        %v2575 = vld [vmem:[%s2535 + $0x138] sm:$0xff]
        %v2576 = vld [vmem:[%s2535 + $0x140] sm:$0xff]
        %v2577 = vld [vmem:[%s2535 + $0x148] sm:$0xff]
        %v2578 = vld [vmem:[%s2535 + $0x150] sm:$0x1f]
        %v2579 = vld [vmem:[%s2535 + $0x158] sm:$0x1f]
        %v2580 = vld [vmem:[%s2535 + $0x160] sm:$0x1f]
        %v2582 = vsel %vm2227, %v2134, 0
        %v2585 = vsel %vm2231, %v2578, 0
        %v2588 = vsel %vm2231, %v2579, 0
        %v2591 = vsel %vm2231, %v2580, 0
        %2593 = vmatprep.subr.mxu0 0.0
        %2594 = vmatpush1.msra.mxu0 0.0
        %2595 = vmatprep.subr.mxu0 %v2588
        %2596 = vmatpush1.msra.mxu0 %v2585
        %2597 = vmatprep.subr.mxu0 %v2576
        %2598 = vmatpush1.msra.mxu0 %v2575
        %2599 = vmatprep.subr.mxu0 %v2573
        %2600 = vmatpush1.msra.mxu0 %v2572
        %2601 = vmatprep.subr.mxu0 %v2570
        %2602 = vmatpush1.msra.mxu0 %v2569
        %2603 = vmatprep.subr.mxu0 %v2567
        %2604 = vmatpush1.msra.mxu0 %v2566
        %2605 = vmatprep.subr.mxu0 %v2564
        %2606 = vmatpush1.msra.mxu0 %v2563
        %2607 = vmatprep.subr.mxu0 %v2561
        %2608 = vmatpush1.msra.mxu0 %v2560
        %2609 = vmatprep.subr.mxu0 %v2558
        %2610 = vmatpush1.msra.mxu0 %v2557
        %2611 = vmatprep.subr.mxu0 %v2555
        %2612 = vmatpush1.msra.mxu0 %v2554
        %2613 = vmatprep.subr.mxu0 %v2552
        %2614 = vmatpush1.msra.mxu0 %v2551
        %2615 = vmatprep.subr.mxu0 %v2549
        %2616 = vmatpush1.msra.mxu0 %v2548
        %2617 = vmatprep.subr.mxu0 %v2546
        %2618 = vmatpush1.msra.mxu0 %v2545
        %2619 = vmatprep.subr.mxu0 %v2543
        %2620 = vmatpush1.msra.mxu0 %v2542
        %2621 = vmatprep.subr.mxu0 %v2540
        %2622 = vmatpush1.msra.mxu0 %v2539
        %2623 = vmatprep.subr.mxu0 %v2537
        %2624 = vmatpush1.msra.mxu0 %v2536
        %2625 = vmatprep.subr.mxu0 0.0
        %2626 = vmatpush2.msra.mxu0 0.0
        %2627 = vmatprep.subr.mxu0 0.0
        %2628 = vmatpush2.msra.mxu0 0.0
        %2629 = vmatprep.subr.mxu0 0.0
        %2630 = vmatpush2.msra.mxu0 0.0
        %2631 = vmatprep.subr.mxu0 0.0
        %2632 = vmatpush2.msra.mxu0 0.0
        %2633 = vmatprep.subr.mxu0 0.0
        %2634 = vmatpush2.msra.mxu0 0.0
        %2635 = vmatprep.subr.mxu0 0.0
        %2636 = vmatpush2.msra.mxu0 0.0
        %2637 = vmatprep.subr.mxu0 0.0
        %2638 = vmatpush2.msra.mxu0 0.0
        %2639 = vmatprep.subr.mxu0 0.0
        %2640 = vmatpush2.msra.mxu0 0.0
        %2641 = vmatprep.subr.mxu0 0.0
        %2642 = vmatpush2.msra.mxu0 0.0
        %2643 = vmatprep.subr.mxu0 0.0
        %2644 = vmatpush2.msra.mxu0 0.0
        %2645 = vmatprep.subr.mxu0 0.0
        %2646 = vmatpush2.msra.mxu0 0.0
        %2647 = vmatprep.subr.mxu0 0.0
        %2648 = vmatpush2.msra.mxu0 0.0
        %2649 = vmatprep.subr.mxu0 0.0
        %2650 = vmatpush2.msra.mxu0 0.0
        %2651 = vmatprep.subr.mxu0 0.0
        %2652 = vmatpush2.msra.mxu0 0.0
        %2653 = vmatprep.subr.mxu0 0.0
        %2654 = vmatpush2.msra.mxu0 0.0
        %2655 = vmatprep.subr.mxu0 0.0
        %2656 = vmatpush2.msra.mxu0 0.0
        %2657 = vmatprep.mubr.f32.mxu0 0.0
        %2658 = vmatmul.mubr.f32.gmra.mxu0 %v2582
        %v2659 = vpop.f32.mrf.mxu0
        %v2660 = vadd.f32 0.0, %v2659
        %v2661 = vpop.f32.mrf.mxu0
        %v2662 = vadd.f32 0.0, %v2661
        %2663 = vdwg.mxu0
        %2664 = vmatprep.subr.mxu0 0.0
        %2665 = vmatpush1.msra.mxu0 0.0
        %2666 = vmatprep.subr.mxu0 0.0
        %2667 = vmatpush1.msra.mxu0 %v2591
        %2668 = vmatprep.subr.mxu0 0.0
        %2669 = vmatpush1.msra.mxu0 %v2577
        %2670 = vmatprep.subr.mxu0 0.0
        %2671 = vmatpush1.msra.mxu0 %v2574
        %2672 = vmatprep.subr.mxu0 0.0
        %2673 = vmatpush1.msra.mxu0 %v2571
        %2674 = vmatprep.subr.mxu0 0.0
        %2675 = vmatpush1.msra.mxu0 %v2568
        %2676 = vmatprep.subr.mxu0 0.0
        %2677 = vmatpush1.msra.mxu0 %v2565
        %2678 = vmatprep.subr.mxu0 0.0
        %2679 = vmatpush1.msra.mxu0 %v2562
        %2680 = vmatprep.subr.mxu0 0.0
        %2681 = vmatpush1.msra.mxu0 %v2559
        %2682 = vmatprep.subr.mxu0 0.0
        %2683 = vmatpush1.msra.mxu0 %v2556
        %2684 = vmatprep.subr.mxu0 0.0
        %2685 = vmatpush1.msra.mxu0 %v2553
        %2686 = vmatprep.subr.mxu0 0.0
        %2687 = vmatpush1.msra.mxu0 %v2550
        %2688 = vmatprep.subr.mxu0 0.0
        %2689 = vmatpush1.msra.mxu0 %v2547
        %2690 = vmatprep.subr.mxu0 0.0
        %2691 = vmatpush1.msra.mxu0 %v2544
        %2692 = vmatprep.subr.mxu0 0.0
        %2693 = vmatpush1.msra.mxu0 %v2541
        %2694 = vmatprep.subr.mxu0 0.0
        %2695 = vmatpush1.msra.mxu0 %v2538
        %2696 = vmatprep.subr.mxu0 0.0
        %2697 = vmatpush2.msra.mxu0 0.0
        %2698 = vmatprep.subr.mxu0 0.0
        %2699 = vmatpush2.msra.mxu0 0.0
        %2700 = vmatprep.subr.mxu0 0.0
        %2701 = vmatpush2.msra.mxu0 0.0
        %2702 = vmatprep.subr.mxu0 0.0
        %2703 = vmatpush2.msra.mxu0 0.0
        %2704 = vmatprep.subr.mxu0 0.0
        %2705 = vmatpush2.msra.mxu0 0.0
        %2706 = vmatprep.subr.mxu0 0.0
        %2707 = vmatpush2.msra.mxu0 0.0
        %2708 = vmatprep.subr.mxu0 0.0
        %2709 = vmatpush2.msra.mxu0 0.0
        %2710 = vmatprep.subr.mxu0 0.0
        %2711 = vmatpush2.msra.mxu0 0.0
        %2712 = vmatprep.subr.mxu0 0.0
        %2713 = vmatpush2.msra.mxu0 0.0
        %2714 = vmatprep.subr.mxu0 0.0
        %2715 = vmatpush2.msra.mxu0 0.0
        %2716 = vmatprep.subr.mxu0 0.0
        %2717 = vmatpush2.msra.mxu0 0.0
        %2718 = vmatprep.subr.mxu0 0.0
        %2719 = vmatpush2.msra.mxu0 0.0
        %2720 = vmatprep.subr.mxu0 0.0
        %2721 = vmatpush2.msra.mxu0 0.0
        %2722 = vmatprep.subr.mxu0 0.0
        %2723 = vmatpush2.msra.mxu0 0.0
        %2724 = vmatprep.subr.mxu0 0.0
        %2725 = vmatpush2.msra.mxu0 0.0
        %2726 = vmatprep.subr.mxu0 0.0
        %2727 = vmatpush2.msra.mxu0 0.0
        %2728 = vmatprep.mubr.f32.mxu0 0.0
        %2729 = vmatmul.mubr.f32.gmra.mxu0 %v2582
        %v2730 = vpop.f32.mrf.mxu0
        %v2731 = vadd.f32 0.0, %v2730
        %v2732 = vpop.f32.mrf.mxu0
        %2733 = vdwg.mxu0
        %v2734 = vadd.f32 %v2461, %v2660
        %v2735 = vadd.f32 %v2463, %v2662
        %v2736 = vadd.f32 %v2532, %v2731
        %s2737 = scalar_lea.vmem [#allocation18], 1080
        %v2738 = vld [vmem:[%s2737] sm:$0xff]
        %v2739 = vld [vmem:[%s2737 + $0x8] sm:$0xff]
        %v2740 = vld [vmem:[%s2737 + $0x10] sm:$0xff]
        %v2741 = vld [vmem:[%s2737 + $0x18] sm:$0xff]
        %v2742 = vld [vmem:[%s2737 + $0x20] sm:$0xff]
        %v2743 = vld [vmem:[%s2737 + $0x28] sm:$0xff]
        %v2744 = vld [vmem:[%s2737 + $0x30] sm:$0xff]
        %v2745 = vld [vmem:[%s2737 + $0x38] sm:$0xff]
        %v2746 = vld [vmem:[%s2737 + $0x40] sm:$0xff]
        %v2747 = vld [vmem:[%s2737 + $0x48] sm:$0xff]
        %v2748 = vld [vmem:[%s2737 + $0x50] sm:$0xff]
        %v2749 = vld [vmem:[%s2737 + $0x58] sm:$0xff]
        %v2750 = vld [vmem:[%s2737 + $0x60] sm:$0xff]
        %v2751 = vld [vmem:[%s2737 + $0x68] sm:$0xff]
        %v2752 = vld [vmem:[%s2737 + $0x70] sm:$0xff]
        %v2753 = vld [vmem:[%s2737 + $0x78] sm:$0xff]
        %v2754 = vld [vmem:[%s2737 + $0x80] sm:$0xff]
        %v2755 = vld [vmem:[%s2737 + $0x88] sm:$0xff]
        %v2756 = vld [vmem:[%s2737 + $0x90] sm:$0xff]
        %v2757 = vld [vmem:[%s2737 + $0x98] sm:$0xff]
        %v2758 = vld [vmem:[%s2737 + $0xa0] sm:$0xff]
        %v2759 = vld [vmem:[%s2737 + $0xa8] sm:$0xff]
        %v2760 = vld [vmem:[%s2737 + $0xb0] sm:$0xff]
        %v2761 = vld [vmem:[%s2737 + $0xb8] sm:$0xff]
        %v2762 = vld [vmem:[%s2737 + $0xc0] sm:$0xff]
        %v2763 = vld [vmem:[%s2737 + $0xc8] sm:$0xff]
        %v2764 = vld [vmem:[%s2737 + $0xd0] sm:$0xff]
        %v2765 = vld [vmem:[%s2737 + $0xd8] sm:$0xff]
        %v2766 = vld [vmem:[%s2737 + $0xe0] sm:$0xff]
        %v2767 = vld [vmem:[%s2737 + $0xe8] sm:$0xff]
        %v2768 = vld [vmem:[%s2737 + $0xf0] sm:$0xff]
        %v2769 = vld [vmem:[%s2737 + $0xf8] sm:$0xff]
        %v2770 = vld [vmem:[%s2737 + $0x100] sm:$0xff]
        %v2771 = vld [vmem:[%s2737 + $0x108] sm:$0xff]
        %v2772 = vld [vmem:[%s2737 + $0x110] sm:$0xff]
        %v2773 = vld [vmem:[%s2737 + $0x118] sm:$0xff]
        %v2774 = vld [vmem:[%s2737 + $0x120] sm:$0xff]
        %v2775 = vld [vmem:[%s2737 + $0x128] sm:$0xff]
        %v2776 = vld [vmem:[%s2737 + $0x130] sm:$0xff]
        %v2777 = vld [vmem:[%s2737 + $0x138] sm:$0xff]
        %v2778 = vld [vmem:[%s2737 + $0x140] sm:$0xff]
        %v2779 = vld [vmem:[%s2737 + $0x148] sm:$0xff]
        %v2780 = vld [vmem:[%s2737 + $0x150] sm:$0x1f]
        %v2781 = vld [vmem:[%s2737 + $0x158] sm:$0x1f]
        %v2782 = vld [vmem:[%s2737 + $0x160] sm:$0x1f]
        %v2784 = vsel %vm2227, %v2135, 0
        %v2787 = vsel %vm2231, %v2780, 0
        %v2790 = vsel %vm2231, %v2781, 0
        %v2793 = vsel %vm2231, %v2782, 0
        %2795 = vmatprep.subr.mxu0 0.0
        %2796 = vmatpush1.msra.mxu0 0.0
        %2797 = vmatprep.subr.mxu0 %v2790
        %2798 = vmatpush1.msra.mxu0 %v2787
        %2799 = vmatprep.subr.mxu0 %v2778
        %2800 = vmatpush1.msra.mxu0 %v2777
        %2801 = vmatprep.subr.mxu0 %v2775
        %2802 = vmatpush1.msra.mxu0 %v2774
        %2803 = vmatprep.subr.mxu0 %v2772
        %2804 = vmatpush1.msra.mxu0 %v2771
        %2805 = vmatprep.subr.mxu0 %v2769
        %2806 = vmatpush1.msra.mxu0 %v2768
        %2807 = vmatprep.subr.mxu0 %v2766
        %2808 = vmatpush1.msra.mxu0 %v2765
        %2809 = vmatprep.subr.mxu0 %v2763
        %2810 = vmatpush1.msra.mxu0 %v2762
        %2811 = vmatprep.subr.mxu0 %v2760
        %2812 = vmatpush1.msra.mxu0 %v2759
        %2813 = vmatprep.subr.mxu0 %v2757
        %2814 = vmatpush1.msra.mxu0 %v2756
        %2815 = vmatprep.subr.mxu0 %v2754
        %2816 = vmatpush1.msra.mxu0 %v2753
        %2817 = vmatprep.subr.mxu0 %v2751
        %2818 = vmatpush1.msra.mxu0 %v2750
        %2819 = vmatprep.subr.mxu0 %v2748
        %2820 = vmatpush1.msra.mxu0 %v2747
        %2821 = vmatprep.subr.mxu0 %v2745
        %2822 = vmatpush1.msra.mxu0 %v2744
        %2823 = vmatprep.subr.mxu0 %v2742
        %2824 = vmatpush1.msra.mxu0 %v2741
        %2825 = vmatprep.subr.mxu0 %v2739
        %2826 = vmatpush1.msra.mxu0 %v2738
        %2827 = vmatprep.subr.mxu0 0.0
        %2828 = vmatpush2.msra.mxu0 0.0
        %2829 = vmatprep.subr.mxu0 0.0
        %2830 = vmatpush2.msra.mxu0 0.0
        %2831 = vmatprep.subr.mxu0 0.0
        %2832 = vmatpush2.msra.mxu0 0.0
        %2833 = vmatprep.subr.mxu0 0.0
        %2834 = vmatpush2.msra.mxu0 0.0
        %2835 = vmatprep.subr.mxu0 0.0
        %2836 = vmatpush2.msra.mxu0 0.0
        %2837 = vmatprep.subr.mxu0 0.0
        %2838 = vmatpush2.msra.mxu0 0.0
        %2839 = vmatprep.subr.mxu0 0.0
        %2840 = vmatpush2.msra.mxu0 0.0
        %2841 = vmatprep.subr.mxu0 0.0
        %2842 = vmatpush2.msra.mxu0 0.0
        %2843 = vmatprep.subr.mxu0 0.0
        %2844 = vmatpush2.msra.mxu0 0.0
        %2845 = vmatprep.subr.mxu0 0.0
        %2846 = vmatpush2.msra.mxu0 0.0
        %2847 = vmatprep.subr.mxu0 0.0
        %2848 = vmatpush2.msra.mxu0 0.0
        %2849 = vmatprep.subr.mxu0 0.0
        %2850 = vmatpush2.msra.mxu0 0.0
        %2851 = vmatprep.subr.mxu0 0.0
        %2852 = vmatpush2.msra.mxu0 0.0
        %2853 = vmatprep.subr.mxu0 0.0
        %2854 = vmatpush2.msra.mxu0 0.0
        %2855 = vmatprep.subr.mxu0 0.0
        %2856 = vmatpush2.msra.mxu0 0.0
        %2857 = vmatprep.subr.mxu0 0.0
        %2858 = vmatpush2.msra.mxu0 0.0
        %2859 = vmatprep.mubr.f32.mxu0 0.0
        %2860 = vmatmul.mubr.f32.gmra.mxu0 %v2784
        %v2861 = vpop.f32.mrf.mxu0
        %v2862 = vadd.f32 0.0, %v2861
        %v2863 = vpop.f32.mrf.mxu0
        %v2864 = vadd.f32 0.0, %v2863
        %2865 = vdwg.mxu0
        %2866 = vmatprep.subr.mxu0 0.0
        %2867 = vmatpush1.msra.mxu0 0.0
        %2868 = vmatprep.subr.mxu0 0.0
        %2869 = vmatpush1.msra.mxu0 %v2793
        %2870 = vmatprep.subr.mxu0 0.0
        %2871 = vmatpush1.msra.mxu0 %v2779
        %2872 = vmatprep.subr.mxu0 0.0
        %2873 = vmatpush1.msra.mxu0 %v2776
        %2874 = vmatprep.subr.mxu0 0.0
        %2875 = vmatpush1.msra.mxu0 %v2773
        %2876 = vmatprep.subr.mxu0 0.0
        %2877 = vmatpush1.msra.mxu0 %v2770
        %2878 = vmatprep.subr.mxu0 0.0
        %2879 = vmatpush1.msra.mxu0 %v2767
        %2880 = vmatprep.subr.mxu0 0.0
        %2881 = vmatpush1.msra.mxu0 %v2764
        %2882 = vmatprep.subr.mxu0 0.0
        %2883 = vmatpush1.msra.mxu0 %v2761
        %2884 = vmatprep.subr.mxu0 0.0
        %2885 = vmatpush1.msra.mxu0 %v2758
        %2886 = vmatprep.subr.mxu0 0.0
        %2887 = vmatpush1.msra.mxu0 %v2755
        %2888 = vmatprep.subr.mxu0 0.0
        %2889 = vmatpush1.msra.mxu0 %v2752
        %2890 = vmatprep.subr.mxu0 0.0
        %2891 = vmatpush1.msra.mxu0 %v2749
        %2892 = vmatprep.subr.mxu0 0.0
        %2893 = vmatpush1.msra.mxu0 %v2746
        %2894 = vmatprep.subr.mxu0 0.0
        %2895 = vmatpush1.msra.mxu0 %v2743
        %2896 = vmatprep.subr.mxu0 0.0
        %2897 = vmatpush1.msra.mxu0 %v2740
        %2898 = vmatprep.subr.mxu0 0.0
        %2899 = vmatpush2.msra.mxu0 0.0
        %2900 = vmatprep.subr.mxu0 0.0
        %2901 = vmatpush2.msra.mxu0 0.0
        %2902 = vmatprep.subr.mxu0 0.0
        %2903 = vmatpush2.msra.mxu0 0.0
        %2904 = vmatprep.subr.mxu0 0.0
        %2905 = vmatpush2.msra.mxu0 0.0
        %2906 = vmatprep.subr.mxu0 0.0
        %2907 = vmatpush2.msra.mxu0 0.0
        %2908 = vmatprep.subr.mxu0 0.0
        %2909 = vmatpush2.msra.mxu0 0.0
        %2910 = vmatprep.subr.mxu0 0.0
        %2911 = vmatpush2.msra.mxu0 0.0
        %2912 = vmatprep.subr.mxu0 0.0
        %2913 = vmatpush2.msra.mxu0 0.0
        %2914 = vmatprep.subr.mxu0 0.0
        %2915 = vmatpush2.msra.mxu0 0.0
        %2916 = vmatprep.subr.mxu0 0.0
        %2917 = vmatpush2.msra.mxu0 0.0
        %2918 = vmatprep.subr.mxu0 0.0
        %2919 = vmatpush2.msra.mxu0 0.0
        %2920 = vmatprep.subr.mxu0 0.0
        %2921 = vmatpush2.msra.mxu0 0.0
        %2922 = vmatprep.subr.mxu0 0.0
        %2923 = vmatpush2.msra.mxu0 0.0
        %2924 = vmatprep.subr.mxu0 0.0
        %2925 = vmatpush2.msra.mxu0 0.0
        %2926 = vmatprep.subr.mxu0 0.0
        %2927 = vmatpush2.msra.mxu0 0.0
        %2928 = vmatprep.subr.mxu0 0.0
        %2929 = vmatpush2.msra.mxu0 0.0
        %2930 = vmatprep.mubr.f32.mxu0 0.0
        %2931 = vmatmul.mubr.f32.gmra.mxu0 %v2784
        %v2932 = vpop.f32.mrf.mxu0
        %v2933 = vadd.f32 0.0, %v2932
        %v2934 = vpop.f32.mrf.mxu0
        %2935 = vdwg.mxu0
        %v2936 = vadd.f32 %v2734, %v2862
        %v2937 = vadd.f32 %v2735, %v2864
        %v2938 = vadd.f32 %v2736, %v2933
        %2942 = vrot.lane.b32.xlu0 %v2936, 127
        %v2943 = vpop.permute.xlu0 %2942
        %2944 = vrot.lane.b32.xlu0 %v2937, 127
        %v2945 = vpop.permute.xlu0 %2944
        %2946 = vrot.lane.b32.xlu0 %v2938, 127
        %v2947 = vpop.permute.xlu0 %2946
        %vm2948 = vcmask 1039360
        %v2949 = vsel %vm2948, %v2943, %v2945
        %v2950 = vsel %vm2948, %v2945, %v2947
        %2954 = vrot.lane.b32.xlu0 %v2936, 110
        %v2955 = vpop.permute.xlu0 %2954
        %2956 = vrot.lane.b32.xlu0 %v2937, 110
        %v2957 = vpop.permute.xlu0 %2956
        %2958 = vrot.lane.b32.xlu0 %v2938, 110
        %v2959 = vpop.permute.xlu0 %2958
        %vm2960 = vcmask 900096
        %v2961 = vsel %vm2960, %v2955, %v2957
        %v2962 = vsel %vm2960, %v2957, %v2959
        %2966 = vrot.lane.b32.xlu0 %v2936, 109
        %v2967 = vpop.permute.xlu0 %2966
        %2968 = vrot.lane.b32.xlu0 %v2937, 109
        %v2969 = vpop.permute.xlu0 %2968
        %2970 = vrot.lane.b32.xlu0 %v2938, 109
        %v2971 = vpop.permute.xlu0 %2970
        %vm2972 = vcmask 891904
        %v2973 = vsel %vm2972, %v2967, %v2969
        %v2974 = vsel %vm2972, %v2969, %v2971
        %v2978 = vld [vmem:[#allocation12] sm:$0xff]
        %v2979 = vld [vmem:[#allocation12 + $0x8] sm:$0xff]
        %v2980 = vld [vmem:[#allocation12 + $0x10] sm:$0xff]
        %v2981 = vld [vmem:[#allocation12 + $0x18] sm:$0xff]
        %v2982 = vld [vmem:[#allocation13] sm:$0xff]
        %v2983 = vld [vmem:[#allocation13 + $0x8] sm:$0xff]
        %v2984 = vld [vmem:[#allocation13 + $0x10] sm:$0xff]
        %v2985 = vld [vmem:[#allocation13 + $0x18] sm:$0xff]
        %2987 = vset.pattern.permute.xlu0 0
        %2988 = vperm.xlu0 %2987, %v2982
        %v2989 = vpop.permute.xlu0 %2988
        %2992 = vset.pattern.permute.xlu0 0
        %2993 = vperm.xlu0 %2992, %v2983
        %v2994 = vpop.permute.xlu0 %2993
        %2997 = vset.pattern.permute.xlu0 0
        %2998 = vperm.xlu0 %2997, %v2984
        %v2999 = vpop.permute.xlu0 %2998
        %3002 = vset.pattern.permute.xlu0 0
        %3003 = vperm.xlu0 %3002, %v2985
        %v3004 = vpop.permute.xlu0 %3003
        %vm3006 = vcmask 261120
        %v3008 = vsel %vm3006, %v2978, 0
        %v3011 = vsel %vm3006, %v2979, 0
        %v3014 = vsel %vm3006, %v2980, 0
        %v3017 = vsel %vm3006, %v2981, 0
        %3019 = vmatprep.subr.mxu0 0.0
        %3020 = vmatpush1.msra.mxu0 0.0
        %3021 = vmatprep.subr.mxu0 0.0
        %3022 = vmatpush1.msra.mxu0 0.0
        %3023 = vmatprep.subr.mxu0 0.0
        %3024 = vmatpush1.msra.mxu0 0.0
        %3025 = vmatprep.subr.mxu0 0.0
        %3026 = vmatpush1.msra.mxu0 0.0
        %3027 = vmatprep.subr.mxu0 0.0
        %3028 = vmatpush1.msra.mxu0 0.0
        %3029 = vmatprep.subr.mxu0 0.0
        %3030 = vmatpush1.msra.mxu0 0.0
        %3031 = vmatprep.subr.mxu0 0.0
        %3032 = vmatpush1.msra.mxu0 0.0
        %3033 = vmatprep.subr.mxu0 0.0
        %3034 = vmatpush1.msra.mxu0 0.0
        %3035 = vmatprep.subr.mxu0 0.0
        %3036 = vmatpush1.msra.mxu0 0.0
        %3037 = vmatprep.subr.mxu0 0.0
        %3038 = vmatpush1.msra.mxu0 0.0
        %3039 = vmatprep.subr.mxu0 0.0
        %3040 = vmatpush1.msra.mxu0 0.0
        %3041 = vmatprep.subr.mxu0 0.0
        %3042 = vmatpush1.msra.mxu0 0.0
        %3043 = vmatprep.subr.mxu0 %v2974
        %3044 = vmatpush1.msra.mxu0 %v2973
        %3045 = vmatprep.subr.mxu0 %v2962
        %3046 = vmatpush1.msra.mxu0 %v2961
        %3047 = vmatprep.subr.mxu0 %v2950
        %3048 = vmatpush1.msra.mxu0 %v2949
        %3049 = vmatprep.subr.mxu0 %v2937
        %3050 = vmatpush1.msra.mxu0 %v2936
        %3051 = vmatprep.subr.mxu0 0.0
        %3052 = vmatpush2.msra.mxu0 0.0
        %3053 = vmatprep.subr.mxu0 0.0
        %3054 = vmatpush2.msra.mxu0 0.0
        %3055 = vmatprep.subr.mxu0 0.0
        %3056 = vmatpush2.msra.mxu0 0.0
        %3057 = vmatprep.subr.mxu0 0.0
        %3058 = vmatpush2.msra.mxu0 0.0
        %3059 = vmatprep.subr.mxu0 0.0
        %3060 = vmatpush2.msra.mxu0 0.0
        %3061 = vmatprep.subr.mxu0 0.0
        %3062 = vmatpush2.msra.mxu0 0.0
        %3063 = vmatprep.subr.mxu0 0.0
        %3064 = vmatpush2.msra.mxu0 0.0
        %3065 = vmatprep.subr.mxu0 0.0
        %3066 = vmatpush2.msra.mxu0 0.0
        %3067 = vmatprep.subr.mxu0 0.0
        %3068 = vmatpush2.msra.mxu0 0.0
        %3069 = vmatprep.subr.mxu0 0.0
        %3070 = vmatpush2.msra.mxu0 0.0
        %3071 = vmatprep.subr.mxu0 0.0
        %3072 = vmatpush2.msra.mxu0 0.0
        %3073 = vmatprep.subr.mxu0 0.0
        %3074 = vmatpush2.msra.mxu0 0.0
        %3075 = vmatprep.subr.mxu0 0.0
        %3076 = vmatpush2.msra.mxu0 0.0
        %3077 = vmatprep.subr.mxu0 0.0
        %3078 = vmatpush2.msra.mxu0 0.0
        %3079 = vmatprep.subr.mxu0 0.0
        %3080 = vmatpush2.msra.mxu0 0.0
        %3081 = vmatprep.subr.mxu0 0.0
        %3082 = vmatpush2.msra.mxu0 0.0
        %3083 = vmatprep.mubr.f32.mxu0 0.0
        %3084 = vmatmul.mubr.f32.gmra.mxu0 %v3008
        %v3085 = vpop.f32.mrf.mxu0
        %v3086 = vadd.f32 %v2989, %v3085
        %v3087 = vpop.f32.mrf.mxu0
        %v3088 = vadd.f32 %v2989, %v3087
        %3089 = vmatprep.mubr.f32.mxu0 0.0
        %3090 = vmatmul.mubr.f32.gmra.mxu0 %v3011
        %v3091 = vpop.f32.mrf.mxu0
        %v3092 = vadd.f32 %v2994, %v3091
        %v3093 = vpop.f32.mrf.mxu0
        %v3094 = vadd.f32 %v2994, %v3093
        %3095 = vmatprep.mubr.f32.mxu0 0.0
        %3096 = vmatmul.mubr.f32.gmra.mxu0 %v3014
        %v3097 = vpop.f32.mrf.mxu0
        %v3098 = vadd.f32 %v2999, %v3097
        %v3099 = vpop.f32.mrf.mxu0
        %v3100 = vadd.f32 %v2999, %v3099
        %3101 = vmatprep.mubr.f32.mxu0 0.0
        %3102 = vmatmul.mubr.f32.gmra.mxu0 %v3017
        %v3103 = vpop.f32.mrf.mxu0
        %v3104 = vadd.f32 %v3004, %v3103
        %v3105 = vpop.f32.mrf.mxu0
        %v3106 = vadd.f32 %v3004, %v3105
        %3107 = vdwg.mxu0
        %3108 = vmatprep.subr.mxu0 0.0
        %3109 = vmatpush1.msra.mxu0 0.0
        %3110 = vmatprep.subr.mxu0 0.0
        %3111 = vmatpush1.msra.mxu0 0.0
        %3112 = vmatprep.subr.mxu0 0.0
        %3113 = vmatpush1.msra.mxu0 0.0
        %3114 = vmatprep.subr.mxu0 0.0
        %3115 = vmatpush1.msra.mxu0 0.0
        %3116 = vmatprep.subr.mxu0 0.0
        %3117 = vmatpush1.msra.mxu0 0.0
        %3118 = vmatprep.subr.mxu0 0.0
        %3119 = vmatpush1.msra.mxu0 0.0
        %3120 = vmatprep.subr.mxu0 0.0
        %3121 = vmatpush1.msra.mxu0 0.0
        %3122 = vmatprep.subr.mxu0 0.0
        %3123 = vmatpush1.msra.mxu0 0.0
        %3124 = vmatprep.subr.mxu0 0.0
        %3125 = vmatpush1.msra.mxu0 0.0
        %3126 = vmatprep.subr.mxu0 0.0
        %3127 = vmatpush1.msra.mxu0 0.0
        %3128 = vmatprep.subr.mxu0 0.0
        %3129 = vmatpush1.msra.mxu0 0.0
        %3130 = vmatprep.subr.mxu0 0.0
        %3131 = vmatpush1.msra.mxu0 0.0
        %3132 = vmatprep.subr.mxu0 0.0
        %3133 = vmatpush1.msra.mxu0 %v2971
        %3134 = vmatprep.subr.mxu0 0.0
        %3135 = vmatpush1.msra.mxu0 %v2959
        %3136 = vmatprep.subr.mxu0 0.0
        %3137 = vmatpush1.msra.mxu0 %v2947
        %3138 = vmatprep.subr.mxu0 0.0
        %3139 = vmatpush1.msra.mxu0 %v2938
        %3140 = vmatprep.subr.mxu0 0.0
        %3141 = vmatpush2.msra.mxu0 0.0
        %3142 = vmatprep.subr.mxu0 0.0
        %3143 = vmatpush2.msra.mxu0 0.0
        %3144 = vmatprep.subr.mxu0 0.0
        %3145 = vmatpush2.msra.mxu0 0.0
        %3146 = vmatprep.subr.mxu0 0.0
        %3147 = vmatpush2.msra.mxu0 0.0
        %3148 = vmatprep.subr.mxu0 0.0
        %3149 = vmatpush2.msra.mxu0 0.0
        %3150 = vmatprep.subr.mxu0 0.0
        %3151 = vmatpush2.msra.mxu0 0.0
        %3152 = vmatprep.subr.mxu0 0.0
        %3153 = vmatpush2.msra.mxu0 0.0
        %3154 = vmatprep.subr.mxu0 0.0
        %3155 = vmatpush2.msra.mxu0 0.0
        %3156 = vmatprep.subr.mxu0 0.0
        %3157 = vmatpush2.msra.mxu0 0.0
        %3158 = vmatprep.subr.mxu0 0.0
        %3159 = vmatpush2.msra.mxu0 0.0
        %3160 = vmatprep.subr.mxu0 0.0
        %3161 = vmatpush2.msra.mxu0 0.0
        %3162 = vmatprep.subr.mxu0 0.0
        %3163 = vmatpush2.msra.mxu0 0.0
        %3164 = vmatprep.subr.mxu0 0.0
        %3165 = vmatpush2.msra.mxu0 0.0
        %3166 = vmatprep.subr.mxu0 0.0
        %3167 = vmatpush2.msra.mxu0 0.0
        %3168 = vmatprep.subr.mxu0 0.0
        %3169 = vmatpush2.msra.mxu0 0.0
        %3170 = vmatprep.subr.mxu0 0.0
        %3171 = vmatpush2.msra.mxu0 0.0
        %3172 = vmatprep.mubr.f32.mxu0 0.0
        %3173 = vmatmul.mubr.f32.gmra.mxu0 %v3008
        %v3174 = vpop.f32.mrf.mxu0
        %v3175 = vadd.f32 %v2989, %v3174
        %v3176 = vpop.f32.mrf.mxu0
        %3177 = vmatprep.mubr.f32.mxu0 0.0
        %3178 = vmatmul.mubr.f32.gmra.mxu0 %v3011
        %v3179 = vpop.f32.mrf.mxu0
        %v3180 = vadd.f32 %v2994, %v3179
        %v3181 = vpop.f32.mrf.mxu0
        %3182 = vmatprep.mubr.f32.mxu0 0.0
        %3183 = vmatmul.mubr.f32.gmra.mxu0 %v3014
        %v3184 = vpop.f32.mrf.mxu0
        %v3185 = vadd.f32 %v2999, %v3184
        %v3186 = vpop.f32.mrf.mxu0
        %3187 = vmatprep.mubr.f32.mxu0 0.0
        %3188 = vmatmul.mubr.f32.gmra.mxu0 %v3017
        %v3189 = vpop.f32.mrf.mxu0
        %v3190 = vadd.f32 %v3004, %v3189
        %v3191 = vpop.f32.mrf.mxu0
        %3192 = vdwg.mxu0
        %v3193 = vxor.u32 %v3086, 2147483648
        %v3194 = vxor.u32 %v3088, 2147483648
        %v3195 = vxor.u32 %v3175, 2147483648
        %v3196 = vxor.u32 %v3092, 2147483648
        %v3197 = vxor.u32 %v3094, 2147483648
        %v3198 = vxor.u32 %v3180, 2147483648
        %v3199 = vxor.u32 %v3098, 2147483648
        %v3200 = vxor.u32 %v3100, 2147483648
        %v3201 = vxor.u32 %v3185, 2147483648
        %v3202 = vxor.u32 %v3104, 2147483648
        %v3203 = vxor.u32 %v3106, 2147483648
        %v3204 = vxor.u32 %v3190, 2147483648
        %v3205 = vmul.f32 %v3193, 1.442695
        %v3206 = vpow.pop %v3205
        %v3207 = vmul.f32 %v3194, 1.442695
        %v3208 = vpow.pop %v3207
        %v3209 = vmul.f32 %v3195, 1.442695
        %v3210 = vpow.pop %v3209
        %v3211 = vmul.f32 %v3196, 1.442695
        %v3212 = vpow.pop %v3211
        %v3213 = vmul.f32 %v3197, 1.442695
        %v3214 = vpow.pop %v3213
        %v3215 = vmul.f32 %v3198, 1.442695
        %v3216 = vpow.pop %v3215
        %v3217 = vmul.f32 %v3199, 1.442695
        %v3218 = vpow.pop %v3217
        %v3219 = vmul.f32 %v3200, 1.442695
        %v3220 = vpow.pop %v3219
        %v3221 = vmul.f32 %v3201, 1.442695
        %v3222 = vpow.pop %v3221
        %v3223 = vmul.f32 %v3202, 1.442695
        %v3224 = vpow.pop %v3223
        %v3225 = vmul.f32 %v3203, 1.442695
        %v3226 = vpow.pop %v3225
        %v3227 = vmul.f32 %v3204, 1.442695
        %v3228 = vpow.pop %v3227
        %v3229 = vadd.f32 %v3206, 1.0
        %v3230 = vadd.f32 %v3208, 1.0
        %v3231 = vadd.f32 %v3210, 1.0
        %v3232 = vadd.f32 %v3212, 1.0
        %v3233 = vadd.f32 %v3214, 1.0
        %v3234 = vadd.f32 %v3216, 1.0
        %v3235 = vadd.f32 %v3218, 1.0
        %v3236 = vadd.f32 %v3220, 1.0
        %v3237 = vadd.f32 %v3222, 1.0
        %v3238 = vadd.f32 %v3224, 1.0
        %v3239 = vadd.f32 %v3226, 1.0
        %v3240 = vadd.f32 %v3228, 1.0
        %v3241 = vrcp.pop %v3229
        %v3242 = vmul.f32 1.0, %v3241
        %v3243 = vrcp.pop %v3230
        %v3244 = vmul.f32 1.0, %v3243
        %v3245 = vrcp.pop %v3231
        %v3246 = vmul.f32 1.0, %v3245
        %v3247 = vrcp.pop %v3232
        %v3248 = vmul.f32 1.0, %v3247
        %v3249 = vrcp.pop %v3233
        %v3250 = vmul.f32 1.0, %v3249
        %v3251 = vrcp.pop %v3234
        %v3252 = vmul.f32 1.0, %v3251
        %v3253 = vrcp.pop %v3235
        %v3254 = vmul.f32 1.0, %v3253
        %v3255 = vrcp.pop %v3236
        %v3256 = vmul.f32 1.0, %v3255
        %v3257 = vrcp.pop %v3237
        %v3258 = vmul.f32 1.0, %v3257
        %v3259 = vrcp.pop %v3238
        %v3260 = vmul.f32 1.0, %v3259
        %v3261 = vrcp.pop %v3239
        %v3262 = vmul.f32 1.0, %v3261
        %v3263 = vrcp.pop %v3240
        %v3264 = vmul.f32 1.0, %v3263
        %3265 = vst [vmem:[%s573] sm:$0xff] %v3242
        %3266 = vst [vmem:[%s573 + $0x8] sm:$0xff] %v3244
        %3267 = vst.msk [vmem:[%s573 + $0x10] sm:$0xff] %vm2972, %v3246
        %3268 = vst [vmem:[%s573 + $0x18] sm:$0xff] %v3248
        %3269 = vst [vmem:[%s573 + $0x20] sm:$0xff] %v3250
        %3270 = vst.msk [vmem:[%s573 + $0x28] sm:$0xff] %vm2972, %v3252
        %3271 = vst [vmem:[%s573 + $0x30] sm:$0xff] %v3254
        %3272 = vst [vmem:[%s573 + $0x38] sm:$0xff] %v3256
        %3273 = vst.msk [vmem:[%s573 + $0x40] sm:$0xff] %vm2972, %v3258
        %3274 = vst [vmem:[%s573 + $0x48] sm:$0xff] %v3260
        %3275 = vst [vmem:[%s573 + $0x50] sm:$0xff] %v3262
        %3276 = vst.msk [vmem:[%s573 + $0x58] sm:$0xff] %vm2972, %v3264
        %p3277 = scmp.lt.s32.totalorder %s29, 1
        %s3278 = scalar_select %p3277, %s29, 1
        %s3279 = smul.addr %s3278, 12
        %s3280 = smul.addr %s3279, 8
        %s3281 = scalar_lea.vmem %s12, %s3280
        // Predicated region
        $region113: #{decode.1} parent=67 // pred_check
          %p3282 = pneg %p304
        $region114: #{decode.1} parent=67 // pred_check_branch
          %3284 = sbr.rel (%p3282) target = $region116
        $region115: #{decode.1} parent=67 // pred_region
          _
        $region116: #{decode.1} parent=67 // pred_fallthru
          _
      $region68: #{decode.1} parent=5 // pred_fallthru
        _
      %p3285 = scmp.le.s32.totalorder 2, %s24
      // Predicated region
      $region117: #{decode.1} parent=5 // pred_check
        %p3286 = pneg %p3285
      $region118: #{decode.1} parent=5 // pred_check_branch
        %3288 = sbr.rel (%p3286) target = $region120
      $region119: #{decode.1} parent=5 // pred_region
        %s3289 = ssub.s32 %s24, 2
        // Predicated region
        $region121: #{decode.1} parent=119 // pred_check
          %p3290 = pneg %p310
        $region122: #{decode.1} parent=119 // pred_check_branch
          %3292 = sbr.rel (%p3290) target = $region124
        $region123: #{decode.1} parent=119 // pred_region
          %p3293 = scmp.lt.s32.totalorder %s30, 1
          %s3294 = scalar_select %p3293, %s30, 1
          %s3295 = smul.addr %s3294, 12
          %s3296 = smul.addr %s3295, 8
          %s3297 = scalar_lea.vmem %s12, %s3296
        $region124: #{decode.1} parent=119 // pred_fallthru
          _
      $region120: #{decode.1} parent=5 // pred_fallthru
        _
    $region6: #{decode.1} parent=1 // loop_footer
      %s28 = sadd.s32 1, %s24
    $region7: #{decode.1} parent=1 // loop_footer_branch
      %23 = sbr.rel target = $region3
    $region8: #{decode.1} parent=1 // loop_exit
      _
    %3298 = vsyncpa [#allocation3], 1
    %s3299 = scalar_lea.sflag [#allocation3], 1
    %3300 = vsyncpa %s3299, 1
    %3301 = vsyncpa [#allocation5], 1
    %3302 = vsyncpa [#allocation8], 1
    %3303 = vsyncpa [#allocation11], 1
    %3304 = vsyncpa [#allocation14], 1
    %3305 = vsyncpa [#allocation17], 1

</llo_original>
